<compile_context>
chip_gen: v6e
topology: v6e:2x2x1
jax: 0.10.0
libtpu: 0.0.40
codegen_flags: <defaults>
</compile_context>

<pallas_src>
import jax
import jax.numpy as jnp
from jax import lax
from jax.experimental import pallas as pl
from jax.experimental.pallas import tpu as pltpu

# ----------------------- small, module-consistent config -----------------------
B = 2             # batch_size
S = 8             # seq_len
H = 32            # bilstm_hidden_size
FLAG = 16         # flag_embedding_size
PRETRAIN = 300    # LSTM input is hard-coded 300 + flag in the module
DIN = PRETRAIN + FLAG
DIN_PAD = 384     # DIN padded to a lane multiple
MLP = 300         # mlp_size (hard-coded in the module)
V = 8             # target_vocab_size
NX = MLP + 1      # biaffine dim with bias
NXI = 304         # contraction (xb / rel_W row) dim padded to sublane multiple
NXJ = 384         # per-class column (yb) dim padded to lane multiple
OUT_PAD = 128     # padded output lanes (wrapper slices back to V)
NUM_LAYERS = 1    # bilstm_num_layers (kernel implements the single-layer config)


# ===================== fused BiLSTM + SRL/biaffine kernel =======================
def sr_labeler_kernel(x_ref, sel_ref, w_in_ref, b_in_ref, whh_ref, h0_ref, c0_ref,
                      w_arg_ref, b_arg_ref, w_pred_ref, b_pred_ref, relw_ref,
                      out_ref, xb_sc, ybr_sc):
    f32 = jnp.float32
    v = pl.program_id(0)

    # ---------------- prologue: runs once, overlapped with rel_W streaming -----
    @pl.when(v == 0)
    def _prologue():
        # Stage 1: single fused, lane-padded input projection (time-major rows,
        # row n = t*B + b); columns: [fwd 4H | bwd 4H], gate order (i, f, o, g).
        gx = (jnp.dot(x_ref[...], w_in_ref[...], preferred_element_type=f32)
              + b_in_ref[...])                                       # (S*B, 8H)

        # Stage 2: fused bidirectional recurrence, fully unrolled, all state in
        # vregs (no scratch round-trips, no masked row scatters).
        whh = whh_ref[...]                                           # (2H, 8H)
        h_cat = h0_ref[...]                                          # (B, 2H)
        c_cat = c0_ref[...]                                          # (B, 2H)
        hf_t = [None] * S
        hb_t = [None] * S
        for t in range(S):
            tb = S - 1 - t
            rec = jnp.dot(h_cat, whh, preferred_element_type=f32)    # (B, 8H)
            gates_f = rec[:, 0:4 * H] + gx[t * B:(t + 1) * B, 0:4 * H]
            gates_b = rec[:, 4 * H:8 * H] + gx[tb * B:(tb + 1) * B, 4 * H:8 * H]
            sf = jax.nn.sigmoid(gates_f[:, 0:3 * H])                 # [i | f | o]
            sb = jax.nn.sigmoid(gates_b[:, 0:3 * H])
            gf = jnp.tanh(gates_f[:, 3 * H:4 * H])
            gb = jnp.tanh(gates_b[:, 3 * H:4 * H])
            cf = sf[:, H:2 * H] * c_cat[:, 0:H] + sf[:, 0:H] * gf
            cb = sb[:, H:2 * H] * c_cat[:, H:2 * H] + sb[:, 0:H] * gb
            hf = sf[:, 2 * H:3 * H] * jnp.tanh(cf)
            hb = sb[:, 2 * H:3 * H] * jnp.tanh(cb)
            hf_t[t] = hf
            hb_t[tb] = hb
            h_cat = jnp.concatenate([hf, hb], axis=1)
            c_cat = jnp.concatenate([cf, cb], axis=1)

        hid = jnp.concatenate(
            [jnp.concatenate([hf_t[s], hb_t[s]], axis=1) for s in range(S)],
            axis=0)                                                  # (S*B, 2H)

        # Stage 3a: arg / pred MLPs (biaffine bias column baked in at col MLP).
        xb = jnp.maximum(
            jnp.dot(hid, w_arg_ref[...], preferred_element_type=f32)
            + b_arg_ref[...], 0.0)                                   # (S*B, NXI)
        xb_sc[...] = xb.astype(jnp.bfloat16)
        hp = jnp.dot(sel_ref[...], hid, preferred_element_type=f32)  # (B, 2H)
        yb = jnp.maximum(
            jnp.dot(hp, w_pred_ref[...], preferred_element_type=f32)
            + b_pred_ref[...], 0.0)                                  # (B, NXJ)
        # time-major rows: batch index = n % B, so simply repeat yb S times.
        ybr_sc[...] = jnp.concatenate([yb] * S, axis=0)              # (S*B, NXJ)

        out_ref[...] = jnp.zeros_like(out_ref)

    # ---------------- Stage 3b: one biaffine class per grid step ---------------
    # relw_ref is this class's (NXI, NXJ) bf16 block (auto double-buffered DMA).
    qv = jnp.dot(xb_sc[...], relw_ref[...], preferred_element_type=f32)  # (S*B, NXJ)
    col = jnp.sum(qv * ybr_sc[...], axis=1, keepdims=True)               # (S*B, 1)
    onehot = (lax.broadcasted_iota(jnp.int32, (1, OUT_PAD), 1) == v).astype(f32)
    out_ref[...] = out_ref[...] + col * onehot                           # lane-dense


# ============================ one-time parameter prep ===========================
def _reorder_gates(w, axis=0):
    """PyTorch LSTM gate order (i, f, g, o) -> kernel order (i, f, o, g)."""
    i, f, g, o = jnp.split(w, 4, axis=axis)
    return jnp.concatenate([i, f, o, g], axis=axis)


def prepare_params(p):
    """Transposes, gate reorder, bias folding, padding and bf16 cast, done once."""
    lp = p['lstm'][0]
    wih_f = _reorder_gates(lp['wih_f'])                 # (4H, DIN)
    wih_b = _reorder_gates(lp['wih_b'])
    whh_f = _reorder_gates(lp['whh_f'])                 # (4H, H)
    whh_b = _reorder_gates(lp['whh_b'])
    b_f = _reorder_gates(lp['bih_f'] + lp['bhh_f'])     # (4H,)
    b_b = _reorder_gates(lp['bih_b'] + lp['bhh_b'])

    w_in = jnp.concatenate([wih_f.T, wih_b.T], axis=1)                   # (DIN, 8H)
    w_in_p = jnp.zeros((DIN_PAD, 8 * H), jnp.float32).at[:DIN].set(w_in)

    zeros_hh = jnp.zeros((H, 4 * H), jnp.float32)
    whh_bd = jnp.concatenate([
        jnp.concatenate([whh_f.T, zeros_hh], axis=1),
        jnp.concatenate([zeros_hh, whh_b.T], axis=1)], axis=0)           # (2H, 8H)

    def pad_mlp(w, b, width):
        wp = jnp.zeros((2 * H, width), jnp.float32).at[:, :MLP].set(w.T)
        bp = jnp.zeros((width,), jnp.float32).at[:MLP].set(b).at[MLP].set(1.0)
        return wp, bp[None, :]

    w_arg_p, b_arg_p = pad_mlp(p['w_arg'], p['b_arg'], NXI)
    w_pred_p, b_pred_p = pad_mlp(p['w_pred'], p['b_pred'], NXJ)

    relw3 = p['rel_W'].reshape(NX, V, NX)
    relw_pad = (jnp.zeros((NXI, V, NXJ), jnp.float32)
                .at[:NX, :, :NX].set(relw3)
                .reshape(NXI, V * NXJ)
                .astype(jnp.bfloat16))                   # bf16: halves HBM traffic

    return {
        'w_in': w_in_p,                                               # (384, 8H)
        'b_in': jnp.concatenate([b_f, b_b])[None, :],                 # (1, 8H)
        'whh_bd': whh_bd,                                             # (2H, 8H)
        'h0': jnp.concatenate([p['h0'][0], p['h0'][1]], axis=1),      # (B, 2H)
        'c0': jnp.concatenate([p['c0'][0], p['c0'][1]], axis=1),      # (B, 2H)
        'w_arg': w_arg_p, 'b_arg': b_arg_p,                           # (2H,NXI)/(1,NXI)
        'w_pred': w_pred_p, 'b_pred': b_pred_p,                       # (2H,NXJ)/(1,NXJ)
        'rel_W': relw_pad,                                            # (NXI, V*NXJ) bf16
    }


# ============================ full forward (wrapper) ============================
@jax.jit
def sr_labeler_forward(pretrained_emb, flag_emb, predicates_1D, pp):
    pred = jnp.clip(predicates_1D, 0, S - 1)              # guard out-of-range gather
    # time-major row index of the predicate token per batch element
    sel = jax.nn.one_hot(pred * B + jnp.arange(B), S * B, dtype=jnp.float32)
    x = jnp.concatenate([pretrained_emb, flag_emb], axis=2)           # (B, S, DIN)
    x_tm = jnp.transpose(x, (1, 0, 2)).reshape(S * B, DIN)            # time-major
    x_tm = jnp.pad(x_tm, ((0, 0), (0, DIN_PAD - DIN)))                # (S*B, 384)

    out_pad = pl.pallas_call(
        sr_labeler_kernel,
        out_shape=jax.ShapeDtypeStruct((S * B, OUT_PAD), jnp.float32),
        grid=(V,),
        in_specs=[
            pl.BlockSpec((S * B, DIN_PAD), lambda v: (0, 0)),   # x (time-major)
            pl.BlockSpec((B, S * B), lambda v: (0, 0)),          # predicate one-hot
            pl.BlockSpec((DIN_PAD, 8 * H), lambda v: (0, 0)),    # fused input proj W
            pl.BlockSpec((1, 8 * H), lambda v: (0, 0)),          # folded biases
            pl.BlockSpec((2 * H, 8 * H), lambda v: (0, 0)),      # block-diag W_hh
            pl.BlockSpec((B, 2 * H), lambda v: (0, 0)),          # h0
            pl.BlockSpec((B, 2 * H), lambda v: (0, 0)),          # c0
            pl.BlockSpec((2 * H, NXI), lambda v: (0, 0)),        # arg MLP W (padded)
            pl.BlockSpec((1, NXI), lambda v: (0, 0)),            # arg MLP b (+bias col)
            pl.BlockSpec((2 * H, NXJ), lambda v: (0, 0)),        # pred MLP W (padded)
            pl.BlockSpec((1, NXJ), lambda v: (0, 0)),            # pred MLP b (+bias col)
            pl.BlockSpec((NXI, NXJ), lambda v: (0, v)),          # rel_W class block (bf16)
        ],
        out_specs=pl.BlockSpec((S * B, OUT_PAD), lambda v: (0, 0)),
        scratch_shapes=[
            pltpu.VMEM((S * B, NXI), jnp.bfloat16),              # xb (arg MLP out)
            pltpu.VMEM((S * B, NXJ), jnp.float32),               # yb broadcast rows
        ],
        compiler_params=pltpu.CompilerParams(dimension_semantics=("arbitrary",)),
    )(x_tm, sel,
      pp['w_in'], pp['b_in'], pp['whh_bd'], pp['h0'], pp['c0'],
      pp['w_arg'], pp['b_arg'], pp['w_pred'], pp['b_pred'], pp['rel_W'])

    # slice padded lanes, restore batch-major (b*S + s) row order
    out_tm = out_pad[:, :V].reshape(S, B, V)
    return jnp.transpose(out_tm, (1, 0, 2)).reshape(B * S, V)


# ============================ pure-JAX reference ================================
def reference_forward(pretrained_emb, flag_emb, predicates, params):
    x = jnp.concatenate([pretrained_emb, flag_emb], axis=2)

    def run_dir(x_seq, wih, whh, bih, bhh, h0, c0, reverse):
        def step(carry, x_t):
            h, c = carry
            gates = x_t @ wih.T + h @ whh.T + bih + bhh
            i, f, g, o = jnp.split(gates, 4, axis=1)
            i, f, o = jax.nn.sigmoid(i), jax.nn.sigmoid(f), jax.nn.sigmoid(o)
            g = jnp.tanh(g)
            c = f * c + i * g
            h = o * jnp.tanh(c)
            return (h, c), h
        xs = jnp.transpose(x_seq, (1, 0, 2))
        if reverse:
            xs = xs[::-1]
        _, hs = lax.scan(step, (h0, c0), xs)
        if reverse:
            hs = hs[::-1]
        return jnp.transpose(hs, (1, 0, 2))

    hidden = x
    for l in range(NUM_LAYERS):
        lp = params['lstm'][l]
        of = run_dir(hidden, lp['wih_f'], lp['whh_f'], lp['bih_f'], lp['bhh_f'],
                     params['h0'][2 * l], params['c0'][2 * l], False)
        ob = run_dir(hidden, lp['wih_b'], lp['whh_b'], lp['bih_b'], lp['bhh_b'],
                     params['h0'][2 * l + 1], params['c0'][2 * l + 1], True)
        hidden = jnp.concatenate([of, ob], axis=2)

    arg = jax.nn.relu(hidden @ params['w_arg'].T + params['b_arg'])
    pred_recur = hidden[jnp.arange(B), predicates]
    pred_h = jax.nn.relu(pred_recur @ params['w_pred'].T + params['b_pred'])
    xb = jnp.concatenate([arg, jnp.ones((B, S, 1), jnp.float32)], axis=2)
    yb = jnp.concatenate([pred_h, jnp.ones((B, 1), jnp.float32)], axis=1)
    W3 = params['rel_W'].reshape(NX, V, NX)
    scores = jnp.einsum('bsi,ivj,bj->bsv', xb, W3, yb)
    return scores.reshape(B * S, V)


# ==================================== main ======================================
if __name__ == "__main__":
    key = jax.random.PRNGKey(0)
    ks = jax.random.split(key, 20)
    scale = 0.05

    def rn(k, shape):
        return (scale * jax.random.normal(k, shape)).astype(jnp.float32)

    params = {
        'lstm': [{
            'wih_f': rn(ks[0], (4 * H, DIN)), 'whh_f': rn(ks[1], (4 * H, H)),
            'bih_f': rn(ks[2], (4 * H,)), 'bhh_f': rn(ks[3], (4 * H,)),
            'wih_b': rn(ks[4], (4 * H, DIN)), 'whh_b': rn(ks[5], (4 * H, H)),
            'bih_b': rn(ks[6], (4 * H,)), 'bhh_b': rn(ks[7], (4 * H,)),
        }],
        'h0': rn(ks[8], (2 * NUM_LAYERS, B, H)),
        'c0': rn(ks[9], (2 * NUM_LAYERS, B, H)),
        'w_arg': rn(ks[10], (MLP, 2 * H)), 'b_arg': rn(ks[11], (MLP,)),
        'w_pred': rn(ks[12], (MLP, 2 * H)), 'b_pred': rn(ks[13], (MLP,)),
        # module inits rel_W to zeros; use small random values here so the
        # biaffine path is exercised non-trivially (shape is what matters).
        'rel_W': rn(ks[14], (NX, V * NX)),
    }

    pretrained_emb = rn(ks[15], (B, S, PRETRAIN)) * 10.0
    flag_emb = rn(ks[16], (B, S, FLAG)) * 10.0
    predicates_1D = jax.random.randint(ks[17], (B,), 0, S).astype(jnp.int32)

    prepped = prepare_params(params)                  # one-time weight prep
    out = sr_labeler_forward(pretrained_emb, flag_emb, predicates_1D, prepped)
    out = jax.block_until_ready(out)
    assert out.shape == (B * S, V), out.shape

    ref = jax.block_until_ready(
        reference_forward(pretrained_emb, flag_emb, predicates_1D, params))
    if not jnp.allclose(out, ref, rtol=2e-2, atol=2e-2):
        max_err = float(jnp.max(jnp.abs(out - ref)))
        raise AssertionError(f"kernel/reference mismatch, max abs err {max_err}")

    print("KERNEL_OK")
</pallas_src>

<mosaic_0001>
module attributes {stable_mosaic.version = 11 : i64} {
  func.func @sr_labeler_kernel(%arg0: i32, %arg1: memref<16x384xf32, #tpu.memory_space<vmem>>, %arg2: memref<2x16xf32, #tpu.memory_space<vmem>>, %arg3: memref<384x256xf32, #tpu.memory_space<vmem>>, %arg4: memref<1x256xf32, #tpu.memory_space<vmem>>, %arg5: memref<64x256xf32, #tpu.memory_space<vmem>>, %arg6: memref<2x64xf32, #tpu.memory_space<vmem>>, %arg7: memref<2x64xf32, #tpu.memory_space<vmem>>, %arg8: memref<64x304xf32, #tpu.memory_space<vmem>>, %arg9: memref<1x304xf32, #tpu.memory_space<vmem>>, %arg10: memref<64x384xf32, #tpu.memory_space<vmem>>, %arg11: memref<1x384xf32, #tpu.memory_space<vmem>>, %arg12: memref<304x384xbf16, #tpu.memory_space<vmem>>, %arg13: memref<16x128xf32, #tpu.memory_space<vmem>>, %arg14: memref<16x304xbf16, #tpu.memory_space<vmem>>, %arg15: memref<16x384xf32, #tpu.memory_space<vmem>>) attributes {dimension_semantics = [#tpu.dimension_semantics<arbitrary>], iteration_bounds = array<i64: 8>, scalar_prefetch = 0 : i64, scratch_operands = 2 : i64, tpu.core_type = #tpu.core_type<tc>, window_params = [{pipeline_mode = #tpu.pipeline_mode<synchronous>, transform_indices = @transform_0, window_bounds = array<i64: 16, 384>}, {pipeline_mode = #tpu.pipeline_mode<synchronous>, transform_indices = @transform_1, window_bounds = array<i64: 2, 16>}, {pipeline_mode = #tpu.pipeline_mode<synchronous>, transform_indices = @transform_2, window_bounds = array<i64: 384, 256>}, {pipeline_mode = #tpu.pipeline_mode<synchronous>, transform_indices = @transform_3, window_bounds = array<i64: 1, 256>}, {pipeline_mode = #tpu.pipeline_mode<synchronous>, transform_indices = @transform_4, window_bounds = array<i64: 64, 256>}, {pipeline_mode = #tpu.pipeline_mode<synchronous>, transform_indices = @transform_5, window_bounds = array<i64: 2, 64>}, {pipeline_mode = #tpu.pipeline_mode<synchronous>, transform_indices = @transform_6, window_bounds = array<i64: 2, 64>}, {pipeline_mode = #tpu.pipeline_mode<synchronous>, transform_indices = @transform_7, window_bounds = array<i64: 64, 304>}, {pipeline_mode = #tpu.pipeline_mode<synchronous>, transform_indices = @transform_8, window_bounds = array<i64: 1, 304>}, {pipeline_mode = #tpu.pipeline_mode<synchronous>, transform_indices = @transform_9, window_bounds = array<i64: 64, 384>}, {pipeline_mode = #tpu.pipeline_mode<synchronous>, transform_indices = @transform_10, window_bounds = array<i64: 1, 384>}, {transform_indices = @transform_11, window_bounds = array<i64: 304, 384>}, {pipeline_mode = #tpu.pipeline_mode<synchronous>, transform_indices = @transform_12, window_bounds = array<i64: 16, 128>}]} {
    %c0_i32 = arith.constant 0 : i32
    %0 = arith.cmpi eq, %arg0, %c0_i32 : i32
    %1 = arith.extui %0 : i1 to i32
    %c0_i32_0 = arith.constant 0 : i32
    %2 = arith.cmpi ne, %1, %c0_i32_0 : i32
    scf.if %2 {
      %c0_11 = arith.constant 0 : index
      %c0_12 = arith.constant 0 : index
      %21 = vector.load %arg1[%c0_11, %c0_12] : memref<16x384xf32, #tpu.memory_space<vmem>>, vector<16x384xf32>
      %c0_13 = arith.constant 0 : index
      %c0_14 = arith.constant 0 : index
      %22 = vector.load %arg3[%c0_13, %c0_14] : memref<384x256xf32, #tpu.memory_space<vmem>>, vector<384x256xf32>
      %cst_15 = arith.constant dense<0.000000e+00> : vector<16x256xf32>
      %23 = tpu.matmul %21, %22, %cst_15 {dimension_numbers = #tpu.dot_dimension_numbers<[1], [0], [0], [1], [0, 0, 1, 1], [], []>} : vector<16x384xf32>, vector<384x256xf32>, vector<16x256xf32> -> vector<16x256xf32>
      %c0_16 = arith.constant 0 : index
      %c0_17 = arith.constant 0 : index
      %24 = vector.load %arg4[%c0_16, %c0_17] : memref<1x256xf32, #tpu.memory_space<vmem>>, vector<1x256xf32>
      %25 = vector.broadcast %24 : vector<1x256xf32> to vector<16x256xf32>
      %26 = arith.addf %23, %25 : vector<16x256xf32>
      %c0_18 = arith.constant 0 : index
      %c0_19 = arith.constant 0 : index
      %27 = vector.load %arg5[%c0_18, %c0_19] : memref<64x256xf32, #tpu.memory_space<vmem>>, vector<64x256xf32>
      %c0_20 = arith.constant 0 : index
      %c0_21 = arith.constant 0 : index
      %28 = vector.load %arg6[%c0_20, %c0_21] : memref<2x64xf32, #tpu.memory_space<vmem>>, vector<2x64xf32>
      %c0_22 = arith.constant 0 : index
      %c0_23 = arith.constant 0 : index
      %29 = vector.load %arg7[%c0_22, %c0_23] : memref<2x64xf32, #tpu.memory_space<vmem>>, vector<2x64xf32>
      %cst_24 = arith.constant dense<0.000000e+00> : vector<2x256xf32>
      %30 = tpu.matmul %28, %27, %cst_24 {dimension_numbers = #tpu.dot_dimension_numbers<[1], [0], [0], [1], [0, 0, 1, 1], [], []>} : vector<2x64xf32>, vector<64x256xf32>, vector<2x256xf32> -> vector<2x256xf32>
      %31 = vector.extract_strided_slice %30 {offsets = [0, 0], sizes = [2, 128], strides = [1, 1]} : vector<2x256xf32> to vector<2x128xf32>
      %32 = vector.extract_strided_slice %26 {offsets = [0, 0], sizes = [2, 128], strides = [1, 1]} : vector<16x256xf32> to vector<2x128xf32>
      %33 = arith.addf %31, %32 : vector<2x128xf32>
      %34 = vector.extract_strided_slice %30 {offsets = [0, 128], sizes = [2, 128], strides = [1, 1]} : vector<2x256xf32> to vector<2x128xf32>
      %35 = vector.extract_strided_slice %26 {offsets = [14, 128], sizes = [2, 128], strides = [1, 1]} : vector<16x256xf32> to vector<2x128xf32>
      %36 = arith.addf %34, %35 : vector<2x128xf32>
      %37 = vector.extract_strided_slice %33 {offsets = [0, 0], sizes = [2, 96], strides = [1, 1]} : vector<2x128xf32> to vector<2x96xf32>
      %38 = arith.negf %37 : vector<2x96xf32>
      %39 = math.exp %38 : vector<2x96xf32>
      %cst_25 = arith.constant 1.000000e+00 : f32
      %40 = vector.broadcast %cst_25 : f32 to vector<2x96xf32>
      %41 = arith.addf %40, %39 : vector<2x96xf32>
      %42 = arith.divf %40, %41 : vector<2x96xf32>
      %43 = vector.extract_strided_slice %36 {offsets = [0, 0], sizes = [2, 96], strides = [1, 1]} : vector<2x128xf32> to vector<2x96xf32>
      %44 = arith.negf %43 : vector<2x96xf32>
      %45 = math.exp %44 : vector<2x96xf32>
      %cst_26 = arith.constant 1.000000e+00 : f32
      %46 = vector.broadcast %cst_26 : f32 to vector<2x96xf32>
      %47 = arith.addf %46, %45 : vector<2x96xf32>
      %48 = arith.divf %46, %47 : vector<2x96xf32>
      %49 = vector.extract_strided_slice %33 {offsets = [0, 96], sizes = [2, 32], strides = [1, 1]} : vector<2x128xf32> to vector<2x32xf32>
      %50 = math.tanh %49 : vector<2x32xf32>
      %51 = vector.extract_strided_slice %36 {offsets = [0, 96], sizes = [2, 32], strides = [1, 1]} : vector<2x128xf32> to vector<2x32xf32>
      %52 = math.tanh %51 : vector<2x32xf32>
      %53 = vector.extract_strided_slice %42 {offsets = [0, 32], sizes = [2, 32], strides = [1, 1]} : vector<2x96xf32> to vector<2x32xf32>
      %54 = vector.extract_strided_slice %29 {offsets = [0, 0], sizes = [2, 32], strides = [1, 1]} : vector<2x64xf32> to vector<2x32xf32>
      %55 = arith.mulf %53, %54 : vector<2x32xf32>
      %56 = vector.extract_strided_slice %42 {offsets = [0, 0], sizes = [2, 32], strides = [1, 1]} : vector<2x96xf32> to vector<2x32xf32>
      %57 = arith.mulf %56, %50 : vector<2x32xf32>
      %58 = arith.addf %55, %57 : vector<2x32xf32>
      %59 = vector.extract_strided_slice %48 {offsets = [0, 32], sizes = [2, 32], strides = [1, 1]} : vector<2x96xf32> to vector<2x32xf32>
      %60 = vector.extract_strided_slice %29 {offsets = [0, 32], sizes = [2, 32], strides = [1, 1]} : vector<2x64xf32> to vector<2x32xf32>
      %61 = arith.mulf %59, %60 : vector<2x32xf32>
      %62 = vector.extract_strided_slice %48 {offsets = [0, 0], sizes = [2, 32], strides = [1, 1]} : vector<2x96xf32> to vector<2x32xf32>
      %63 = arith.mulf %62, %52 : vector<2x32xf32>
      %64 = arith.addf %61, %63 : vector<2x32xf32>
      %65 = vector.extract_strided_slice %42 {offsets = [0, 64], sizes = [2, 32], strides = [1, 1]} : vector<2x96xf32> to vector<2x32xf32>
      %66 = math.tanh %58 : vector<2x32xf32>
      %67 = arith.mulf %65, %66 : vector<2x32xf32>
      %68 = vector.extract_strided_slice %48 {offsets = [0, 64], sizes = [2, 32], strides = [1, 1]} : vector<2x96xf32> to vector<2x32xf32>
      %69 = math.tanh %64 : vector<2x32xf32>
      %70 = arith.mulf %68, %69 : vector<2x32xf32>
      %71 = tpu.concatenate %67, %70 in 1 : vector<2x32xf32>, vector<2x32xf32> -> vector<2x64xf32>
      %72 = tpu.concatenate %58, %64 in 1 : vector<2x32xf32>, vector<2x32xf32> -> vector<2x64xf32>
      %cst_27 = arith.constant dense<0.000000e+00> : vector<2x256xf32>
      %73 = tpu.matmul %71, %27, %cst_27 {dimension_numbers = #tpu.dot_dimension_numbers<[1], [0], [0], [1], [0, 0, 1, 1], [], []>} : vector<2x64xf32>, vector<64x256xf32>, vector<2x256xf32> -> vector<2x256xf32>
      %74 = vector.extract_strided_slice %73 {offsets = [0, 0], sizes = [2, 128], strides = [1, 1]} : vector<2x256xf32> to vector<2x128xf32>
      %75 = vector.extract_strided_slice %26 {offsets = [2, 0], sizes = [2, 128], strides = [1, 1]} : vector<16x256xf32> to vector<2x128xf32>
      %76 = arith.addf %74, %75 : vector<2x128xf32>
      %77 = vector.extract_strided_slice %73 {offsets = [0, 128], sizes = [2, 128], strides = [1, 1]} : vector<2x256xf32> to vector<2x128xf32>
      %78 = vector.extract_strided_slice %26 {offsets = [12, 128], sizes = [2, 128], strides = [1, 1]} : vector<16x256xf32> to vector<2x128xf32>
      %79 = arith.addf %77, %78 : vector<2x128xf32>
      %80 = vector.extract_strided_slice %76 {offsets = [0, 0], sizes = [2, 96], strides = [1, 1]} : vector<2x128xf32> to vector<2x96xf32>
      %81 = arith.negf %80 : vector<2x96xf32>
      %82 = math.exp %81 : vector<2x96xf32>
      %cst_28 = arith.constant 1.000000e+00 : f32
      %83 = vector.broadcast %cst_28 : f32 to vector<2x96xf32>
      %84 = arith.addf %83, %82 : vector<2x96xf32>
      %85 = arith.divf %83, %84 : vector<2x96xf32>
      %86 = vector.extract_strided_slice %79 {offsets = [0, 0], sizes = [2, 96], strides = [1, 1]} : vector<2x128xf32> to vector<2x96xf32>
      %87 = arith.negf %86 : vector<2x96xf32>
      %88 = math.exp %87 : vector<2x96xf32>
      %cst_29 = arith.constant 1.000000e+00 : f32
      %89 = vector.broadcast %cst_29 : f32 to vector<2x96xf32>
      %90 = arith.addf %89, %88 : vector<2x96xf32>
      %91 = arith.divf %89, %90 : vector<2x96xf32>
      %92 = vector.extract_strided_slice %76 {offsets = [0, 96], sizes = [2, 32], strides = [1, 1]} : vector<2x128xf32> to vector<2x32xf32>
      %93 = math.tanh %92 : vector<2x32xf32>
      %94 = vector.extract_strided_slice %79 {offsets = [0, 96], sizes = [2, 32], strides = [1, 1]} : vector<2x128xf32> to vector<2x32xf32>
      %95 = math.tanh %94 : vector<2x32xf32>
      %96 = vector.extract_strided_slice %85 {offsets = [0, 32], sizes = [2, 32], strides = [1, 1]} : vector<2x96xf32> to vector<2x32xf32>
      %97 = vector.extract_strided_slice %72 {offsets = [0, 0], sizes = [2, 32], strides = [1, 1]} : vector<2x64xf32> to vector<2x32xf32>
      %98 = arith.mulf %96, %97 : vector<2x32xf32>
      %99 = vector.extract_strided_slice %85 {offsets = [0, 0], sizes = [2, 32], strides = [1, 1]} : vector<2x96xf32> to vector<2x32xf32>
      %100 = arith.mulf %99, %93 : vector<2x32xf32>
      %101 = arith.addf %98, %100 : vector<2x32xf32>
      %102 = vector.extract_strided_slice %91 {offsets = [0, 32], sizes = [2, 32], strides = [1, 1]} : vector<2x96xf32> to vector<2x32xf32>
      %103 = vector.extract_strided_slice %72 {offsets = [0, 32], sizes = [2, 32], strides = [1, 1]} : vector<2x64xf32> to vector<2x32xf32>
      %104 = arith.mulf %102, %103 : vector<2x32xf32>
      %105 = vector.extract_strided_slice %91 {offsets = [0, 0], sizes = [2, 32], strides = [1, 1]} : vector<2x96xf32> to vector<2x32xf32>
      %106 = arith.mulf %105, %95 : vector<2x32xf32>
      %107 = arith.addf %104, %106 : vector<2x32xf32>
      %108 = vector.extract_strided_slice %85 {offsets = [0, 64], sizes = [2, 32], strides = [1, 1]} : vector<2x96xf32> to vector<2x32xf32>
      %109 = math.tanh %101 : vector<2x32xf32>
      %110 = arith.mulf %108, %109 : vector<2x32xf32>
      %111 = vector.extract_strided_slice %91 {offsets = [0, 64], sizes = [2, 32], strides = [1, 1]} : vector<2x96xf32> to vector<2x32xf32>
      %112 = math.tanh %107 : vector<2x32xf32>
      %113 = arith.mulf %111, %112 : vector<2x32xf32>
      %114 = tpu.concatenate %110, %113 in 1 : vector<2x32xf32>, vector<2x32xf32> -> vector<2x64xf32>
      %115 = tpu.concatenate %101, %107 in 1 : vector<2x32xf32>, vector<2x32xf32> -> vector<2x64xf32>
      %cst_30 = arith.constant dense<0.000000e+00> : vector<2x256xf32>
      %116 = tpu.matmul %114, %27, %cst_30 {dimension_numbers = #tpu.dot_dimension_numbers<[1], [0], [0], [1], [0, 0, 1, 1], [], []>} : vector<2x64xf32>, vector<64x256xf32>, vector<2x256xf32> -> vector<2x256xf32>
      %117 = vector.extract_strided_slice %116 {offsets = [0, 0], sizes = [2, 128], strides = [1, 1]} : vector<2x256xf32> to vector<2x128xf32>
      %118 = vector.extract_strided_slice %26 {offsets = [4, 0], sizes = [2, 128], strides = [1, 1]} : vector<16x256xf32> to vector<2x128xf32>
      %119 = arith.addf %117, %118 : vector<2x128xf32>
      %120 = vector.extract_strided_slice %116 {offsets = [0, 128], sizes = [2, 128], strides = [1, 1]} : vector<2x256xf32> to vector<2x128xf32>
      %121 = vector.extract_strided_slice %26 {offsets = [10, 128], sizes = [2, 128], strides = [1, 1]} : vector<16x256xf32> to vector<2x128xf32>
      %122 = arith.addf %120, %121 : vector<2x128xf32>
      %123 = vector.extract_strided_slice %119 {offsets = [0, 0], sizes = [2, 96], strides = [1, 1]} : vector<2x128xf32> to vector<2x96xf32>
      %124 = arith.negf %123 : vector<2x96xf32>
      %125 = math.exp %124 : vector<2x96xf32>
      %cst_31 = arith.constant 1.000000e+00 : f32
      %126 = vector.broadcast %cst_31 : f32 to vector<2x96xf32>
      %127 = arith.addf %126, %125 : vector<2x96xf32>
      %128 = arith.divf %126, %127 : vector<2x96xf32>
      %129 = vector.extract_strided_slice %122 {offsets = [0, 0], sizes = [2, 96], strides = [1, 1]} : vector<2x128xf32> to vector<2x96xf32>
      %130 = arith.negf %129 : vector<2x96xf32>
      %131 = math.exp %130 : vector<2x96xf32>
      %cst_32 = arith.constant 1.000000e+00 : f32
      %132 = vector.broadcast %cst_32 : f32 to vector<2x96xf32>
      %133 = arith.addf %132, %131 : vector<2x96xf32>
      %134 = arith.divf %132, %133 : vector<2x96xf32>
      %135 = vector.extract_strided_slice %119 {offsets = [0, 96], sizes = [2, 32], strides = [1, 1]} : vector<2x128xf32> to vector<2x32xf32>
      %136 = math.tanh %135 : vector<2x32xf32>
      %137 = vector.extract_strided_slice %122 {offsets = [0, 96], sizes = [2, 32], strides = [1, 1]} : vector<2x128xf32> to vector<2x32xf32>
      %138 = math.tanh %137 : vector<2x32xf32>
      %139 = vector.extract_strided_slice %128 {offsets = [0, 32], sizes = [2, 32], strides = [1, 1]} : vector<2x96xf32> to vector<2x32xf32>
      %140 = vector.extract_strided_slice %115 {offsets = [0, 0], sizes = [2, 32], strides = [1, 1]} : vector<2x64xf32> to vector<2x32xf32>
      %141 = arith.mulf %139, %140 : vector<2x32xf32>
      %142 = vector.extract_strided_slice %128 {offsets = [0, 0], sizes = [2, 32], strides = [1, 1]} : vector<2x96xf32> to vector<2x32xf32>
      %143 = arith.mulf %142, %136 : vector<2x32xf32>
      %144 = arith.addf %141, %143 : vector<2x32xf32>
      %145 = vector.extract_strided_slice %134 {offsets = [0, 32], sizes = [2, 32], strides = [1, 1]} : vector<2x96xf32> to vector<2x32xf32>
      %146 = vector.extract_strided_slice %115 {offsets = [0, 32], sizes = [2, 32], strides = [1, 1]} : vector<2x64xf32> to vector<2x32xf32>
      %147 = arith.mulf %145, %146 : vector<2x32xf32>
      %148 = vector.extract_strided_slice %134 {offsets = [0, 0], sizes = [2, 32], strides = [1, 1]} : vector<2x96xf32> to vector<2x32xf32>
      %149 = arith.mulf %148, %138 : vector<2x32xf32>
      %150 = arith.addf %147, %149 : vector<2x32xf32>
      %151 = vector.extract_strided_slice %128 {offsets = [0, 64], sizes = [2, 32], strides = [1, 1]} : vector<2x96xf32> to vector<2x32xf32>
      %152 = math.tanh %144 : vector<2x32xf32>
      %153 = arith.mulf %151, %152 : vector<2x32xf32>
      %154 = vector.extract_strided_slice %134 {offsets = [0, 64], sizes = [2, 32], strides = [1, 1]} : vector<2x96xf32> to vector<2x32xf32>
      %155 = math.tanh %150 : vector<2x32xf32>
      %156 = arith.mulf %154, %155 : vector<2x32xf32>
      %157 = tpu.concatenate %153, %156 in 1 : vector<2x32xf32>, vector<2x32xf32> -> vector<2x64xf32>
      %158 = tpu.concatenate %144, %150 in 1 : vector<2x32xf32>, vector<2x32xf32> -> vector<2x64xf32>
      %cst_33 = arith.constant dense<0.000000e+00> : vector<2x256xf32>
      %159 = tpu.matmul %157, %27, %cst_33 {dimension_numbers = #tpu.dot_dimension_numbers<[1], [0], [0], [1], [0, 0, 1, 1], [], []>} : vector<2x64xf32>, vector<64x256xf32>, vector<2x256xf32> -> vector<2x256xf32>
      %160 = vector.extract_strided_slice %159 {offsets = [0, 0], sizes = [2, 128], strides = [1, 1]} : vector<2x256xf32> to vector<2x128xf32>
      %161 = vector.extract_strided_slice %26 {offsets = [6, 0], sizes = [2, 128], strides = [1, 1]} : vector<16x256xf32> to vector<2x128xf32>
      %162 = arith.addf %160, %161 : vector<2x128xf32>
      %163 = vector.extract_strided_slice %159 {offsets = [0, 128], sizes = [2, 128], strides = [1, 1]} : vector<2x256xf32> to vector<2x128xf32>
      %164 = vector.extract_strided_slice %26 {offsets = [8, 128], sizes = [2, 128], strides = [1, 1]} : vector<16x256xf32> to vector<2x128xf32>
      %165 = arith.addf %163, %164 : vector<2x128xf32>
      %166 = vector.extract_strided_slice %162 {offsets = [0, 0], sizes = [2, 96], strides = [1, 1]} : vector<2x128xf32> to vector<2x96xf32>
      %167 = arith.negf %166 : vector<2x96xf32>
      %168 = math.exp %167 : vector<2x96xf32>
      %cst_34 = arith.constant 1.000000e+00 : f32
      %169 = vector.broadcast %cst_34 : f32 to vector<2x96xf32>
      %170 = arith.addf %169, %168 : vector<2x96xf32>
      %171 = arith.divf %169, %170 : vector<2x96xf32>
      %172 = vector.extract_strided_slice %165 {offsets = [0, 0], sizes = [2, 96], strides = [1, 1]} : vector<2x128xf32> to vector<2x96xf32>
      %173 = arith.negf %172 : vector<2x96xf32>
      %174 = math.exp %173 : vector<2x96xf32>
      %cst_35 = arith.constant 1.000000e+00 : f32
      %175 = vector.broadcast %cst_35 : f32 to vector<2x96xf32>
      %176 = arith.addf %175, %174 : vector<2x96xf32>
      %177 = arith.divf %175, %176 : vector<2x96xf32>
      %178 = vector.extract_strided_slice %162 {offsets = [0, 96], sizes = [2, 32], strides = [1, 1]} : vector<2x128xf32> to vector<2x32xf32>
      %179 = math.tanh %178 : vector<2x32xf32>
      %180 = vector.extract_strided_slice %165 {offsets = [0, 96], sizes = [2, 32], strides = [1, 1]} : vector<2x128xf32> to vector<2x32xf32>
      %181 = math.tanh %180 : vector<2x32xf32>
      %182 = vector.extract_strided_slice %171 {offsets = [0, 32], sizes = [2, 32], strides = [1, 1]} : vector<2x96xf32> to vector<2x32xf32>
      %183 = vector.extract_strided_slice %158 {offsets = [0, 0], sizes = [2, 32], strides = [1, 1]} : vector<2x64xf32> to vector<2x32xf32>
      %184 = arith.mulf %182, %183 : vector<2x32xf32>
      %185 = vector.extract_strided_slice %171 {offsets = [0, 0], sizes = [2, 32], strides = [1, 1]} : vector<2x96xf32> to vector<2x32xf32>
      %186 = arith.mulf %185, %179 : vector<2x32xf32>
      %187 = arith.addf %184, %186 : vector<2x32xf32>
      %188 = vector.extract_strided_slice %177 {offsets = [0, 32], sizes = [2, 32], strides = [1, 1]} : vector<2x96xf32> to vector<2x32xf32>
      %189 = vector.extract_strided_slice %158 {offsets = [0, 32], sizes = [2, 32], strides = [1, 1]} : vector<2x64xf32> to vector<2x32xf32>
      %190 = arith.mulf %188, %189 : vector<2x32xf32>
      %191 = vector.extract_strided_slice %177 {offsets = [0, 0], sizes = [2, 32], strides = [1, 1]} : vector<2x96xf32> to vector<2x32xf32>
      %192 = arith.mulf %191, %181 : vector<2x32xf32>
      %193 = arith.addf %190, %192 : vector<2x32xf32>
      %194 = vector.extract_strided_slice %171 {offsets = [0, 64], sizes = [2, 32], strides = [1, 1]} : vector<2x96xf32> to vector<2x32xf32>
      %195 = math.tanh %187 : vector<2x32xf32>
      %196 = arith.mulf %194, %195 : vector<2x32xf32>
      %197 = vector.extract_strided_slice %177 {offsets = [0, 64], sizes = [2, 32], strides = [1, 1]} : vector<2x96xf32> to vector<2x32xf32>
      %198 = math.tanh %193 : vector<2x32xf32>
      %199 = arith.mulf %197, %198 : vector<2x32xf32>
      %200 = tpu.concatenate %196, %199 in 1 : vector<2x32xf32>, vector<2x32xf32> -> vector<2x64xf32>
      %201 = tpu.concatenate %187, %193 in 1 : vector<2x32xf32>, vector<2x32xf32> -> vector<2x64xf32>
      %cst_36 = arith.constant dense<0.000000e+00> : vector<2x256xf32>
      %202 = tpu.matmul %200, %27, %cst_36 {dimension_numbers = #tpu.dot_dimension_numbers<[1], [0], [0], [1], [0, 0, 1, 1], [], []>} : vector<2x64xf32>, vector<64x256xf32>, vector<2x256xf32> -> vector<2x256xf32>
      %203 = vector.extract_strided_slice %202 {offsets = [0, 0], sizes = [2, 128], strides = [1, 1]} : vector<2x256xf32> to vector<2x128xf32>
      %204 = vector.extract_strided_slice %26 {offsets = [8, 0], sizes = [2, 128], strides = [1, 1]} : vector<16x256xf32> to vector<2x128xf32>
      %205 = arith.addf %203, %204 : vector<2x128xf32>
      %206 = vector.extract_strided_slice %202 {offsets = [0, 128], sizes = [2, 128], strides = [1, 1]} : vector<2x256xf32> to vector<2x128xf32>
      %207 = vector.extract_strided_slice %26 {offsets = [6, 128], sizes = [2, 128], strides = [1, 1]} : vector<16x256xf32> to vector<2x128xf32>
      %208 = arith.addf %206, %207 : vector<2x128xf32>
      %209 = vector.extract_strided_slice %205 {offsets = [0, 0], sizes = [2, 96], strides = [1, 1]} : vector<2x128xf32> to vector<2x96xf32>
      %210 = arith.negf %209 : vector<2x96xf32>
      %211 = math.exp %210 : vector<2x96xf32>
      %cst_37 = arith.constant 1.000000e+00 : f32
      %212 = vector.broadcast %cst_37 : f32 to vector<2x96xf32>
      %213 = arith.addf %212, %211 : vector<2x96xf32>
      %214 = arith.divf %212, %213 : vector<2x96xf32>
      %215 = vector.extract_strided_slice %208 {offsets = [0, 0], sizes = [2, 96], strides = [1, 1]} : vector<2x128xf32> to vector<2x96xf32>
      %216 = arith.negf %215 : vector<2x96xf32>
      %217 = math.exp %216 : vector<2x96xf32>
      %cst_38 = arith.constant 1.000000e+00 : f32
      %218 = vector.broadcast %cst_38 : f32 to vector<2x96xf32>
      %219 = arith.addf %218, %217 : vector<2x96xf32>
      %220 = arith.divf %218, %219 : vector<2x96xf32>
      %221 = vector.extract_strided_slice %205 {offsets = [0, 96], sizes = [2, 32], strides = [1, 1]} : vector<2x128xf32> to vector<2x32xf32>
      %222 = math.tanh %221 : vector<2x32xf32>
      %223 = vector.extract_strided_slice %208 {offsets = [0, 96], sizes = [2, 32], strides = [1, 1]} : vector<2x128xf32> to vector<2x32xf32>
      %224 = math.tanh %223 : vector<2x32xf32>
      %225 = vector.extract_strided_slice %214 {offsets = [0, 32], sizes = [2, 32], strides = [1, 1]} : vector<2x96xf32> to vector<2x32xf32>
      %226 = vector.extract_strided_slice %201 {offsets = [0, 0], sizes = [2, 32], strides = [1, 1]} : vector<2x64xf32> to vector<2x32xf32>
      %227 = arith.mulf %225, %226 : vector<2x32xf32>
      %228 = vector.extract_strided_slice %214 {offsets = [0, 0], sizes = [2, 32], strides = [1, 1]} : vector<2x96xf32> to vector<2x32xf32>
      %229 = arith.mulf %228, %222 : vector<2x32xf32>
      %230 = arith.addf %227, %229 : vector<2x32xf32>
      %231 = vector.extract_strided_slice %220 {offsets = [0, 32], sizes = [2, 32], strides = [1, 1]} : vector<2x96xf32> to vector<2x32xf32>
      %232 = vector.extract_strided_slice %201 {offsets = [0, 32], sizes = [2, 32], strides = [1, 1]} : vector<2x64xf32> to vector<2x32xf32>
      %233 = arith.mulf %231, %232 : vector<2x32xf32>
      %234 = vector.extract_strided_slice %220 {offsets = [0, 0], sizes = [2, 32], strides = [1, 1]} : vector<2x96xf32> to vector<2x32xf32>
      %235 = arith.mulf %234, %224 : vector<2x32xf32>
      %236 = arith.addf %233, %235 : vector<2x32xf32>
      %237 = vector.extract_strided_slice %214 {offsets = [0, 64], sizes = [2, 32], strides = [1, 1]} : vector<2x96xf32> to vector<2x32xf32>
      %238 = math.tanh %230 : vector<2x32xf32>
      %239 = arith.mulf %237, %238 : vector<2x32xf32>
      %240 = vector.extract_strided_slice %220 {offsets = [0, 64], sizes = [2, 32], strides = [1, 1]} : vector<2x96xf32> to vector<2x32xf32>
      %241 = math.tanh %236 : vector<2x32xf32>
      %242 = arith.mulf %240, %241 : vector<2x32xf32>
      %243 = tpu.concatenate %239, %242 in 1 : vector<2x32xf32>, vector<2x32xf32> -> vector<2x64xf32>
      %244 = tpu.concatenate %230, %236 in 1 : vector<2x32xf32>, vector<2x32xf32> -> vector<2x64xf32>
      %cst_39 = arith.constant dense<0.000000e+00> : vector<2x256xf32>
      %245 = tpu.matmul %243, %27, %cst_39 {dimension_numbers = #tpu.dot_dimension_numbers<[1], [0], [0], [1], [0, 0, 1, 1], [], []>} : vector<2x64xf32>, vector<64x256xf32>, vector<2x256xf32> -> vector<2x256xf32>
      %246 = vector.extract_strided_slice %245 {offsets = [0, 0], sizes = [2, 128], strides = [1, 1]} : vector<2x256xf32> to vector<2x128xf32>
      %247 = vector.extract_strided_slice %26 {offsets = [10, 0], sizes = [2, 128], strides = [1, 1]} : vector<16x256xf32> to vector<2x128xf32>
      %248 = arith.addf %246, %247 : vector<2x128xf32>
      %249 = vector.extract_strided_slice %245 {offsets = [0, 128], sizes = [2, 128], strides = [1, 1]} : vector<2x256xf32> to vector<2x128xf32>
      %250 = vector.extract_strided_slice %26 {offsets = [4, 128], sizes = [2, 128], strides = [1, 1]} : vector<16x256xf32> to vector<2x128xf32>
      %251 = arith.addf %249, %250 : vector<2x128xf32>
      %252 = vector.extract_strided_slice %248 {offsets = [0, 0], sizes = [2, 96], strides = [1, 1]} : vector<2x128xf32> to vector<2x96xf32>
      %253 = arith.negf %252 : vector<2x96xf32>
      %254 = math.exp %253 : vector<2x96xf32>
      %cst_40 = arith.constant 1.000000e+00 : f32
      %255 = vector.broadcast %cst_40 : f32 to vector<2x96xf32>
      %256 = arith.addf %255, %254 : vector<2x96xf32>
      %257 = arith.divf %255, %256 : vector<2x96xf32>
      %258 = vector.extract_strided_slice %251 {offsets = [0, 0], sizes = [2, 96], strides = [1, 1]} : vector<2x128xf32> to vector<2x96xf32>
      %259 = arith.negf %258 : vector<2x96xf32>
      %260 = math.exp %259 : vector<2x96xf32>
      %cst_41 = arith.constant 1.000000e+00 : f32
      %261 = vector.broadcast %cst_41 : f32 to vector<2x96xf32>
      %262 = arith.addf %261, %260 : vector<2x96xf32>
      %263 = arith.divf %261, %262 : vector<2x96xf32>
      %264 = vector.extract_strided_slice %248 {offsets = [0, 96], sizes = [2, 32], strides = [1, 1]} : vector<2x128xf32> to vector<2x32xf32>
      %265 = math.tanh %264 : vector<2x32xf32>
      %266 = vector.extract_strided_slice %251 {offsets = [0, 96], sizes = [2, 32], strides = [1, 1]} : vector<2x128xf32> to vector<2x32xf32>
      %267 = math.tanh %266 : vector<2x32xf32>
      %268 = vector.extract_strided_slice %257 {offsets = [0, 32], sizes = [2, 32], strides = [1, 1]} : vector<2x96xf32> to vector<2x32xf32>
      %269 = vector.extract_strided_slice %244 {offsets = [0, 0], sizes = [2, 32], strides = [1, 1]} : vector<2x64xf32> to vector<2x32xf32>
      %270 = arith.mulf %268, %269 : vector<2x32xf32>
      %271 = vector.extract_strided_slice %257 {offsets = [0, 0], sizes = [2, 32], strides = [1, 1]} : vector<2x96xf32> to vector<2x32xf32>
      %272 = arith.mulf %271, %265 : vector<2x32xf32>
      %273 = arith.addf %270, %272 : vector<2x32xf32>
      %274 = vector.extract_strided_slice %263 {offsets = [0, 32], sizes = [2, 32], strides = [1, 1]} : vector<2x96xf32> to vector<2x32xf32>
      %275 = vector.extract_strided_slice %244 {offsets = [0, 32], sizes = [2, 32], strides = [1, 1]} : vector<2x64xf32> to vector<2x32xf32>
      %276 = arith.mulf %274, %275 : vector<2x32xf32>
      %277 = vector.extract_strided_slice %263 {offsets = [0, 0], sizes = [2, 32], strides = [1, 1]} : vector<2x96xf32> to vector<2x32xf32>
      %278 = arith.mulf %277, %267 : vector<2x32xf32>
      %279 = arith.addf %276, %278 : vector<2x32xf32>
      %280 = vector.extract_strided_slice %257 {offsets = [0, 64], sizes = [2, 32], strides = [1, 1]} : vector<2x96xf32> to vector<2x32xf32>
      %281 = math.tanh %273 : vector<2x32xf32>
      %282 = arith.mulf %280, %281 : vector<2x32xf32>
      %283 = vector.extract_strided_slice %263 {offsets = [0, 64], sizes = [2, 32], strides = [1, 1]} : vector<2x96xf32> to vector<2x32xf32>
      %284 = math.tanh %279 : vector<2x32xf32>
      %285 = arith.mulf %283, %284 : vector<2x32xf32>
      %286 = tpu.concatenate %282, %285 in 1 : vector<2x32xf32>, vector<2x32xf32> -> vector<2x64xf32>
      %287 = tpu.concatenate %273, %279 in 1 : vector<2x32xf32>, vector<2x32xf32> -> vector<2x64xf32>
      %cst_42 = arith.constant dense<0.000000e+00> : vector<2x256xf32>
      %288 = tpu.matmul %286, %27, %cst_42 {dimension_numbers = #tpu.dot_dimension_numbers<[1], [0], [0], [1], [0, 0, 1, 1], [], []>} : vector<2x64xf32>, vector<64x256xf32>, vector<2x256xf32> -> vector<2x256xf32>
      %289 = vector.extract_strided_slice %288 {offsets = [0, 0], sizes = [2, 128], strides = [1, 1]} : vector<2x256xf32> to vector<2x128xf32>
      %290 = vector.extract_strided_slice %26 {offsets = [12, 0], sizes = [2, 128], strides = [1, 1]} : vector<16x256xf32> to vector<2x128xf32>
      %291 = arith.addf %289, %290 : vector<2x128xf32>
      %292 = vector.extract_strided_slice %288 {offsets = [0, 128], sizes = [2, 128], strides = [1, 1]} : vector<2x256xf32> to vector<2x128xf32>
      %293 = vector.extract_strided_slice %26 {offsets = [2, 128], sizes = [2, 128], strides = [1, 1]} : vector<16x256xf32> to vector<2x128xf32>
      %294 = arith.addf %292, %293 : vector<2x128xf32>
      %295 = vector.extract_strided_slice %291 {offsets = [0, 0], sizes = [2, 96], strides = [1, 1]} : vector<2x128xf32> to vector<2x96xf32>
      %296 = arith.negf %295 : vector<2x96xf32>
      %297 = math.exp %296 : vector<2x96xf32>
      %cst_43 = arith.constant 1.000000e+00 : f32
      %298 = vector.broadcast %cst_43 : f32 to vector<2x96xf32>
      %299 = arith.addf %298, %297 : vector<2x96xf32>
      %300 = arith.divf %298, %299 : vector<2x96xf32>
      %301 = vector.extract_strided_slice %294 {offsets = [0, 0], sizes = [2, 96], strides = [1, 1]} : vector<2x128xf32> to vector<2x96xf32>
      %302 = arith.negf %301 : vector<2x96xf32>
      %303 = math.exp %302 : vector<2x96xf32>
      %cst_44 = arith.constant 1.000000e+00 : f32
      %304 = vector.broadcast %cst_44 : f32 to vector<2x96xf32>
      %305 = arith.addf %304, %303 : vector<2x96xf32>
      %306 = arith.divf %304, %305 : vector<2x96xf32>
      %307 = vector.extract_strided_slice %291 {offsets = [0, 96], sizes = [2, 32], strides = [1, 1]} : vector<2x128xf32> to vector<2x32xf32>
      %308 = math.tanh %307 : vector<2x32xf32>
      %309 = vector.extract_strided_slice %294 {offsets = [0, 96], sizes = [2, 32], strides = [1, 1]} : vector<2x128xf32> to vector<2x32xf32>
      %310 = math.tanh %309 : vector<2x32xf32>
      %311 = vector.extract_strided_slice %300 {offsets = [0, 32], sizes = [2, 32], strides = [1, 1]} : vector<2x96xf32> to vector<2x32xf32>
      %312 = vector.extract_strided_slice %287 {offsets = [0, 0], sizes = [2, 32], strides = [1, 1]} : vector<2x64xf32> to vector<2x32xf32>
      %313 = arith.mulf %311, %312 : vector<2x32xf32>
      %314 = vector.extract_strided_slice %300 {offsets = [0, 0], sizes = [2, 32], strides = [1, 1]} : vector<2x96xf32> to vector<2x32xf32>
      %315 = arith.mulf %314, %308 : vector<2x32xf32>
      %316 = arith.addf %313, %315 : vector<2x32xf32>
      %317 = vector.extract_strided_slice %306 {offsets = [0, 32], sizes = [2, 32], strides = [1, 1]} : vector<2x96xf32> to vector<2x32xf32>
      %318 = vector.extract_strided_slice %287 {offsets = [0, 32], sizes = [2, 32], strides = [1, 1]} : vector<2x64xf32> to vector<2x32xf32>
      %319 = arith.mulf %317, %318 : vector<2x32xf32>
      %320 = vector.extract_strided_slice %306 {offsets = [0, 0], sizes = [2, 32], strides = [1, 1]} : vector<2x96xf32> to vector<2x32xf32>
      %321 = arith.mulf %320, %310 : vector<2x32xf32>
      %322 = arith.addf %319, %321 : vector<2x32xf32>
      %323 = vector.extract_strided_slice %300 {offsets = [0, 64], sizes = [2, 32], strides = [1, 1]} : vector<2x96xf32> to vector<2x32xf32>
      %324 = math.tanh %316 : vector<2x32xf32>
      %325 = arith.mulf %323, %324 : vector<2x32xf32>
      %326 = vector.extract_strided_slice %306 {offsets = [0, 64], sizes = [2, 32], strides = [1, 1]} : vector<2x96xf32> to vector<2x32xf32>
      %327 = math.tanh %322 : vector<2x32xf32>
      %328 = arith.mulf %326, %327 : vector<2x32xf32>
      %329 = tpu.concatenate %325, %328 in 1 : vector<2x32xf32>, vector<2x32xf32> -> vector<2x64xf32>
      %330 = tpu.concatenate %316, %322 in 1 : vector<2x32xf32>, vector<2x32xf32> -> vector<2x64xf32>
      %cst_45 = arith.constant dense<0.000000e+00> : vector<2x256xf32>
      %331 = tpu.matmul %329, %27, %cst_45 {dimension_numbers = #tpu.dot_dimension_numbers<[1], [0], [0], [1], [0, 0, 1, 1], [], []>} : vector<2x64xf32>, vector<64x256xf32>, vector<2x256xf32> -> vector<2x256xf32>
      %332 = vector.extract_strided_slice %331 {offsets = [0, 0], sizes = [2, 128], strides = [1, 1]} : vector<2x256xf32> to vector<2x128xf32>
      %333 = vector.extract_strided_slice %26 {offsets = [14, 0], sizes = [2, 128], strides = [1, 1]} : vector<16x256xf32> to vector<2x128xf32>
      %334 = arith.addf %332, %333 : vector<2x128xf32>
      %335 = vector.extract_strided_slice %331 {offsets = [0, 128], sizes = [2, 128], strides = [1, 1]} : vector<2x256xf32> to vector<2x128xf32>
      %336 = vector.extract_strided_slice %26 {offsets = [0, 128], sizes = [2, 128], strides = [1, 1]} : vector<16x256xf32> to vector<2x128xf32>
      %337 = arith.addf %335, %336 : vector<2x128xf32>
      %338 = vector.extract_strided_slice %334 {offsets = [0, 0], sizes = [2, 96], strides = [1, 1]} : vector<2x128xf32> to vector<2x96xf32>
      %339 = arith.negf %338 : vector<2x96xf32>
      %340 = math.exp %339 : vector<2x96xf32>
      %cst_46 = arith.constant 1.000000e+00 : f32
      %341 = vector.broadcast %cst_46 : f32 to vector<2x96xf32>
      %342 = arith.addf %341, %340 : vector<2x96xf32>
      %343 = arith.divf %341, %342 : vector<2x96xf32>
      %344 = vector.extract_strided_slice %337 {offsets = [0, 0], sizes = [2, 96], strides = [1, 1]} : vector<2x128xf32> to vector<2x96xf32>
      %345 = arith.negf %344 : vector<2x96xf32>
      %346 = math.exp %345 : vector<2x96xf32>
      %cst_47 = arith.constant 1.000000e+00 : f32
      %347 = vector.broadcast %cst_47 : f32 to vector<2x96xf32>
      %348 = arith.addf %347, %346 : vector<2x96xf32>
      %349 = arith.divf %347, %348 : vector<2x96xf32>
      %350 = vector.extract_strided_slice %334 {offsets = [0, 96], sizes = [2, 32], strides = [1, 1]} : vector<2x128xf32> to vector<2x32xf32>
      %351 = math.tanh %350 : vector<2x32xf32>
      %352 = vector.extract_strided_slice %337 {offsets = [0, 96], sizes = [2, 32], strides = [1, 1]} : vector<2x128xf32> to vector<2x32xf32>
      %353 = math.tanh %352 : vector<2x32xf32>
      %354 = vector.extract_strided_slice %343 {offsets = [0, 32], sizes = [2, 32], strides = [1, 1]} : vector<2x96xf32> to vector<2x32xf32>
      %355 = vector.extract_strided_slice %330 {offsets = [0, 0], sizes = [2, 32], strides = [1, 1]} : vector<2x64xf32> to vector<2x32xf32>
      %356 = arith.mulf %354, %355 : vector<2x32xf32>
      %357 = vector.extract_strided_slice %343 {offsets = [0, 0], sizes = [2, 32], strides = [1, 1]} : vector<2x96xf32> to vector<2x32xf32>
      %358 = arith.mulf %357, %351 : vector<2x32xf32>
      %359 = arith.addf %356, %358 : vector<2x32xf32>
      %360 = vector.extract_strided_slice %349 {offsets = [0, 32], sizes = [2, 32], strides = [1, 1]} : vector<2x96xf32> to vector<2x32xf32>
      %361 = vector.extract_strided_slice %330 {offsets = [0, 32], sizes = [2, 32], strides = [1, 1]} : vector<2x64xf32> to vector<2x32xf32>
      %362 = arith.mulf %360, %361 : vector<2x32xf32>
      %363 = vector.extract_strided_slice %349 {offsets = [0, 0], sizes = [2, 32], strides = [1, 1]} : vector<2x96xf32> to vector<2x32xf32>
      %364 = arith.mulf %363, %353 : vector<2x32xf32>
      %365 = arith.addf %362, %364 : vector<2x32xf32>
      %366 = vector.extract_strided_slice %343 {offsets = [0, 64], sizes = [2, 32], strides = [1, 1]} : vector<2x96xf32> to vector<2x32xf32>
      %367 = math.tanh %359 : vector<2x32xf32>
      %368 = arith.mulf %366, %367 : vector<2x32xf32>
      %369 = vector.extract_strided_slice %349 {offsets = [0, 64], sizes = [2, 32], strides = [1, 1]} : vector<2x96xf32> to vector<2x32xf32>
      %370 = math.tanh %365 : vector<2x32xf32>
      %371 = arith.mulf %369, %370 : vector<2x32xf32>
      %372 = tpu.concatenate %67, %371 in 1 : vector<2x32xf32>, vector<2x32xf32> -> vector<2x64xf32>
      %373 = tpu.concatenate %110, %328 in 1 : vector<2x32xf32>, vector<2x32xf32> -> vector<2x64xf32>
      %374 = tpu.concatenate %153, %285 in 1 : vector<2x32xf32>, vector<2x32xf32> -> vector<2x64xf32>
      %375 = tpu.concatenate %196, %242 in 1 : vector<2x32xf32>, vector<2x32xf32> -> vector<2x64xf32>
      %376 = tpu.concatenate %239, %199 in 1 : vector<2x32xf32>, vector<2x32xf32> -> vector<2x64xf32>
      %377 = tpu.concatenate %282, %156 in 1 : vector<2x32xf32>, vector<2x32xf32> -> vector<2x64xf32>
      %378 = tpu.concatenate %325, %113 in 1 : vector<2x32xf32>, vector<2x32xf32> -> vector<2x64xf32>
      %379 = tpu.concatenate %368, %70 in 1 : vector<2x32xf32>, vector<2x32xf32> -> vector<2x64xf32>
      %380 = tpu.concatenate %372, %373, %374, %375, %376, %377, %378, %379 in 0 : vector<2x64xf32>, vector<2x64xf32>, vector<2x64xf32>, vector<2x64xf32>, vector<2x64xf32>, vector<2x64xf32>, vector<2x64xf32>, vector<2x64xf32> -> vector<16x64xf32>
      %c0_48 = arith.constant 0 : index
      %c0_49 = arith.constant 0 : index
      %381 = vector.load %arg8[%c0_48, %c0_49] : memref<64x304xf32, #tpu.memory_space<vmem>>, vector<64x304xf32>
      %cst_50 = arith.constant dense<0.000000e+00> : vector<16x304xf32>
      %382 = tpu.matmul %380, %381, %cst_50 {dimension_numbers = #tpu.dot_dimension_numbers<[1], [0], [0], [1], [0, 0, 1, 1], [], []>} : vector<16x64xf32>, vector<64x304xf32>, vector<16x304xf32> -> vector<16x304xf32>
      %c0_51 = arith.constant 0 : index
      %c0_52 = arith.constant 0 : index
      %383 = vector.load %arg9[%c0_51, %c0_52] : memref<1x304xf32, #tpu.memory_space<vmem>>, vector<1x304xf32>
      %384 = vector.broadcast %383 : vector<1x304xf32> to vector<16x304xf32>
      %385 = arith.addf %382, %384 : vector<16x304xf32>
      %cst_53 = arith.constant 0.000000e+00 : f32
      %386 = vector.broadcast %cst_53 : f32 to vector<16x304xf32>
      %387 = arith.maximumf %385, %386 : vector<16x304xf32>
      %388 = arith.truncf %387 : vector<16x304xf32> to vector<16x304xbf16>
      %c0_54 = arith.constant 0 : index
      %c0_55 = arith.constant 0 : index
      %389 = vector.load %arg14[%c0_54, %c0_55] : memref<16x304xbf16, #tpu.memory_space<vmem>>, vector<16x304xbf16>
      tpu.vector_store %arg14[%c0_54, %c0_55], %388 {strides = array<i32>} : memref<16x304xbf16, #tpu.memory_space<vmem>>, vector<16x304xbf16>,
      %c0_56 = arith.constant 0 : index
      %c0_57 = arith.constant 0 : index
      %390 = vector.load %arg2[%c0_56, %c0_57] : memref<2x16xf32, #tpu.memory_space<vmem>>, vector<2x16xf32>
      %cst_58 = arith.constant dense<0.000000e+00> : vector<2x64xf32>
      %391 = tpu.matmul %390, %380, %cst_58 {dimension_numbers = #tpu.dot_dimension_numbers<[1], [0], [0], [1], [0, 0, 1, 1], [], []>} : vector<2x16xf32>, vector<16x64xf32>, vector<2x64xf32> -> vector<2x64xf32>
      %c0_59 = arith.constant 0 : index
      %c0_60 = arith.constant 0 : index
      %392 = vector.load %arg10[%c0_59, %c0_60] : memref<64x384xf32, #tpu.memory_space<vmem>>, vector<64x384xf32>
      %cst_61 = arith.constant dense<0.000000e+00> : vector<2x384xf32>
      %393 = tpu.matmul %391, %392, %cst_61 {dimension_numbers = #tpu.dot_dimension_numbers<[1], [0], [0], [1], [0, 0, 1, 1], [], []>} : vector<2x64xf32>, vector<64x384xf32>, vector<2x384xf32> -> vector<2x384xf32>
      %c0_62 = arith.constant 0 : index
      %c0_63 = arith.constant 0 : index
      %394 = vector.load %arg11[%c0_62, %c0_63] : memref<1x384xf32, #tpu.memory_space<vmem>>, vector<1x384xf32>
      %395 = vector.broadcast %394 : vector<1x384xf32> to vector<2x384xf32>
      %396 = arith.addf %393, %395 : vector<2x384xf32>
      %cst_64 = arith.constant 0.000000e+00 : f32
      %397 = vector.broadcast %cst_64 : f32 to vector<2x384xf32>
      %398 = arith.maximumf %396, %397 : vector<2x384xf32>
      %399 = tpu.concatenate %398, %398, %398, %398, %398, %398, %398, %398 in 0 : vector<2x384xf32>, vector<2x384xf32>, vector<2x384xf32>, vector<2x384xf32>, vector<2x384xf32>, vector<2x384xf32>, vector<2x384xf32>, vector<2x384xf32> -> vector<16x384xf32>
      %c0_65 = arith.constant 0 : index
      %c0_66 = arith.constant 0 : index
      %400 = vector.load %arg15[%c0_65, %c0_66] : memref<16x384xf32, #tpu.memory_space<vmem>>, vector<16x384xf32>
      tpu.vector_store %arg15[%c0_65, %c0_66], %399 {strides = array<i32>} : memref<16x384xf32, #tpu.memory_space<vmem>>, vector<16x384xf32>,
      %cst_67 = arith.constant 0.000000e+00 : f32
      %401 = vector.broadcast %cst_67 : f32 to vector<16x128xf32>
      %c0_68 = arith.constant 0 : index
      %c0_69 = arith.constant 0 : index
      %402 = vector.load %arg13[%c0_68, %c0_69] : memref<16x128xf32, #tpu.memory_space<vmem>>, vector<16x128xf32>
      tpu.vector_store %arg13[%c0_68, %c0_69], %401 {strides = array<i32>} : memref<16x128xf32, #tpu.memory_space<vmem>>, vector<16x128xf32>,
    } else {
    }
    %c0 = arith.constant 0 : index
    %c0_1 = arith.constant 0 : index
    %3 = vector.load %arg14[%c0, %c0_1] : memref<16x304xbf16, #tpu.memory_space<vmem>>, vector<16x304xbf16>
    %c0_2 = arith.constant 0 : index
    %c0_3 = arith.constant 0 : index
    %4 = vector.load %arg12[%c0_2, %c0_3] : memref<304x384xbf16, #tpu.memory_space<vmem>>, vector<304x384xbf16>
    %cst = arith.constant dense<0.000000e+00> : vector<16x384xf32>
    %5 = tpu.matmul %3, %4, %cst {dimension_numbers = #tpu.dot_dimension_numbers<[1], [0], [0], [1], [0, 0, 1, 1], [], []>} : vector<16x304xbf16>, vector<304x384xbf16>, vector<16x384xf32> -> vector<16x384xf32>
    %c0_4 = arith.constant 0 : index
    %c0_5 = arith.constant 0 : index
    %6 = vector.load %arg15[%c0_4, %c0_5] : memref<16x384xf32, #tpu.memory_space<vmem>>, vector<16x384xf32>
    %7 = arith.mulf %5, %6 : vector<16x384xf32>
    %cst_6 = arith.constant dense<0.000000e+00> : vector<16xf32>
    %8 = vector.multi_reduction <add>, %7, %cst_6 [1] : vector<16x384xf32> to vector<16xf32>
    %9 = vector.shape_cast %8 : vector<16xf32> to vector<16x1xf32>
    %10 = tpu.iota {dimensions = array<i32: 1>} : vector<1x128xi32>
    %11 = vector.broadcast %arg0 : i32 to vector<1x128xi32>
    %12 = arith.cmpi eq, %10, %11 : vector<1x128xi32>
    %13 = arith.extui %12 : vector<1x128xi1> to vector<1x128xi32>
    %14 = arith.sitofp %13 : vector<1x128xi32> to vector<1x128xf32>
    %c0_7 = arith.constant 0 : index
    %c0_8 = arith.constant 0 : index
    %15 = vector.load %arg13[%c0_7, %c0_8] : memref<16x128xf32, #tpu.memory_space<vmem>>, vector<16x128xf32>
    %16 = vector.broadcast %9 : vector<16x1xf32> to vector<16x128xf32>
    %17 = vector.broadcast %14 : vector<1x128xf32> to vector<16x128xf32>
    %18 = arith.mulf %16, %17 : vector<16x128xf32>
    %19 = arith.addf %15, %18 : vector<16x128xf32>
    %c0_9 = arith.constant 0 : index
    %c0_10 = arith.constant 0 : index
    %20 = vector.load %arg13[%c0_9, %c0_10] : memref<16x128xf32, #tpu.memory_space<vmem>>, vector<16x128xf32>
    tpu.vector_store %arg13[%c0_9, %c0_10], %19 {strides = array<i32>} : memref<16x128xf32, #tpu.memory_space<vmem>>, vector<16x128xf32>,
    return
  }
  func.func @transform_0(%arg0: i32) -> (i32, i32) {
    %c0_i32 = arith.constant 0 : i32
    %c0_i32_0 = arith.constant 0 : i32
    %c0_i32_1 = arith.constant 0 : i32
    return %c0_i32, %c0_i32_0 : i32, i32
  }
  func.func @transform_1(%arg0: i32) -> (i32, i32) {
    %c0_i32 = arith.constant 0 : i32
    %c0_i32_0 = arith.constant 0 : i32
    %c0_i32_1 = arith.constant 0 : i32
    return %c0_i32, %c0_i32_0 : i32, i32
  }
  func.func @transform_2(%arg0: i32) -> (i32, i32) {
    %c0_i32 = arith.constant 0 : i32
    %c0_i32_0 = arith.constant 0 : i32
    %c0_i32_1 = arith.constant 0 : i32
    return %c0_i32, %c0_i32_0 : i32, i32
  }
  func.func @transform_3(%arg0: i32) -> (i32, i32) {
    %c0_i32 = arith.constant 0 : i32
    %c0_i32_0 = arith.constant 0 : i32
    %c0_i32_1 = arith.constant 0 : i32
    return %c0_i32, %c0_i32_0 : i32, i32
  }
  func.func @transform_4(%arg0: i32) -> (i32, i32) {
    %c0_i32 = arith.constant 0 : i32
    %c0_i32_0 = arith.constant 0 : i32
    %c0_i32_1 = arith.constant 0 : i32
    return %c0_i32, %c0_i32_0 : i32, i32
  }
  func.func @transform_5(%arg0: i32) -> (i32, i32) {
    %c0_i32 = arith.constant 0 : i32
    %c0_i32_0 = arith.constant 0 : i32
    %c0_i32_1 = arith.constant 0 : i32
    return %c0_i32, %c0_i32_0 : i32, i32
  }
  func.func @transform_6(%arg0: i32) -> (i32, i32) {
    %c0_i32 = arith.constant 0 : i32
    %c0_i32_0 = arith.constant 0 : i32
    %c0_i32_1 = arith.constant 0 : i32
    return %c0_i32, %c0_i32_0 : i32, i32
  }
  func.func @transform_7(%arg0: i32) -> (i32, i32) {
    %c0_i32 = arith.constant 0 : i32
    %c0_i32_0 = arith.constant 0 : i32
    %c0_i32_1 = arith.constant 0 : i32
    return %c0_i32, %c0_i32_0 : i32, i32
  }
  func.func @transform_8(%arg0: i32) -> (i32, i32) {
    %c0_i32 = arith.constant 0 : i32
    %c0_i32_0 = arith.constant 0 : i32
    %c0_i32_1 = arith.constant 0 : i32
    return %c0_i32, %c0_i32_0 : i32, i32
  }
  func.func @transform_9(%arg0: i32) -> (i32, i32) {
    %c0_i32 = arith.constant 0 : i32
    %c0_i32_0 = arith.constant 0 : i32
    %c0_i32_1 = arith.constant 0 : i32
    return %c0_i32, %c0_i32_0 : i32, i32
  }
  func.func @transform_10(%arg0: i32) -> (i32, i32) {
    %c0_i32 = arith.constant 0 : i32
    %c0_i32_0 = arith.constant 0 : i32
    %c0_i32_1 = arith.constant 0 : i32
    return %c0_i32, %c0_i32_0 : i32, i32
  }
  func.func @transform_11(%arg0: i32) -> (i32, i32) {
    %c0_i32 = arith.constant 0 : i32
    %c0_i32_0 = arith.constant 0 : i32
    return %c0_i32, %arg0 : i32, i32
  }
  func.func @transform_12(%arg0: i32) -> (i32, i32) {
    %c0_i32 = arith.constant 0 : i32
    %c0_i32_0 = arith.constant 0 : i32
    %c0_i32_1 = arith.constant 0 : i32
    return %c0_i32, %c0_i32_0 : i32, i32
  }
}

</mosaic_0001>

<llo_original>
// kernel: sr_labeler_forward.1
$region0: #{sr_labeler_forward.1}
  #allocation0 [shape = 'u32[]', space=smem, size = 0x4, offset = 0x4, fixed_abs, tag = 'smem constant byte address 0x4 - core index']
  #allocation1 [shape = 'u32[144,128]{1,0:T(1,128)}', space=vmem, size = 0x12000, scoped, tag = 'internal scratch']
  #allocation2 [shape = 'bf16[16,304]{1,0:T(8,128)(2,1)}', space=vmem, size = 0x3000, scoped, tag = 'scratch operand']
  #allocation3 [shape = 'f32[16,384]{1,0:T(8,128)}', space=vmem, size = 0x6000, scoped, tag = 'scratch operand']
  %s0 = inlined_call_operand.vmem [shape: f32[16,384], index: 0, kind: input, shape index: {}]
  %s1 = inlined_call_operand.vmem [shape: f32[2,16], index: 1, kind: input, shape index: {}]
  %s2 = inlined_call_operand.hbm [shape: f32[384,256], index: 2, kind: input, shape index: {}]
  %s3 = inlined_call_operand.hbm [shape: f32[1,256], index: 3, kind: input, shape index: {}]
  %s4 = inlined_call_operand.hbm [shape: f32[64,256], index: 4, kind: input, shape index: {}]
  %s5 = inlined_call_operand.hbm [shape: f32[2,64], index: 5, kind: input, shape index: {}]
  %s6 = inlined_call_operand.hbm [shape: f32[2,64], index: 6, kind: input, shape index: {}]
  %s7 = inlined_call_operand.hbm [shape: f32[64,304], index: 7, kind: input, shape index: {}]
  %s8 = inlined_call_operand.hbm [shape: f32[1,304], index: 8, kind: input, shape index: {}]
  %s9 = inlined_call_operand.hbm [shape: f32[64,384], index: 9, kind: input, shape index: {}]
  %s10 = inlined_call_operand.hbm [shape: f32[1,384], index: 10, kind: input, shape index: {}]
  %s11 = inlined_call_operand.hbm [shape: bf16[304,3072], index: 11, kind: input, shape index: {}]
  %s12 = inlined_call_operand.vmem [shape: f32[16,128], index: 12, kind: output, shape index: {}]
  %s13 = sld [smem:[#allocation0]]
  $region125: #{sr_labeler_forward.1} parent=0
    _
  %s15 = ssub.s32 1, %s13
  %s16 = scalar_select 0, %s15, %s13
  $region1: #{sr_labeler_forward.1} parent=0
    #allocation4 [shape = 'u8[393216]{0}', space=vmem, size = 0x60000, scoped, tag = 'input window, operand 2, single buffered']
    #allocation5 [shape = 's32[2]{0}', space=sflag, size = 0x8, scoped, tag = 'scoped memory for sr_labeler_forward.1']
    #allocation6 [shape = 'u8[1024]{0}', space=vmem, size = 0x400, scoped, tag = 'input window, operand 3, single buffered']
    #allocation7 [shape = 's32[1]{0}', space=sflag, size = 0x4, scoped, tag = 'scoped memory for sr_labeler_forward.1']
    #allocation8 [shape = 'u8[65536]{0}', space=vmem, size = 0x10000, scoped, tag = 'input window, operand 4, single buffered']
    #allocation9 [shape = 'u8[1024]{0}', space=vmem, size = 0x400, scoped, tag = 'input window, operand 5, single buffered']
    #allocation10 [shape = 's32[1]{0}', space=sflag, size = 0x4, scoped, tag = 'scoped memory for sr_labeler_forward.1']
    #allocation11 [shape = 'u8[1024]{0}', space=vmem, size = 0x400, scoped, tag = 'input window, operand 6, single buffered']
    #allocation12 [shape = 'u8[98304]{0}', space=vmem, size = 0x18000, scoped, tag = 'input window, operand 7, single buffered']
    #allocation13 [shape = 's32[1]{0}', space=sflag, size = 0x4, scoped, tag = 'scoped memory for sr_labeler_forward.1']
    #allocation14 [shape = 'u8[1536]{0}', space=vmem, size = 0x800, scoped, tag = 'input window, operand 8, single buffered']
    #allocation15 [shape = 'u8[98304]{0}', space=vmem, size = 0x18000, scoped, tag = 'input window, operand 9, single buffered']
    #allocation16 [shape = 's32[1]{0}', space=sflag, size = 0x4, scoped, tag = 'scoped memory for sr_labeler_forward.1']
    #allocation17 [shape = 'u8[1536]{0}', space=vmem, size = 0x800, scoped, tag = 'input window, operand 10, single buffered']
    #allocation18 [shape = 'u8[466944]{0}', space=vmem, size = 0x72000, scoped, tag = 'input window, operand 11']
    #allocation19 [shape = 's32[2]{0}', space=sflag, size = 0x8, scoped, tag = 'scoped memory for sr_labeler_forward.1']
    %17 = vsyncpa [#allocation5], 0
    %18 = vsyncpa [#allocation7], 0
    %19 = vsyncpa [#allocation10], 0
    %20 = vsyncpa [#allocation13], 0
    %21 = vsyncpa [#allocation16], 0
    %22 = vsyncpa [#allocation19], 0
    %s23 = scalar_lea.sflag [#allocation19], 1
    %24 = vsyncpa %s23, 0
    loop: start=0, step=1, limit=10
    $region2: #{sr_labeler_forward.1} parent=1 // loop_pre_header
      _
    $region3: #{sr_labeler_forward.1} parent=1 // loop_header
      %s26 = sphi 0, %s30
      %p27 = scmp.ge.s32.totalorder %s26, 10
      %s34 = sphi 0, %s34
      %s36 = sphi 0, %s34
      %s37 = sphi 0, %s36
      %s51 = sphi 0, %s37
      %s55 = sphi 0, %s55
      %s57 = sphi 0, %s55
      %s58 = sphi 0, %s57
      %s72 = sphi 0, %s58
      %s76 = sphi 0, %s76
      %s78 = sphi 0, %s76
      %s79 = sphi 0, %s78
      %s93 = sphi 0, %s79
      %s97 = sphi 0, %s97
      %s99 = sphi 0, %s97
      %s100 = sphi 0, %s99
      %s114 = sphi 0, %s100
      %s118 = sphi 0, %s118
      %s120 = sphi 0, %s118
      %s121 = sphi 0, %s120
      %s135 = sphi 0, %s121
      %s139 = sphi 0, %s139
      %s141 = sphi 0, %s139
      %s142 = sphi 0, %s141
      %s156 = sphi 0, %s142
      %s160 = sphi 0, %s160
      %s162 = sphi 0, %s160
      %s163 = sphi 0, %s162
      %s177 = sphi 0, %s163
      %s181 = sphi 0, %s181
      %s183 = sphi 0, %s181
      %s184 = sphi 0, %s183
      %s198 = sphi 0, %s184
      %s202 = sphi 0, %s202
      %s204 = sphi 0, %s202
      %s205 = sphi 0, %s204
      %s219 = sphi 0, %s205
      %s223 = sphi 0, %s223
      %s225 = sphi 0, %s223
      %s226 = sphi 0, %s225
      %s240 = sphi 0, %s226
      %s244 = sphi 0, %s244
      %s246 = sphi 0, %s244
      %s247 = sphi 0, %s246
      %s261 = sphi 0, %s247
      %s267 = sphi 0, %s269
      %s270 = sphi 0, %s267
      %s271 = sphi 0, %s270
      %s287 = sphi 0, %s271
      %s291 = sphi 0, %s291
      %s293 = sphi 0, %s291
      %s294 = sphi 0, %s293
      %s308 = sphi 0, %s294
    $region4: #{sr_labeler_forward.1} parent=1 // loop_header_branch
      %29 = sbr.rel (%p27) target = $region8
    $region5: #{sr_labeler_forward.1} parent=1 // loop_body
      %s31 = ssub.s32 %s26, 1
      %s32 = ssub.s32 %s26, 2
      %s33 = sadd.s32 %s26, 1
      %s35 = sadd.s32 %s34, 1
      %p38 = scmp.eq.s32.totalorder %s26, 7
      %p39 = scmp.ne.s32.totalorder %s34, %s36
      %p40 = scmp.eq.s32.totalorder %s26, 0
      %p41 = por %p39, %p40
      %p42 = scmp.ne.s32.totalorder %s34, %s36
      %p43 = scmp.eq.s32.totalorder %s31, 7
      %p44 = por %p42, %p43
      %p45 = scmp.ne.s32.totalorder %s36, %s37
      %p46 = scmp.eq.s32.totalorder %s31, 0
      %p47 = por %p45, %p46
      %p48 = scmp.ne.s32.totalorder %s36, %s37
      %p49 = scmp.eq.s32.totalorder %s32, 7
      %p50 = por %p48, %p49
      %p52 = scmp.ne.s32.totalorder %s37, %s51
      %p53 = scmp.eq.s32.totalorder %s32, 0
      %p54 = por %p52, %p53
      %s56 = sadd.s32 %s55, 1
      %p59 = scmp.eq.s32.totalorder %s26, 7
      %p60 = scmp.ne.s32.totalorder %s55, %s57
      %p61 = scmp.eq.s32.totalorder %s26, 0
      %p62 = por %p60, %p61
      %p63 = scmp.ne.s32.totalorder %s55, %s57
      %p64 = scmp.eq.s32.totalorder %s31, 7
      %p65 = por %p63, %p64
      %p66 = scmp.ne.s32.totalorder %s57, %s58
      %p67 = scmp.eq.s32.totalorder %s31, 0
      %p68 = por %p66, %p67
      %p69 = scmp.ne.s32.totalorder %s57, %s58
      %p70 = scmp.eq.s32.totalorder %s32, 7
      %p71 = por %p69, %p70
      %p73 = scmp.ne.s32.totalorder %s58, %s72
      %p74 = scmp.eq.s32.totalorder %s32, 0
      %p75 = por %p73, %p74
      %s77 = sadd.s32 %s76, 1
      %p80 = scmp.eq.s32.totalorder %s26, 7
      %p81 = scmp.ne.s32.totalorder %s76, %s78
      %p82 = scmp.eq.s32.totalorder %s26, 0
      %p83 = por %p81, %p82
      %p84 = scmp.ne.s32.totalorder %s76, %s78
      %p85 = scmp.eq.s32.totalorder %s31, 7
      %p86 = por %p84, %p85
      %p87 = scmp.ne.s32.totalorder %s78, %s79
      %p88 = scmp.eq.s32.totalorder %s31, 0
      %p89 = por %p87, %p88
      %p90 = scmp.ne.s32.totalorder %s78, %s79
      %p91 = scmp.eq.s32.totalorder %s32, 7
      %p92 = por %p90, %p91
      %p94 = scmp.ne.s32.totalorder %s79, %s93
      %p95 = scmp.eq.s32.totalorder %s32, 0
      %p96 = por %p94, %p95
      %s98 = sadd.s32 %s97, 1
      %p101 = scmp.eq.s32.totalorder %s26, 7
      %p102 = scmp.ne.s32.totalorder %s97, %s99
      %p103 = scmp.eq.s32.totalorder %s26, 0
      %p104 = por %p102, %p103
      %p105 = scmp.ne.s32.totalorder %s97, %s99
      %p106 = scmp.eq.s32.totalorder %s31, 7
      %p107 = por %p105, %p106
      %p108 = scmp.ne.s32.totalorder %s99, %s100
      %p109 = scmp.eq.s32.totalorder %s31, 0
      %p110 = por %p108, %p109
      %p111 = scmp.ne.s32.totalorder %s99, %s100
      %p112 = scmp.eq.s32.totalorder %s32, 7
      %p113 = por %p111, %p112
      %p115 = scmp.ne.s32.totalorder %s100, %s114
      %p116 = scmp.eq.s32.totalorder %s32, 0
      %p117 = por %p115, %p116
      %s119 = sadd.s32 %s118, 1
      %p122 = scmp.eq.s32.totalorder %s26, 7
      %p123 = scmp.ne.s32.totalorder %s118, %s120
      %p124 = scmp.eq.s32.totalorder %s26, 0
      %p125 = por %p123, %p124
      %p126 = scmp.ne.s32.totalorder %s118, %s120
      %p127 = scmp.eq.s32.totalorder %s31, 7
      %p128 = por %p126, %p127
      %p129 = scmp.ne.s32.totalorder %s120, %s121
      %p130 = scmp.eq.s32.totalorder %s31, 0
      %p131 = por %p129, %p130
      %p132 = scmp.ne.s32.totalorder %s120, %s121
      %p133 = scmp.eq.s32.totalorder %s32, 7
      %p134 = por %p132, %p133
      %p136 = scmp.ne.s32.totalorder %s121, %s135
      %p137 = scmp.eq.s32.totalorder %s32, 0
      %p138 = por %p136, %p137
      %s140 = sadd.s32 %s139, 1
      %p143 = scmp.eq.s32.totalorder %s26, 7
      %p144 = scmp.ne.s32.totalorder %s139, %s141
      %p145 = scmp.eq.s32.totalorder %s26, 0
      %p146 = por %p144, %p145
      %p147 = scmp.ne.s32.totalorder %s139, %s141
      %p148 = scmp.eq.s32.totalorder %s31, 7
      %p149 = por %p147, %p148
      %p150 = scmp.ne.s32.totalorder %s141, %s142
      %p151 = scmp.eq.s32.totalorder %s31, 0
      %p152 = por %p150, %p151
      %p153 = scmp.ne.s32.totalorder %s141, %s142
      %p154 = scmp.eq.s32.totalorder %s32, 7
      %p155 = por %p153, %p154
      %p157 = scmp.ne.s32.totalorder %s142, %s156
      %p158 = scmp.eq.s32.totalorder %s32, 0
      %p159 = por %p157, %p158
      %s161 = sadd.s32 %s160, 1
      %p164 = scmp.eq.s32.totalorder %s26, 7
      %p165 = scmp.ne.s32.totalorder %s160, %s162
      %p166 = scmp.eq.s32.totalorder %s26, 0
      %p167 = por %p165, %p166
      %p168 = scmp.ne.s32.totalorder %s160, %s162
      %p169 = scmp.eq.s32.totalorder %s31, 7
      %p170 = por %p168, %p169
      %p171 = scmp.ne.s32.totalorder %s162, %s163
      %p172 = scmp.eq.s32.totalorder %s31, 0
      %p173 = por %p171, %p172
      %p174 = scmp.ne.s32.totalorder %s162, %s163
      %p175 = scmp.eq.s32.totalorder %s32, 7
      %p176 = por %p174, %p175
      %p178 = scmp.ne.s32.totalorder %s163, %s177
      %p179 = scmp.eq.s32.totalorder %s32, 0
      %p180 = por %p178, %p179
      %s182 = sadd.s32 %s181, 1
      %p185 = scmp.eq.s32.totalorder %s26, 7
      %p186 = scmp.ne.s32.totalorder %s181, %s183
      %p187 = scmp.eq.s32.totalorder %s26, 0
      %p188 = por %p186, %p187
      %p189 = scmp.ne.s32.totalorder %s181, %s183
      %p190 = scmp.eq.s32.totalorder %s31, 7
      %p191 = por %p189, %p190
      %p192 = scmp.ne.s32.totalorder %s183, %s184
      %p193 = scmp.eq.s32.totalorder %s31, 0
      %p194 = por %p192, %p193
      %p195 = scmp.ne.s32.totalorder %s183, %s184
      %p196 = scmp.eq.s32.totalorder %s32, 7
      %p197 = por %p195, %p196
      %p199 = scmp.ne.s32.totalorder %s184, %s198
      %p200 = scmp.eq.s32.totalorder %s32, 0
      %p201 = por %p199, %p200
      %s203 = sadd.s32 %s202, 1
      %p206 = scmp.eq.s32.totalorder %s26, 7
      %p207 = scmp.ne.s32.totalorder %s202, %s204
      %p208 = scmp.eq.s32.totalorder %s26, 0
      %p209 = por %p207, %p208
      %p210 = scmp.ne.s32.totalorder %s202, %s204
      %p211 = scmp.eq.s32.totalorder %s31, 7
      %p212 = por %p210, %p211
      %p213 = scmp.ne.s32.totalorder %s204, %s205
      %p214 = scmp.eq.s32.totalorder %s31, 0
      %p215 = por %p213, %p214
      %p216 = scmp.ne.s32.totalorder %s204, %s205
      %p217 = scmp.eq.s32.totalorder %s32, 7
      %p218 = por %p216, %p217
      %p220 = scmp.ne.s32.totalorder %s205, %s219
      %p221 = scmp.eq.s32.totalorder %s32, 0
      %p222 = por %p220, %p221
      %s224 = sadd.s32 %s223, 1
      %p227 = scmp.eq.s32.totalorder %s26, 7
      %p228 = scmp.ne.s32.totalorder %s223, %s225
      %p229 = scmp.eq.s32.totalorder %s26, 0
      %p230 = por %p228, %p229
      %p231 = scmp.ne.s32.totalorder %s223, %s225
      %p232 = scmp.eq.s32.totalorder %s31, 7
      %p233 = por %p231, %p232
      %p234 = scmp.ne.s32.totalorder %s225, %s226
      %p235 = scmp.eq.s32.totalorder %s31, 0
      %p236 = por %p234, %p235
      %p237 = scmp.ne.s32.totalorder %s225, %s226
      %p238 = scmp.eq.s32.totalorder %s32, 7
      %p239 = por %p237, %p238
      %p241 = scmp.ne.s32.totalorder %s226, %s240
      %p242 = scmp.eq.s32.totalorder %s32, 0
      %p243 = por %p241, %p242
      %s245 = sadd.s32 %s244, 1
      %p248 = scmp.eq.s32.totalorder %s26, 7
      %p249 = scmp.ne.s32.totalorder %s244, %s246
      %p250 = scmp.eq.s32.totalorder %s26, 0
      %p251 = por %p249, %p250
      %p252 = scmp.ne.s32.totalorder %s244, %s246
      %p253 = scmp.eq.s32.totalorder %s31, 7
      %p254 = por %p252, %p253
      %p255 = scmp.ne.s32.totalorder %s246, %s247
      %p256 = scmp.eq.s32.totalorder %s31, 0
      %p257 = por %p255, %p256
      %p258 = scmp.ne.s32.totalorder %s246, %s247
      %p259 = scmp.eq.s32.totalorder %s32, 7
      %p260 = por %p258, %p259
      %p262 = scmp.ne.s32.totalorder %s247, %s261
      %p263 = scmp.eq.s32.totalorder %s32, 0
      %p264 = por %p262, %p263
      %s265 = ssub.s32 %s26, %s33
      %p266 = scmp.eq.s32.totalorder %s265, 0
      %s268 = sadd.s32 %s267, 1
      %s269 = scalar_select %p266, %s267, %s268
      %p272 = pneg %p266
      %p273 = scmp.eq.s32.totalorder %s26, 7
      %p274 = por %p272, %p273
      %p275 = scmp.ne.s32.totalorder %s267, %s270
      %p276 = scmp.eq.s32.totalorder %s26, 0
      %p277 = por %p275, %p276
      %p278 = scmp.ne.s32.totalorder %s267, %s270
      %p279 = scmp.eq.s32.totalorder %s31, 7
      %p280 = por %p278, %p279
      %p281 = scmp.ne.s32.totalorder %s270, %s271
      %p282 = scmp.eq.s32.totalorder %s31, 0
      %p283 = por %p281, %p282
      %p284 = scmp.ne.s32.totalorder %s270, %s271
      %p285 = scmp.eq.s32.totalorder %s32, 7
      %p286 = por %p284, %p285
      %p288 = scmp.ne.s32.totalorder %s271, %s287
      %p289 = scmp.eq.s32.totalorder %s32, 0
      %p290 = por %p288, %p289
      %s292 = sadd.s32 %s291, 1
      %p295 = scmp.eq.s32.totalorder %s26, 7
      %p296 = scmp.ne.s32.totalorder %s291, %s293
      %p297 = scmp.eq.s32.totalorder %s26, 0
      %p298 = por %p296, %p297
      %p299 = scmp.ne.s32.totalorder %s291, %s293
      %p300 = scmp.eq.s32.totalorder %s31, 7
      %p301 = por %p299, %p300
      %p302 = scmp.ne.s32.totalorder %s293, %s294
      %p303 = scmp.eq.s32.totalorder %s31, 0
      %p304 = por %p302, %p303
      %p305 = scmp.ne.s32.totalorder %s293, %s294
      %p306 = scmp.eq.s32.totalorder %s32, 7
      %p307 = por %p305, %p306
      %p309 = scmp.ne.s32.totalorder %s294, %s308
      %p310 = scmp.eq.s32.totalorder %s32, 0
      %p311 = por %p309, %p310
      %p312 = scmp.le.s32.totalorder 1, %s26
      %p313 = scmp.lt.s32.totalorder %s26, 9
      %p314 = pnand %p312, %p313
      %p315 = pneg %p314
      // Predicated region
      $region9: #{sr_labeler_forward.1} parent=5 // pred_check
        _
      $region10: #{sr_labeler_forward.1} parent=5 // pred_check_branch
        %317 = sbr.rel (%p314) target = $region12
      $region11: #{sr_labeler_forward.1} parent=5 // pred_region
        %s318 = ssub.s32 %s26, 1
        // Predicated region
        $region13: #{sr_labeler_forward.1} parent=11 // pred_check
          %p319 = pneg %p47
        $region14: #{sr_labeler_forward.1} parent=11 // pred_check_branch
          %321 = sbr.rel (%p319) target = $region16
        $region15: #{sr_labeler_forward.1} parent=11 // pred_region
          _
        $region16: #{sr_labeler_forward.1} parent=11 // pred_fallthru
          _
        // Predicated region
        $region17: #{sr_labeler_forward.1} parent=11 // pred_check
          %p322 = pneg %p68
        $region18: #{sr_labeler_forward.1} parent=11 // pred_check_branch
          %324 = sbr.rel (%p322) target = $region20
        $region19: #{sr_labeler_forward.1} parent=11 // pred_region
          _
        $region20: #{sr_labeler_forward.1} parent=11 // pred_fallthru
          _
        // Predicated region
        $region21: #{sr_labeler_forward.1} parent=11 // pred_check
          %p325 = pneg %p89
        $region22: #{sr_labeler_forward.1} parent=11 // pred_check_branch
          %327 = sbr.rel (%p325) target = $region24
        $region23: #{sr_labeler_forward.1} parent=11 // pred_region
          %s329 = ssub.s32 12288, 12288
          %330 = vsyncadd [#allocation5], %s329
          %s331 = sshll.u32 [#allocation4], 4
          %s332 = int_to_ptr.vmem [resolvable:$true] %s331
          %337 = dma.hbm_to_vmem [thread:$0]  %s2, 12288, %s332, [#allocation5], 256, 256, 16
        $region24: #{sr_labeler_forward.1} parent=11 // pred_fallthru
          _
        // Predicated region
        $region25: #{sr_labeler_forward.1} parent=11 // pred_check
          %p338 = pneg %p110
        $region26: #{sr_labeler_forward.1} parent=11 // pred_check_branch
          %340 = sbr.rel (%p338) target = $region28
        $region27: #{sr_labeler_forward.1} parent=11 // pred_region
          %s342 = ssub.s32 32, 32
          %343 = vsyncadd [#allocation7], %s342
          %s345 = sshll.u32 [#allocation6], 4
          %s346 = int_to_ptr.vmem [resolvable:$true] %s345
          %348 = dma.hbm_to_vmem [thread:$0]  %s3, 32, %s346, [#allocation7]
        $region28: #{sr_labeler_forward.1} parent=11 // pred_fallthru
          _
        // Predicated region
        $region29: #{sr_labeler_forward.1} parent=11 // pred_check
          %p349 = pneg %p131
        $region30: #{sr_labeler_forward.1} parent=11 // pred_check_branch
          %351 = sbr.rel (%p349) target = $region32
        $region31: #{sr_labeler_forward.1} parent=11 // pred_region
          %s353 = ssub.s32 2048, 2048
          %354 = vsyncadd [#allocation7], %s353
          %s355 = sshll.u32 [#allocation8], 4
          %s356 = int_to_ptr.vmem [resolvable:$true] %s355
          %361 = dma.hbm_to_vmem [thread:$0]  %s4, 2048, %s356, [#allocation7], 256, 256, 16
        $region32: #{sr_labeler_forward.1} parent=11 // pred_fallthru
          _
        // Predicated region
        $region33: #{sr_labeler_forward.1} parent=11 // pred_check
          %p362 = pneg %p152
        $region34: #{sr_labeler_forward.1} parent=11 // pred_check_branch
          %364 = sbr.rel (%p362) target = $region36
        $region35: #{sr_labeler_forward.1} parent=11 // pred_region
          %s366 = ssub.s32 32, 32
          %367 = vsyncadd [#allocation10], %s366
          %s369 = sshll.u32 [#allocation9], 4
          %s370 = int_to_ptr.vmem [resolvable:$true] %s369
          %372 = dma.hbm_to_vmem [thread:$0]  %s5, 32, %s370, [#allocation10]
        $region36: #{sr_labeler_forward.1} parent=11 // pred_fallthru
          _
        // Predicated region
        $region37: #{sr_labeler_forward.1} parent=11 // pred_check
          %p373 = pneg %p173
        $region38: #{sr_labeler_forward.1} parent=11 // pred_check_branch
          %375 = sbr.rel (%p373) target = $region40
        $region39: #{sr_labeler_forward.1} parent=11 // pred_region
          %s377 = ssub.s32 32, 32
          %378 = vsyncadd [#allocation10], %s377
          %s380 = sshll.u32 [#allocation11], 4
          %s381 = int_to_ptr.vmem [resolvable:$true] %s380
          %383 = dma.hbm_to_vmem [thread:$0]  %s6, 32, %s381, [#allocation10]
        $region40: #{sr_labeler_forward.1} parent=11 // pred_fallthru
          _
        // Predicated region
        $region41: #{sr_labeler_forward.1} parent=11 // pred_check
          %p384 = pneg %p194
        $region42: #{sr_labeler_forward.1} parent=11 // pred_check_branch
          %386 = sbr.rel (%p384) target = $region44
        $region43: #{sr_labeler_forward.1} parent=11 // pred_region
          %s388 = ssub.s32 3072, 3072
          %389 = vsyncadd [#allocation13], %s388
          %s390 = sshll.u32 [#allocation12], 4
          %s391 = int_to_ptr.vmem [resolvable:$true] %s390
          %396 = dma.hbm_to_vmem [thread:$0]  %s7, 3072, %s391, [#allocation13], 384, 384, 24
        $region44: #{sr_labeler_forward.1} parent=11 // pred_fallthru
          _
        // Predicated region
        $region45: #{sr_labeler_forward.1} parent=11 // pred_check
          %p397 = pneg %p215
        $region46: #{sr_labeler_forward.1} parent=11 // pred_check_branch
          %399 = sbr.rel (%p397) target = $region48
        $region47: #{sr_labeler_forward.1} parent=11 // pred_region
          %s401 = ssub.s32 48, 48
          %402 = vsyncadd [#allocation13], %s401
          %s404 = sshll.u32 [#allocation14], 4
          %s405 = int_to_ptr.vmem [resolvable:$true] %s404
          %407 = dma.hbm_to_vmem [thread:$0]  %s8, 48, %s405, [#allocation13]
        $region48: #{sr_labeler_forward.1} parent=11 // pred_fallthru
          _
        // Predicated region
        $region49: #{sr_labeler_forward.1} parent=11 // pred_check
          %p408 = pneg %p236
        $region50: #{sr_labeler_forward.1} parent=11 // pred_check_branch
          %410 = sbr.rel (%p408) target = $region52
        $region51: #{sr_labeler_forward.1} parent=11 // pred_region
          %s412 = ssub.s32 3072, 3072
          %413 = vsyncadd [#allocation16], %s412
          %s414 = sshll.u32 [#allocation15], 4
          %s415 = int_to_ptr.vmem [resolvable:$true] %s414
          %420 = dma.hbm_to_vmem [thread:$0]  %s9, 3072, %s415, [#allocation16], 384, 384, 24
        $region52: #{sr_labeler_forward.1} parent=11 // pred_fallthru
          _
        // Predicated region
        $region53: #{sr_labeler_forward.1} parent=11 // pred_check
          %p421 = pneg %p257
        $region54: #{sr_labeler_forward.1} parent=11 // pred_check_branch
          %423 = sbr.rel (%p421) target = $region56
        $region55: #{sr_labeler_forward.1} parent=11 // pred_region
          %s425 = ssub.s32 48, 48
          %426 = vsyncadd [#allocation16], %s425
          %s428 = sshll.u32 [#allocation17], 4
          %s429 = int_to_ptr.vmem [resolvable:$true] %s428
          %431 = dma.hbm_to_vmem [thread:$0]  %s10, 48, %s429, [#allocation16]
        $region56: #{sr_labeler_forward.1} parent=11 // pred_fallthru
          _
      $region12: #{sr_labeler_forward.1} parent=5 // pred_fallthru
        _
      %p432 = scmp.lt.s32.totalorder %s26, 8
      // Predicated region
      $region57: #{sr_labeler_forward.1} parent=5 // pred_check
        %p433 = pneg %p432
      $region58: #{sr_labeler_forward.1} parent=5 // pred_check_branch
        %435 = sbr.rel (%p433) target = $region60
      $region59: #{sr_labeler_forward.1} parent=5 // pred_region
        // Predicated region
        $region61: #{sr_labeler_forward.1} parent=59 // pred_check
          %p436 = pneg %p277
        $region62: #{sr_labeler_forward.1} parent=59 // pred_check_branch
          %438 = sbr.rel (%p436) target = $region64
        $region63: #{sr_labeler_forward.1} parent=59 // pred_region
          %s439 = sand.u32 %s267, 1
          %s440 = scalar_lea.sflag [#allocation19], %s439
          %s441 = sand.u32 %s267, 1
          %s442 = smul.addr %s441, 456
          %s443 = scalar_lea.vmem [#allocation18], %s442
          %s444 = smul.u32 3, %s26
          %s446 = ssub.s32 7296, 7296
          %447 = vsyncadd %s440, %s446
          %s448 = smul.addr %s444, 64
          %s449 = scalar_lea.hbm %s11, %s448
          %s450 = sshll.u32 %s443, 4
          %s451 = int_to_ptr.vmem [resolvable:$true] %s450
          %456 = dma.hbm_to_vmem [thread:$0]  %s449, 7296, %s451, %s440, 1536, 192, 12
        $region64: #{sr_labeler_forward.1} parent=59 // pred_fallthru
          _
      $region60: #{sr_labeler_forward.1} parent=5 // pred_fallthru
        _
      %p457 = scmp.le.s32.totalorder 1, %s26
      %p458 = scmp.lt.s32.totalorder %s26, 9
      %p459 = pnand %p457, %p458
      %p460 = pneg %p459
      // Predicated region
      $region65: #{sr_labeler_forward.1} parent=5 // pred_check
        _
      $region66: #{sr_labeler_forward.1} parent=5 // pred_check_branch
        %462 = sbr.rel (%p459) target = $region68
      $region67: #{sr_labeler_forward.1} parent=5 // pred_region
        %s463 = ssub.s32 %s26, 1
        // Predicated region
        $region69: #{sr_labeler_forward.1} parent=67 // pred_check
          %p464 = pneg %p89
        $region70: #{sr_labeler_forward.1} parent=67 // pred_check_branch
          %466 = sbr.rel (%p464) target = $region72
        $region71: #{sr_labeler_forward.1} parent=67 // pred_region
          %467 = dma.done [#allocation5], 12288
        $region72: #{sr_labeler_forward.1} parent=67 // pred_fallthru
          _
        // Predicated region
        $region73: #{sr_labeler_forward.1} parent=67 // pred_check
          %p468 = pneg %p110
        $region74: #{sr_labeler_forward.1} parent=67 // pred_check_branch
          %470 = sbr.rel (%p468) target = $region76
        $region75: #{sr_labeler_forward.1} parent=67 // pred_region
          %471 = dma.done [#allocation7], 32
        $region76: #{sr_labeler_forward.1} parent=67 // pred_fallthru
          _
        // Predicated region
        $region77: #{sr_labeler_forward.1} parent=67 // pred_check
          %p472 = pneg %p131
        $region78: #{sr_labeler_forward.1} parent=67 // pred_check_branch
          %474 = sbr.rel (%p472) target = $region80
        $region79: #{sr_labeler_forward.1} parent=67 // pred_region
          %475 = dma.done [#allocation7], 2048
        $region80: #{sr_labeler_forward.1} parent=67 // pred_fallthru
          _
        // Predicated region
        $region81: #{sr_labeler_forward.1} parent=67 // pred_check
          %p476 = pneg %p152
        $region82: #{sr_labeler_forward.1} parent=67 // pred_check_branch
          %478 = sbr.rel (%p476) target = $region84
        $region83: #{sr_labeler_forward.1} parent=67 // pred_region
          %479 = dma.done [#allocation10], 32
        $region84: #{sr_labeler_forward.1} parent=67 // pred_fallthru
          _
        // Predicated region
        $region85: #{sr_labeler_forward.1} parent=67 // pred_check
          %p480 = pneg %p173
        $region86: #{sr_labeler_forward.1} parent=67 // pred_check_branch
          %482 = sbr.rel (%p480) target = $region88
        $region87: #{sr_labeler_forward.1} parent=67 // pred_region
          %483 = dma.done [#allocation10], 32
        $region88: #{sr_labeler_forward.1} parent=67 // pred_fallthru
          _
        // Predicated region
        $region89: #{sr_labeler_forward.1} parent=67 // pred_check
          %p484 = pneg %p194
        $region90: #{sr_labeler_forward.1} parent=67 // pred_check_branch
          %486 = sbr.rel (%p484) target = $region92
        $region91: #{sr_labeler_forward.1} parent=67 // pred_region
          %487 = dma.done [#allocation13], 3072
        $region92: #{sr_labeler_forward.1} parent=67 // pred_fallthru
          _
        // Predicated region
        $region93: #{sr_labeler_forward.1} parent=67 // pred_check
          %p488 = pneg %p215
        $region94: #{sr_labeler_forward.1} parent=67 // pred_check_branch
          %490 = sbr.rel (%p488) target = $region96
        $region95: #{sr_labeler_forward.1} parent=67 // pred_region
          %491 = dma.done [#allocation13], 48
        $region96: #{sr_labeler_forward.1} parent=67 // pred_fallthru
          _
        // Predicated region
        $region97: #{sr_labeler_forward.1} parent=67 // pred_check
          %p492 = pneg %p236
        $region98: #{sr_labeler_forward.1} parent=67 // pred_check_branch
          %494 = sbr.rel (%p492) target = $region100
        $region99: #{sr_labeler_forward.1} parent=67 // pred_region
          %495 = dma.done [#allocation16], 3072
        $region100: #{sr_labeler_forward.1} parent=67 // pred_fallthru
          _
        // Predicated region
        $region101: #{sr_labeler_forward.1} parent=67 // pred_check
          %p496 = pneg %p257
        $region102: #{sr_labeler_forward.1} parent=67 // pred_check_branch
          %498 = sbr.rel (%p496) target = $region104
        $region103: #{sr_labeler_forward.1} parent=67 // pred_region
          %499 = dma.done [#allocation16], 48
        $region104: #{sr_labeler_forward.1} parent=67 // pred_fallthru
          _
        %s500 = sand.u32 %s270, 1
        %s501 = scalar_lea.sflag [#allocation19], %s500
        %s502 = sand.u32 %s270, 1
        %s503 = smul.addr %s502, 456
        %s504 = scalar_lea.vmem [#allocation18], %s503
        // Predicated region
        $region105: #{sr_labeler_forward.1} parent=67 // pred_check
          %p505 = pneg %p283
        $region106: #{sr_labeler_forward.1} parent=67 // pred_check_branch
          %507 = sbr.rel (%p505) target = $region108
        $region107: #{sr_labeler_forward.1} parent=67 // pred_region
          %508 = dma.done %s501, 7296
        $region108: #{sr_labeler_forward.1} parent=67 // pred_fallthru
          _
        %p509 = pneg %p47
        %p510 = pneg %p44
        %p511 = pneg %p68
        %p512 = pneg %p65
        %p513 = pneg %p89
        %p514 = pneg %p86
        %p515 = pneg %p110
        %p516 = pneg %p107
        %p517 = pneg %p131
        %p518 = pneg %p128
        %p519 = pneg %p152
        %p520 = pneg %p149
        %p521 = pneg %p173
        %p522 = pneg %p170
        %p523 = pneg %p194
        %p524 = pneg %p191
        %p525 = pneg %p215
        %p526 = pneg %p212
        %p527 = pneg %p236
        %p528 = pneg %p233
        %p529 = pneg %p257
        %p530 = pneg %p254
        %s531 = sand.u32 %s270, 1
        %s532 = scalar_lea.sflag [#allocation19], %s531
        %s533 = sand.u32 %s270, 1
        %s534 = smul.addr %s533, 456
        %s535 = scalar_lea.vmem [#allocation18], %s534
        %p536 = pneg %p283
        %p537 = pneg %p280
        %p538 = pneg %p304
        %p539 = pneg %p301
        %s540 = smul.u32 3, %s31
        %p542 = scmp.eq.s32.totalorder %s31, 0
        // Predicated region
        $region109: #{sr_labeler_forward.1} parent=67 // pred_check
          %p543 = pneg %p542
        $region110: #{sr_labeler_forward.1} parent=67 // pred_check_branch
          %545 = sbr.rel (%p543) target = $region112
        $region111: #{sr_labeler_forward.1} parent=67 // pred_region
          %v546 = vld [vmem:[%s0] sm:$0xff]
          %v547 = vld [vmem:[%s0 + $0x8] sm:$0xff]
          %v548 = vld [vmem:[%s0 + $0x10] sm:$0xff]
          %v549 = vld [vmem:[%s0 + $0x18] sm:$0xff]
          %v550 = vld [vmem:[%s0 + $0x20] sm:$0xff]
          %v551 = vld [vmem:[%s0 + $0x28] sm:$0xff]
          %v552 = vld [vmem:[#allocation4] sm:$0xff]
          %v553 = vld [vmem:[#allocation4 + $0x8] sm:$0xff]
          %v554 = vld [vmem:[#allocation4 + $0x10] sm:$0xff]
          %v555 = vld [vmem:[#allocation4 + $0x18] sm:$0xff]
          %v556 = vld [vmem:[#allocation4 + $0x20] sm:$0xff]
          %v557 = vld [vmem:[#allocation4 + $0x28] sm:$0xff]
          %v558 = vld [vmem:[#allocation4 + $0x30] sm:$0xff]
          %v559 = vld [vmem:[#allocation4 + $0x38] sm:$0xff]
          %v560 = vld [vmem:[#allocation4 + $0x40] sm:$0xff]
          %v561 = vld [vmem:[#allocation4 + $0x48] sm:$0xff]
          %v562 = vld [vmem:[#allocation4 + $0x50] sm:$0xff]
          %v563 = vld [vmem:[#allocation4 + $0x58] sm:$0xff]
          %v564 = vld [vmem:[#allocation4 + $0x60] sm:$0xff]
          %v565 = vld [vmem:[#allocation4 + $0x68] sm:$0xff]
          %v566 = vld [vmem:[#allocation4 + $0x70] sm:$0xff]
          %v567 = vld [vmem:[#allocation4 + $0x78] sm:$0xff]
          %v568 = vld [vmem:[#allocation4 + $0x80] sm:$0xff]
          %v569 = vld [vmem:[#allocation4 + $0x88] sm:$0xff]
          %v570 = vld [vmem:[#allocation4 + $0x90] sm:$0xff]
          %v571 = vld [vmem:[#allocation4 + $0x98] sm:$0xff]
          %v572 = vld [vmem:[#allocation4 + $0xa0] sm:$0xff]
          %v573 = vld [vmem:[#allocation4 + $0xa8] sm:$0xff]
          %v574 = vld [vmem:[#allocation4 + $0xb0] sm:$0xff]
          %v575 = vld [vmem:[#allocation4 + $0xb8] sm:$0xff]
          %v576 = vld [vmem:[#allocation4 + $0xc0] sm:$0xff]
          %v577 = vld [vmem:[#allocation4 + $0xc8] sm:$0xff]
          %v578 = vld [vmem:[#allocation4 + $0xd0] sm:$0xff]
          %v579 = vld [vmem:[#allocation4 + $0xd8] sm:$0xff]
          %v580 = vld [vmem:[#allocation4 + $0xe0] sm:$0xff]
          %v581 = vld [vmem:[#allocation4 + $0xe8] sm:$0xff]
          %v582 = vld [vmem:[#allocation4 + $0xf0] sm:$0xff]
          %v583 = vld [vmem:[#allocation4 + $0xf8] sm:$0xff]
          %v584 = vld [vmem:[#allocation4 + $0x100] sm:$0xff]
          %v585 = vld [vmem:[#allocation4 + $0x108] sm:$0xff]
          %v586 = vld [vmem:[#allocation4 + $0x110] sm:$0xff]
          %v587 = vld [vmem:[#allocation4 + $0x118] sm:$0xff]
          %v588 = vld [vmem:[#allocation4 + $0x120] sm:$0xff]
          %v589 = vld [vmem:[#allocation4 + $0x128] sm:$0xff]
          %v590 = vld [vmem:[#allocation4 + $0x130] sm:$0xff]
          %v591 = vld [vmem:[#allocation4 + $0x138] sm:$0xff]
          %v592 = vld [vmem:[#allocation4 + $0x140] sm:$0xff]
          %v593 = vld [vmem:[#allocation4 + $0x148] sm:$0xff]
          %v594 = vld [vmem:[#allocation4 + $0x150] sm:$0xff]
          %v595 = vld [vmem:[#allocation4 + $0x158] sm:$0xff]
          %v596 = vld [vmem:[#allocation4 + $0x160] sm:$0xff]
          %v597 = vld [vmem:[#allocation4 + $0x168] sm:$0xff]
          %v598 = vld [vmem:[#allocation4 + $0x170] sm:$0xff]
          %v599 = vld [vmem:[#allocation4 + $0x178] sm:$0xff]
          %v600 = vld [vmem:[#allocation4 + $0x180] sm:$0xff]
          %v601 = vld [vmem:[#allocation4 + $0x188] sm:$0xff]
          %v602 = vld [vmem:[#allocation4 + $0x190] sm:$0xff]
          %v603 = vld [vmem:[#allocation4 + $0x198] sm:$0xff]
          %v604 = vld [vmem:[#allocation4 + $0x1a0] sm:$0xff]
          %v605 = vld [vmem:[#allocation4 + $0x1a8] sm:$0xff]
          %v606 = vld [vmem:[#allocation4 + $0x1b0] sm:$0xff]
          %v607 = vld [vmem:[#allocation4 + $0x1b8] sm:$0xff]
          %v608 = vld [vmem:[#allocation4 + $0x1c0] sm:$0xff]
          %v609 = vld [vmem:[#allocation4 + $0x1c8] sm:$0xff]
          %v610 = vld [vmem:[#allocation4 + $0x1d0] sm:$0xff]
          %v611 = vld [vmem:[#allocation4 + $0x1d8] sm:$0xff]
          %v612 = vld [vmem:[#allocation4 + $0x1e0] sm:$0xff]
          %v613 = vld [vmem:[#allocation4 + $0x1e8] sm:$0xff]
          %v614 = vld [vmem:[#allocation4 + $0x1f0] sm:$0xff]
          %v615 = vld [vmem:[#allocation4 + $0x1f8] sm:$0xff]
          %v616 = vld [vmem:[#allocation4 + $0x200] sm:$0xff]
          %v617 = vld [vmem:[#allocation4 + $0x208] sm:$0xff]
          %v618 = vld [vmem:[#allocation4 + $0x210] sm:$0xff]
          %v619 = vld [vmem:[#allocation4 + $0x218] sm:$0xff]
          %v620 = vld [vmem:[#allocation4 + $0x220] sm:$0xff]
          %v621 = vld [vmem:[#allocation4 + $0x228] sm:$0xff]
          %v622 = vld [vmem:[#allocation4 + $0x230] sm:$0xff]
          %v623 = vld [vmem:[#allocation4 + $0x238] sm:$0xff]
          %v624 = vld [vmem:[#allocation4 + $0x240] sm:$0xff]
          %v625 = vld [vmem:[#allocation4 + $0x248] sm:$0xff]
          %v626 = vld [vmem:[#allocation4 + $0x250] sm:$0xff]
          %v627 = vld [vmem:[#allocation4 + $0x258] sm:$0xff]
          %v628 = vld [vmem:[#allocation4 + $0x260] sm:$0xff]
          %v629 = vld [vmem:[#allocation4 + $0x268] sm:$0xff]
          %v630 = vld [vmem:[#allocation4 + $0x270] sm:$0xff]
          %v631 = vld [vmem:[#allocation4 + $0x278] sm:$0xff]
          %v632 = vld [vmem:[#allocation4 + $0x280] sm:$0xff]
          %v633 = vld [vmem:[#allocation4 + $0x288] sm:$0xff]
          %v634 = vld [vmem:[#allocation4 + $0x290] sm:$0xff]
          %v635 = vld [vmem:[#allocation4 + $0x298] sm:$0xff]
          %v636 = vld [vmem:[#allocation4 + $0x2a0] sm:$0xff]
          %v637 = vld [vmem:[#allocation4 + $0x2a8] sm:$0xff]
          %v638 = vld [vmem:[#allocation4 + $0x2b0] sm:$0xff]
          %v639 = vld [vmem:[#allocation4 + $0x2b8] sm:$0xff]
          %v640 = vld [vmem:[#allocation4 + $0x2c0] sm:$0xff]
          %v641 = vld [vmem:[#allocation4 + $0x2c8] sm:$0xff]
          %v642 = vld [vmem:[#allocation4 + $0x2d0] sm:$0xff]
          %v643 = vld [vmem:[#allocation4 + $0x2d8] sm:$0xff]
          %v644 = vld [vmem:[#allocation4 + $0x2e0] sm:$0xff]
          %v645 = vld [vmem:[#allocation4 + $0x2e8] sm:$0xff]
          %v646 = vld [vmem:[#allocation4 + $0x2f0] sm:$0xff]
          %v647 = vld [vmem:[#allocation4 + $0x2f8] sm:$0xff]
          %v648 = vld [vmem:[#allocation6] sm:$0x3]
          %v650 = vlaneseq
          %v651 = vshrl.u32 %v650, 7
          %v652 = vsub.s32 0, %v651
          %v653 = vrot.slane %v648, %v652
          %v654 = vlaneseq
          %v655 = vshrl.u32 %v654, 7
          %v656 = vsub.s32 1, %v655
          %v657 = vrot.slane %v648, %v656
          %660 = vmatprep.subr.mxu0 %v583
          %661 = vmatpush1.msra.mxu0 %v582
          %662 = vmatprep.subr.mxu0 %v581
          %663 = vmatpush1.msra.mxu0 %v580
          %664 = vmatprep.subr.mxu0 %v579
          %665 = vmatpush1.msra.mxu0 %v578
          %666 = vmatprep.subr.mxu0 %v577
          %667 = vmatpush1.msra.mxu0 %v576
          %668 = vmatprep.subr.mxu0 %v575
          %669 = vmatpush1.msra.mxu0 %v574
          %670 = vmatprep.subr.mxu0 %v573
          %671 = vmatpush1.msra.mxu0 %v572
          %672 = vmatprep.subr.mxu0 %v571
          %673 = vmatpush1.msra.mxu0 %v570
          %674 = vmatprep.subr.mxu0 %v569
          %675 = vmatpush1.msra.mxu0 %v568
          %676 = vmatprep.subr.mxu0 %v567
          %677 = vmatpush1.msra.mxu0 %v566
          %678 = vmatprep.subr.mxu0 %v565
          %679 = vmatpush1.msra.mxu0 %v564
          %680 = vmatprep.subr.mxu0 %v563
          %681 = vmatpush1.msra.mxu0 %v562
          %682 = vmatprep.subr.mxu0 %v561
          %683 = vmatpush1.msra.mxu0 %v560
          %684 = vmatprep.subr.mxu0 %v559
          %685 = vmatpush1.msra.mxu0 %v558
          %686 = vmatprep.subr.mxu0 %v557
          %687 = vmatpush1.msra.mxu0 %v556
          %688 = vmatprep.subr.mxu0 %v555
          %689 = vmatpush1.msra.mxu0 %v554
          %690 = vmatprep.subr.mxu0 %v553
          %691 = vmatpush1.msra.mxu0 %v552
          %692 = vmatprep.subr.mxu0 %v615
          %693 = vmatpush2.msra.mxu0 %v614
          %694 = vmatprep.subr.mxu0 %v613
          %695 = vmatpush2.msra.mxu0 %v612
          %696 = vmatprep.subr.mxu0 %v611
          %697 = vmatpush2.msra.mxu0 %v610
          %698 = vmatprep.subr.mxu0 %v609
          %699 = vmatpush2.msra.mxu0 %v608
          %700 = vmatprep.subr.mxu0 %v607
          %701 = vmatpush2.msra.mxu0 %v606
          %702 = vmatprep.subr.mxu0 %v605
          %703 = vmatpush2.msra.mxu0 %v604
          %704 = vmatprep.subr.mxu0 %v603
          %705 = vmatpush2.msra.mxu0 %v602
          %706 = vmatprep.subr.mxu0 %v601
          %707 = vmatpush2.msra.mxu0 %v600
          %708 = vmatprep.subr.mxu0 %v599
          %709 = vmatpush2.msra.mxu0 %v598
          %710 = vmatprep.subr.mxu0 %v597
          %711 = vmatpush2.msra.mxu0 %v596
          %712 = vmatprep.subr.mxu0 %v595
          %713 = vmatpush2.msra.mxu0 %v594
          %714 = vmatprep.subr.mxu0 %v593
          %715 = vmatpush2.msra.mxu0 %v592
          %716 = vmatprep.subr.mxu0 %v591
          %717 = vmatpush2.msra.mxu0 %v590
          %718 = vmatprep.subr.mxu0 %v589
          %719 = vmatpush2.msra.mxu0 %v588
          %720 = vmatprep.subr.mxu0 %v587
          %721 = vmatpush2.msra.mxu0 %v586
          %722 = vmatprep.subr.mxu0 %v585
          %723 = vmatpush2.msra.mxu0 %v584
          %724 = vmatprep.mubr.f32.mxu0 %v547
          %725 = vmatmul.mubr.f32.gmra.mxu0 %v546
          %v726 = vpop.f32.mrf.mxu0
          %v727 = vadd.f32 %v653, %v726
          %v728 = vpop.f32.mrf.mxu0
          %v729 = vadd.f32 %v657, %v728
          %730 = vmatprep.mubr.f32.mxu0 %v550
          %731 = vmatmul.mubr.f32.gmra.mxu0 %v549
          %v732 = vpop.f32.mrf.mxu0
          %v733 = vadd.f32 %v653, %v732
          %v734 = vpop.f32.mrf.mxu0
          %v735 = vadd.f32 %v657, %v734
          %736 = vdwg.mxu0
          %737 = vmatprep.subr.mxu0 %v647
          %738 = vmatpush1.msra.mxu0 %v646
          %739 = vmatprep.subr.mxu0 %v645
          %740 = vmatpush1.msra.mxu0 %v644
          %741 = vmatprep.subr.mxu0 %v643
          %742 = vmatpush1.msra.mxu0 %v642
          %743 = vmatprep.subr.mxu0 %v641
          %744 = vmatpush1.msra.mxu0 %v640
          %745 = vmatprep.subr.mxu0 %v639
          %746 = vmatpush1.msra.mxu0 %v638
          %747 = vmatprep.subr.mxu0 %v637
          %748 = vmatpush1.msra.mxu0 %v636
          %749 = vmatprep.subr.mxu0 %v635
          %750 = vmatpush1.msra.mxu0 %v634
          %751 = vmatprep.subr.mxu0 %v633
          %752 = vmatpush1.msra.mxu0 %v632
          %753 = vmatprep.subr.mxu0 %v631
          %754 = vmatpush1.msra.mxu0 %v630
          %755 = vmatprep.subr.mxu0 %v629
          %756 = vmatpush1.msra.mxu0 %v628
          %757 = vmatprep.subr.mxu0 %v627
          %758 = vmatpush1.msra.mxu0 %v626
          %759 = vmatprep.subr.mxu0 %v625
          %760 = vmatpush1.msra.mxu0 %v624
          %761 = vmatprep.subr.mxu0 %v623
          %762 = vmatpush1.msra.mxu0 %v622
          %763 = vmatprep.subr.mxu0 %v621
          %764 = vmatpush1.msra.mxu0 %v620
          %765 = vmatprep.subr.mxu0 %v619
          %766 = vmatpush1.msra.mxu0 %v618
          %767 = vmatprep.subr.mxu0 %v617
          %768 = vmatpush1.msra.mxu0 %v616
          %769 = vmatprep.subr.mxu0 0.0
          %770 = vmatpush2.msra.mxu0 0.0
          %771 = vmatprep.subr.mxu0 0.0
          %772 = vmatpush2.msra.mxu0 0.0
          %773 = vmatprep.subr.mxu0 0.0
          %774 = vmatpush2.msra.mxu0 0.0
          %775 = vmatprep.subr.mxu0 0.0
          %776 = vmatpush2.msra.mxu0 0.0
          %777 = vmatprep.subr.mxu0 0.0
          %778 = vmatpush2.msra.mxu0 0.0
          %779 = vmatprep.subr.mxu0 0.0
          %780 = vmatpush2.msra.mxu0 0.0
          %781 = vmatprep.subr.mxu0 0.0
          %782 = vmatpush2.msra.mxu0 0.0
          %783 = vmatprep.subr.mxu0 0.0
          %784 = vmatpush2.msra.mxu0 0.0
          %785 = vmatprep.subr.mxu0 0.0
          %786 = vmatpush2.msra.mxu0 0.0
          %787 = vmatprep.subr.mxu0 0.0
          %788 = vmatpush2.msra.mxu0 0.0
          %789 = vmatprep.subr.mxu0 0.0
          %790 = vmatpush2.msra.mxu0 0.0
          %791 = vmatprep.subr.mxu0 0.0
          %792 = vmatpush2.msra.mxu0 0.0
          %793 = vmatprep.subr.mxu0 0.0
          %794 = vmatpush2.msra.mxu0 0.0
          %795 = vmatprep.subr.mxu0 0.0
          %796 = vmatpush2.msra.mxu0 0.0
          %797 = vmatprep.subr.mxu0 0.0
          %798 = vmatpush2.msra.mxu0 0.0
          %799 = vmatprep.subr.mxu0 0.0
          %800 = vmatpush2.msra.mxu0 0.0
          %801 = vmatprep.mubr.f32.mxu0 0.0
          %802 = vmatmul.mubr.f32.gmra.mxu0 %v548
          %v803 = vpop.f32.mrf.mxu0
          %v804 = vadd.f32 %v727, %v803
          %v805 = vpop.f32.mrf.mxu0
          %v806 = vadd.f32 %v729, %v805
          %807 = vmatprep.mubr.f32.mxu0 0.0
          %808 = vmatmul.mubr.f32.gmra.mxu0 %v551
          %v809 = vpop.f32.mrf.mxu0
          %v810 = vadd.f32 %v733, %v809
          %v811 = vpop.f32.mrf.mxu0
          %v812 = vadd.f32 %v735, %v811
          %813 = vdwg.mxu0
          %v814 = vld [vmem:[#allocation8] sm:$0xff]
          %v815 = vld [vmem:[#allocation8 + $0x8] sm:$0xff]
          %v816 = vld [vmem:[#allocation8 + $0x10] sm:$0xff]
          %v817 = vld [vmem:[#allocation8 + $0x18] sm:$0xff]
          %v818 = vld [vmem:[#allocation8 + $0x20] sm:$0xff]
          %v819 = vld [vmem:[#allocation8 + $0x28] sm:$0xff]
          %v820 = vld [vmem:[#allocation8 + $0x30] sm:$0xff]
          %v821 = vld [vmem:[#allocation8 + $0x38] sm:$0xff]
          %v822 = vld [vmem:[#allocation8 + $0x40] sm:$0xff]
          %v823 = vld [vmem:[#allocation8 + $0x48] sm:$0xff]
          %v824 = vld [vmem:[#allocation8 + $0x50] sm:$0xff]
          %v825 = vld [vmem:[#allocation8 + $0x58] sm:$0xff]
          %v826 = vld [vmem:[#allocation8 + $0x60] sm:$0xff]
          %v827 = vld [vmem:[#allocation8 + $0x68] sm:$0xff]
          %v828 = vld [vmem:[#allocation8 + $0x70] sm:$0xff]
          %v829 = vld [vmem:[#allocation8 + $0x78] sm:$0xff]
          %v830 = vld [vmem:[#allocation9] sm:$0x3]
          %v831 = vld [vmem:[#allocation11] sm:$0x3]
          %vm832 = vcmask 523264
          %v834 = vsel %vm832, %v830, 0
          %836 = vmatprep.subr.mxu0 0.0
          %837 = vmatpush1.msra.mxu0 0.0
          %838 = vmatprep.subr.mxu0 0.0
          %839 = vmatpush1.msra.mxu0 0.0
          %840 = vmatprep.subr.mxu0 0.0
          %841 = vmatpush1.msra.mxu0 0.0
          %842 = vmatprep.subr.mxu0 0.0
          %843 = vmatpush1.msra.mxu0 0.0
          %844 = vmatprep.subr.mxu0 0.0
          %845 = vmatpush1.msra.mxu0 0.0
          %846 = vmatprep.subr.mxu0 0.0
          %847 = vmatpush1.msra.mxu0 0.0
          %848 = vmatprep.subr.mxu0 0.0
          %849 = vmatpush1.msra.mxu0 0.0
          %850 = vmatprep.subr.mxu0 0.0
          %851 = vmatpush1.msra.mxu0 0.0
          %852 = vmatprep.subr.mxu0 %v829
          %853 = vmatpush1.msra.mxu0 %v828
          %854 = vmatprep.subr.mxu0 %v827
          %855 = vmatpush1.msra.mxu0 %v826
          %856 = vmatprep.subr.mxu0 %v825
          %857 = vmatpush1.msra.mxu0 %v824
          %858 = vmatprep.subr.mxu0 %v823
          %859 = vmatpush1.msra.mxu0 %v822
          %860 = vmatprep.subr.mxu0 %v821
          %861 = vmatpush1.msra.mxu0 %v820
          %862 = vmatprep.subr.mxu0 %v819
          %863 = vmatpush1.msra.mxu0 %v818
          %864 = vmatprep.subr.mxu0 %v817
          %865 = vmatpush1.msra.mxu0 %v816
          %866 = vmatprep.subr.mxu0 %v815
          %867 = vmatpush1.msra.mxu0 %v814
          %868 = vmatprep.subr.mxu0 0.0
          %869 = vmatpush2.msra.mxu0 0.0
          %870 = vmatprep.subr.mxu0 0.0
          %871 = vmatpush2.msra.mxu0 0.0
          %872 = vmatprep.subr.mxu0 0.0
          %873 = vmatpush2.msra.mxu0 0.0
          %874 = vmatprep.subr.mxu0 0.0
          %875 = vmatpush2.msra.mxu0 0.0
          %876 = vmatprep.subr.mxu0 0.0
          %877 = vmatpush2.msra.mxu0 0.0
          %878 = vmatprep.subr.mxu0 0.0
          %879 = vmatpush2.msra.mxu0 0.0
          %880 = vmatprep.subr.mxu0 0.0
          %881 = vmatpush2.msra.mxu0 0.0
          %882 = vmatprep.subr.mxu0 0.0
          %883 = vmatpush2.msra.mxu0 0.0
          %884 = vmatprep.subr.mxu0 0.0
          %885 = vmatpush2.msra.mxu0 0.0
          %886 = vmatprep.subr.mxu0 0.0
          %887 = vmatpush2.msra.mxu0 0.0
          %888 = vmatprep.subr.mxu0 0.0
          %889 = vmatpush2.msra.mxu0 0.0
          %890 = vmatprep.subr.mxu0 0.0
          %891 = vmatpush2.msra.mxu0 0.0
          %892 = vmatprep.subr.mxu0 0.0
          %893 = vmatpush2.msra.mxu0 0.0
          %894 = vmatprep.subr.mxu0 0.0
          %895 = vmatpush2.msra.mxu0 0.0
          %896 = vmatprep.subr.mxu0 0.0
          %897 = vmatpush2.msra.mxu0 0.0
          %898 = vmatprep.subr.mxu0 0.0
          %899 = vmatpush2.msra.mxu0 0.0
          %900 = vmatprep.mubr.f32.mxu0 0.0
          %901 = vmatmul.mubr.f32.gmra.mxu0 %v834
          %v902 = vpop.f32.mrf.mxu0
          %v903 = vadd.f32 0.0, %v902
          %v904 = vpop.f32.mrf.mxu0
          %v905 = vadd.f32 0.0, %v904
          %906 = vdwg.mxu0
          %v907 = vadd.f32 %v903, %v804
          %v909 = vrot.slane %v812, 6
          %v911 = vadd.f32 %v905, %v909
          %v912 = vxor.u32 %v907, 2147483648
          %v913 = vmul.f32 %v912, 1.442695
          %v914 = vpow.pop %v913
          %v915 = vadd.f32 %v914, 1.0
          %v916 = vrcp.pop %v915
          %v917 = vmul.f32 1.0, %v916
          %v918 = vxor.u32 %v911, 2147483648
          %v919 = vmul.f32 %v918, 1.442695
          %v920 = vpow.pop %v919
          %v921 = vadd.f32 %v920, 1.0
          %v922 = vrcp.pop %v921
          %v923 = vmul.f32 1.0, %v922
          %v924 = vtanh.pop %v907
          %v925 = vtanh.pop %v911
          %927 = vrot.lane.b32.xlu0 %v831, 32
          %v928 = vpop.permute.xlu0 %927
          %v930 = vmul.f32 %v917, %v928
          %932 = vrot.lane.b32.xlu0 %v924, 32
          %v933 = vpop.permute.xlu0 %932
          %v935 = vmul.f32 %v917, %v933
          %937 = vrot.lane.b32.xlu0 %v935, 32
          %v938 = vpop.permute.xlu0 %937
          %v940 = vadd.f32 %v930, %v938
          %v941 = vmul.f32 %v923, %v831
          %943 = vrot.lane.b32.xlu0 %v925, 32
          %v944 = vpop.permute.xlu0 %943
          %v946 = vmul.f32 %v923, %v944
          %948 = vrot.lane.b32.xlu0 %v946, 32
          %v949 = vpop.permute.xlu0 %948
          %v951 = vadd.f32 %v941, %v949
          %v952 = vtanh.pop %v940
          %954 = vrot.lane.b32.xlu0 %v952, 32
          %v955 = vpop.permute.xlu0 %954
          %v957 = vmul.f32 %v917, %v955
          %v958 = vtanh.pop %v951
          %960 = vrot.lane.b32.xlu0 %v958, 32
          %v961 = vpop.permute.xlu0 %960
          %v963 = vmul.f32 %v923, %v961
          %965 = vrot.lane.b32.xlu0 %v957, 64
          %v966 = vpop.permute.xlu0 %965
          %969 = vrot.lane.b32.xlu0 %v963, 96
          %v970 = vpop.permute.xlu0 %969
          %vm972 = vcmask 261120
          %v973 = vsel %vm972, %v966, %v970
          %975 = vrot.lane.b32.xlu0 %v940, 96
          %v976 = vpop.permute.xlu0 %975
          %v978 = vsel %vm972, %v976, %v951
          %v980 = vsel %vm832, %v973, 0
          %982 = vmatprep.subr.mxu0 0.0
          %983 = vmatpush1.msra.mxu0 0.0
          %984 = vmatprep.subr.mxu0 0.0
          %985 = vmatpush1.msra.mxu0 0.0
          %986 = vmatprep.subr.mxu0 0.0
          %987 = vmatpush1.msra.mxu0 0.0
          %988 = vmatprep.subr.mxu0 0.0
          %989 = vmatpush1.msra.mxu0 0.0
          %990 = vmatprep.subr.mxu0 0.0
          %991 = vmatpush1.msra.mxu0 0.0
          %992 = vmatprep.subr.mxu0 0.0
          %993 = vmatpush1.msra.mxu0 0.0
          %994 = vmatprep.subr.mxu0 0.0
          %995 = vmatpush1.msra.mxu0 0.0
          %996 = vmatprep.subr.mxu0 0.0
          %997 = vmatpush1.msra.mxu0 0.0
          %998 = vmatprep.subr.mxu0 %v829
          %999 = vmatpush1.msra.mxu0 %v828
          %1000 = vmatprep.subr.mxu0 %v827
          %1001 = vmatpush1.msra.mxu0 %v826
          %1002 = vmatprep.subr.mxu0 %v825
          %1003 = vmatpush1.msra.mxu0 %v824
          %1004 = vmatprep.subr.mxu0 %v823
          %1005 = vmatpush1.msra.mxu0 %v822
          %1006 = vmatprep.subr.mxu0 %v821
          %1007 = vmatpush1.msra.mxu0 %v820
          %1008 = vmatprep.subr.mxu0 %v819
          %1009 = vmatpush1.msra.mxu0 %v818
          %1010 = vmatprep.subr.mxu0 %v817
          %1011 = vmatpush1.msra.mxu0 %v816
          %1012 = vmatprep.subr.mxu0 %v815
          %1013 = vmatpush1.msra.mxu0 %v814
          %1014 = vmatprep.subr.mxu0 0.0
          %1015 = vmatpush2.msra.mxu0 0.0
          %1016 = vmatprep.subr.mxu0 0.0
          %1017 = vmatpush2.msra.mxu0 0.0
          %1018 = vmatprep.subr.mxu0 0.0
          %1019 = vmatpush2.msra.mxu0 0.0
          %1020 = vmatprep.subr.mxu0 0.0
          %1021 = vmatpush2.msra.mxu0 0.0
          %1022 = vmatprep.subr.mxu0 0.0
          %1023 = vmatpush2.msra.mxu0 0.0
          %1024 = vmatprep.subr.mxu0 0.0
          %1025 = vmatpush2.msra.mxu0 0.0
          %1026 = vmatprep.subr.mxu0 0.0
          %1027 = vmatpush2.msra.mxu0 0.0
          %1028 = vmatprep.subr.mxu0 0.0
          %1029 = vmatpush2.msra.mxu0 0.0
          %1030 = vmatprep.subr.mxu0 0.0
          %1031 = vmatpush2.msra.mxu0 0.0
          %1032 = vmatprep.subr.mxu0 0.0
          %1033 = vmatpush2.msra.mxu0 0.0
          %1034 = vmatprep.subr.mxu0 0.0
          %1035 = vmatpush2.msra.mxu0 0.0
          %1036 = vmatprep.subr.mxu0 0.0
          %1037 = vmatpush2.msra.mxu0 0.0
          %1038 = vmatprep.subr.mxu0 0.0
          %1039 = vmatpush2.msra.mxu0 0.0
          %1040 = vmatprep.subr.mxu0 0.0
          %1041 = vmatpush2.msra.mxu0 0.0
          %1042 = vmatprep.subr.mxu0 0.0
          %1043 = vmatpush2.msra.mxu0 0.0
          %1044 = vmatprep.subr.mxu0 0.0
          %1045 = vmatpush2.msra.mxu0 0.0
          %1046 = vmatprep.mubr.f32.mxu0 0.0
          %1047 = vmatmul.mubr.f32.gmra.mxu0 %v980
          %v1048 = vpop.f32.mrf.mxu0
          %v1049 = vadd.f32 0.0, %v1048
          %v1050 = vpop.f32.mrf.mxu0
          %v1051 = vadd.f32 0.0, %v1050
          %1052 = vdwg.mxu0
          %v1054 = vrot.slane %v804, 2
          %v1056 = vadd.f32 %v1049, %v1054
          %v1057 = vrot.slane %v812, 4
          %v1059 = vadd.f32 %v1051, %v1057
          %v1060 = vxor.u32 %v1056, 2147483648
          %v1061 = vmul.f32 %v1060, 1.442695
          %v1062 = vpow.pop %v1061
          %v1063 = vadd.f32 %v1062, 1.0
          %v1064 = vrcp.pop %v1063
          %v1065 = vmul.f32 1.0, %v1064
          %v1066 = vxor.u32 %v1059, 2147483648
          %v1067 = vmul.f32 %v1066, 1.442695
          %v1068 = vpow.pop %v1067
          %v1069 = vadd.f32 %v1068, 1.0
          %v1070 = vrcp.pop %v1069
          %v1071 = vmul.f32 1.0, %v1070
          %v1072 = vtanh.pop %v1056
          %v1073 = vtanh.pop %v1059
          %1075 = vrot.lane.b32.xlu0 %v978, 32
          %v1076 = vpop.permute.xlu0 %1075
          %v1078 = vmul.f32 %v1065, %v1076
          %1080 = vrot.lane.b32.xlu0 %v1072, 32
          %v1081 = vpop.permute.xlu0 %1080
          %v1083 = vmul.f32 %v1065, %v1081
          %1085 = vrot.lane.b32.xlu0 %v1083, 32
          %v1086 = vpop.permute.xlu0 %1085
          %v1088 = vadd.f32 %v1078, %v1086
          %v1089 = vmul.f32 %v1071, %v978
          %1091 = vrot.lane.b32.xlu0 %v1073, 32
          %v1092 = vpop.permute.xlu0 %1091
          %v1094 = vmul.f32 %v1071, %v1092
          %1096 = vrot.lane.b32.xlu0 %v1094, 32
          %v1097 = vpop.permute.xlu0 %1096
          %v1099 = vadd.f32 %v1089, %v1097
          %v1100 = vtanh.pop %v1088
          %1102 = vrot.lane.b32.xlu0 %v1100, 32
          %v1103 = vpop.permute.xlu0 %1102
          %v1105 = vmul.f32 %v1065, %v1103
          %v1106 = vtanh.pop %v1099
          %1108 = vrot.lane.b32.xlu0 %v1106, 32
          %v1109 = vpop.permute.xlu0 %1108
          %v1111 = vmul.f32 %v1071, %v1109
          %1113 = vrot.lane.b32.xlu0 %v1105, 64
          %v1114 = vpop.permute.xlu0 %1113
          %1117 = vrot.lane.b32.xlu0 %v1111, 96
          %v1118 = vpop.permute.xlu0 %1117
          %v1120 = vsel %vm972, %v1114, %v1118
          %1122 = vrot.lane.b32.xlu0 %v1088, 96
          %v1123 = vpop.permute.xlu0 %1122
          %v1125 = vsel %vm972, %v1123, %v1099
          %v1127 = vsel %vm832, %v1120, 0
          %1129 = vmatprep.subr.mxu0 0.0
          %1130 = vmatpush1.msra.mxu0 0.0
          %1131 = vmatprep.subr.mxu0 0.0
          %1132 = vmatpush1.msra.mxu0 0.0
          %1133 = vmatprep.subr.mxu0 0.0
          %1134 = vmatpush1.msra.mxu0 0.0
          %1135 = vmatprep.subr.mxu0 0.0
          %1136 = vmatpush1.msra.mxu0 0.0
          %1137 = vmatprep.subr.mxu0 0.0
          %1138 = vmatpush1.msra.mxu0 0.0
          %1139 = vmatprep.subr.mxu0 0.0
          %1140 = vmatpush1.msra.mxu0 0.0
          %1141 = vmatprep.subr.mxu0 0.0
          %1142 = vmatpush1.msra.mxu0 0.0
          %1143 = vmatprep.subr.mxu0 0.0
          %1144 = vmatpush1.msra.mxu0 0.0
          %1145 = vmatprep.subr.mxu0 %v829
          %1146 = vmatpush1.msra.mxu0 %v828
          %1147 = vmatprep.subr.mxu0 %v827
          %1148 = vmatpush1.msra.mxu0 %v826
          %1149 = vmatprep.subr.mxu0 %v825
          %1150 = vmatpush1.msra.mxu0 %v824
          %1151 = vmatprep.subr.mxu0 %v823
          %1152 = vmatpush1.msra.mxu0 %v822
          %1153 = vmatprep.subr.mxu0 %v821
          %1154 = vmatpush1.msra.mxu0 %v820
          %1155 = vmatprep.subr.mxu0 %v819
          %1156 = vmatpush1.msra.mxu0 %v818
          %1157 = vmatprep.subr.mxu0 %v817
          %1158 = vmatpush1.msra.mxu0 %v816
          %1159 = vmatprep.subr.mxu0 %v815
          %1160 = vmatpush1.msra.mxu0 %v814
          %1161 = vmatprep.subr.mxu0 0.0
          %1162 = vmatpush2.msra.mxu0 0.0
          %1163 = vmatprep.subr.mxu0 0.0
          %1164 = vmatpush2.msra.mxu0 0.0
          %1165 = vmatprep.subr.mxu0 0.0
          %1166 = vmatpush2.msra.mxu0 0.0
          %1167 = vmatprep.subr.mxu0 0.0
          %1168 = vmatpush2.msra.mxu0 0.0
          %1169 = vmatprep.subr.mxu0 0.0
          %1170 = vmatpush2.msra.mxu0 0.0
          %1171 = vmatprep.subr.mxu0 0.0
          %1172 = vmatpush2.msra.mxu0 0.0
          %1173 = vmatprep.subr.mxu0 0.0
          %1174 = vmatpush2.msra.mxu0 0.0
          %1175 = vmatprep.subr.mxu0 0.0
          %1176 = vmatpush2.msra.mxu0 0.0
          %1177 = vmatprep.subr.mxu0 0.0
          %1178 = vmatpush2.msra.mxu0 0.0
          %1179 = vmatprep.subr.mxu0 0.0
          %1180 = vmatpush2.msra.mxu0 0.0
          %1181 = vmatprep.subr.mxu0 0.0
          %1182 = vmatpush2.msra.mxu0 0.0
          %1183 = vmatprep.subr.mxu0 0.0
          %1184 = vmatpush2.msra.mxu0 0.0
          %1185 = vmatprep.subr.mxu0 0.0
          %1186 = vmatpush2.msra.mxu0 0.0
          %1187 = vmatprep.subr.mxu0 0.0
          %1188 = vmatpush2.msra.mxu0 0.0
          %1189 = vmatprep.subr.mxu0 0.0
          %1190 = vmatpush2.msra.mxu0 0.0
          %1191 = vmatprep.subr.mxu0 0.0
          %1192 = vmatpush2.msra.mxu0 0.0
          %1193 = vmatprep.mubr.f32.mxu0 0.0
          %1194 = vmatmul.mubr.f32.gmra.mxu0 %v1127
          %v1195 = vpop.f32.mrf.mxu0
          %v1196 = vadd.f32 0.0, %v1195
          %v1197 = vpop.f32.mrf.mxu0
          %v1198 = vadd.f32 0.0, %v1197
          %1199 = vdwg.mxu0
          %v1200 = vrot.slane %v804, 4
          %v1202 = vadd.f32 %v1196, %v1200
          %v1203 = vrot.slane %v812, 2
          %v1205 = vadd.f32 %v1198, %v1203
          %v1206 = vxor.u32 %v1202, 2147483648
          %v1207 = vmul.f32 %v1206, 1.442695
          %v1208 = vpow.pop %v1207
          %v1209 = vadd.f32 %v1208, 1.0
          %v1210 = vrcp.pop %v1209
          %v1211 = vmul.f32 1.0, %v1210
          %v1212 = vxor.u32 %v1205, 2147483648
          %v1213 = vmul.f32 %v1212, 1.442695
          %v1214 = vpow.pop %v1213
          %v1215 = vadd.f32 %v1214, 1.0
          %v1216 = vrcp.pop %v1215
          %v1217 = vmul.f32 1.0, %v1216
          %v1218 = vtanh.pop %v1202
          %v1219 = vtanh.pop %v1205
          %1221 = vrot.lane.b32.xlu0 %v1125, 32
          %v1222 = vpop.permute.xlu0 %1221
          %v1224 = vmul.f32 %v1211, %v1222
          %1226 = vrot.lane.b32.xlu0 %v1218, 32
          %v1227 = vpop.permute.xlu0 %1226
          %v1229 = vmul.f32 %v1211, %v1227
          %1231 = vrot.lane.b32.xlu0 %v1229, 32
          %v1232 = vpop.permute.xlu0 %1231
          %v1234 = vadd.f32 %v1224, %v1232
          %v1235 = vmul.f32 %v1217, %v1125
          %1237 = vrot.lane.b32.xlu0 %v1219, 32
          %v1238 = vpop.permute.xlu0 %1237
          %v1240 = vmul.f32 %v1217, %v1238
          %1242 = vrot.lane.b32.xlu0 %v1240, 32
          %v1243 = vpop.permute.xlu0 %1242
          %v1245 = vadd.f32 %v1235, %v1243
          %v1246 = vtanh.pop %v1234
          %1248 = vrot.lane.b32.xlu0 %v1246, 32
          %v1249 = vpop.permute.xlu0 %1248
          %v1251 = vmul.f32 %v1211, %v1249
          %v1252 = vtanh.pop %v1245
          %1254 = vrot.lane.b32.xlu0 %v1252, 32
          %v1255 = vpop.permute.xlu0 %1254
          %v1257 = vmul.f32 %v1217, %v1255
          %1259 = vrot.lane.b32.xlu0 %v1251, 64
          %v1260 = vpop.permute.xlu0 %1259
          %1263 = vrot.lane.b32.xlu0 %v1257, 96
          %v1264 = vpop.permute.xlu0 %1263
          %v1266 = vsel %vm972, %v1260, %v1264
          %1268 = vrot.lane.b32.xlu0 %v1234, 96
          %v1269 = vpop.permute.xlu0 %1268
          %v1271 = vsel %vm972, %v1269, %v1245
          %v1273 = vsel %vm832, %v1266, 0
          %1275 = vmatprep.subr.mxu0 0.0
          %1276 = vmatpush1.msra.mxu0 0.0
          %1277 = vmatprep.subr.mxu0 0.0
          %1278 = vmatpush1.msra.mxu0 0.0
          %1279 = vmatprep.subr.mxu0 0.0
          %1280 = vmatpush1.msra.mxu0 0.0
          %1281 = vmatprep.subr.mxu0 0.0
          %1282 = vmatpush1.msra.mxu0 0.0
          %1283 = vmatprep.subr.mxu0 0.0
          %1284 = vmatpush1.msra.mxu0 0.0
          %1285 = vmatprep.subr.mxu0 0.0
          %1286 = vmatpush1.msra.mxu0 0.0
          %1287 = vmatprep.subr.mxu0 0.0
          %1288 = vmatpush1.msra.mxu0 0.0
          %1289 = vmatprep.subr.mxu0 0.0
          %1290 = vmatpush1.msra.mxu0 0.0
          %1291 = vmatprep.subr.mxu0 %v829
          %1292 = vmatpush1.msra.mxu0 %v828
          %1293 = vmatprep.subr.mxu0 %v827
          %1294 = vmatpush1.msra.mxu0 %v826
          %1295 = vmatprep.subr.mxu0 %v825
          %1296 = vmatpush1.msra.mxu0 %v824
          %1297 = vmatprep.subr.mxu0 %v823
          %1298 = vmatpush1.msra.mxu0 %v822
          %1299 = vmatprep.subr.mxu0 %v821
          %1300 = vmatpush1.msra.mxu0 %v820
          %1301 = vmatprep.subr.mxu0 %v819
          %1302 = vmatpush1.msra.mxu0 %v818
          %1303 = vmatprep.subr.mxu0 %v817
          %1304 = vmatpush1.msra.mxu0 %v816
          %1305 = vmatprep.subr.mxu0 %v815
          %1306 = vmatpush1.msra.mxu0 %v814
          %1307 = vmatprep.subr.mxu0 0.0
          %1308 = vmatpush2.msra.mxu0 0.0
          %1309 = vmatprep.subr.mxu0 0.0
          %1310 = vmatpush2.msra.mxu0 0.0
          %1311 = vmatprep.subr.mxu0 0.0
          %1312 = vmatpush2.msra.mxu0 0.0
          %1313 = vmatprep.subr.mxu0 0.0
          %1314 = vmatpush2.msra.mxu0 0.0
          %1315 = vmatprep.subr.mxu0 0.0
          %1316 = vmatpush2.msra.mxu0 0.0
          %1317 = vmatprep.subr.mxu0 0.0
          %1318 = vmatpush2.msra.mxu0 0.0
          %1319 = vmatprep.subr.mxu0 0.0
          %1320 = vmatpush2.msra.mxu0 0.0
          %1321 = vmatprep.subr.mxu0 0.0
          %1322 = vmatpush2.msra.mxu0 0.0
          %1323 = vmatprep.subr.mxu0 0.0
          %1324 = vmatpush2.msra.mxu0 0.0
          %1325 = vmatprep.subr.mxu0 0.0
          %1326 = vmatpush2.msra.mxu0 0.0
          %1327 = vmatprep.subr.mxu0 0.0
          %1328 = vmatpush2.msra.mxu0 0.0
          %1329 = vmatprep.subr.mxu0 0.0
          %1330 = vmatpush2.msra.mxu0 0.0
          %1331 = vmatprep.subr.mxu0 0.0
          %1332 = vmatpush2.msra.mxu0 0.0
          %1333 = vmatprep.subr.mxu0 0.0
          %1334 = vmatpush2.msra.mxu0 0.0
          %1335 = vmatprep.subr.mxu0 0.0
          %1336 = vmatpush2.msra.mxu0 0.0
          %1337 = vmatprep.subr.mxu0 0.0
          %1338 = vmatpush2.msra.mxu0 0.0
          %1339 = vmatprep.mubr.f32.mxu0 0.0
          %1340 = vmatmul.mubr.f32.gmra.mxu0 %v1273
          %v1341 = vpop.f32.mrf.mxu0
          %v1342 = vadd.f32 0.0, %v1341
          %v1343 = vpop.f32.mrf.mxu0
          %v1344 = vadd.f32 0.0, %v1343
          %1345 = vdwg.mxu0
          %v1346 = vrot.slane %v804, 6
          %v1348 = vadd.f32 %v1342, %v1346
          %v1349 = vadd.f32 %v1344, %v812
          %v1350 = vxor.u32 %v1348, 2147483648
          %v1351 = vmul.f32 %v1350, 1.442695
          %v1352 = vpow.pop %v1351
          %v1353 = vadd.f32 %v1352, 1.0
          %v1354 = vrcp.pop %v1353
          %v1355 = vmul.f32 1.0, %v1354
          %v1356 = vxor.u32 %v1349, 2147483648
          %v1357 = vmul.f32 %v1356, 1.442695
          %v1358 = vpow.pop %v1357
          %v1359 = vadd.f32 %v1358, 1.0
          %v1360 = vrcp.pop %v1359
          %v1361 = vmul.f32 1.0, %v1360
          %v1362 = vtanh.pop %v1348
          %v1363 = vtanh.pop %v1349
          %1365 = vrot.lane.b32.xlu0 %v1271, 32
          %v1366 = vpop.permute.xlu0 %1365
          %v1368 = vmul.f32 %v1355, %v1366
          %1370 = vrot.lane.b32.xlu0 %v1362, 32
          %v1371 = vpop.permute.xlu0 %1370
          %v1373 = vmul.f32 %v1355, %v1371
          %1375 = vrot.lane.b32.xlu0 %v1373, 32
          %v1376 = vpop.permute.xlu0 %1375
          %v1378 = vadd.f32 %v1368, %v1376
          %v1379 = vmul.f32 %v1361, %v1271
          %1381 = vrot.lane.b32.xlu0 %v1363, 32
          %v1382 = vpop.permute.xlu0 %1381
          %v1384 = vmul.f32 %v1361, %v1382
          %1386 = vrot.lane.b32.xlu0 %v1384, 32
          %v1387 = vpop.permute.xlu0 %1386
          %v1389 = vadd.f32 %v1379, %v1387
          %v1390 = vtanh.pop %v1378
          %1392 = vrot.lane.b32.xlu0 %v1390, 32
          %v1393 = vpop.permute.xlu0 %1392
          %v1395 = vmul.f32 %v1355, %v1393
          %v1396 = vtanh.pop %v1389
          %1398 = vrot.lane.b32.xlu0 %v1396, 32
          %v1399 = vpop.permute.xlu0 %1398
          %v1401 = vmul.f32 %v1361, %v1399
          %1403 = vrot.lane.b32.xlu0 %v1395, 64
          %v1404 = vpop.permute.xlu0 %1403
          %1407 = vrot.lane.b32.xlu0 %v1401, 96
          %v1408 = vpop.permute.xlu0 %1407
          %v1410 = vsel %vm972, %v1404, %v1408
          %1412 = vrot.lane.b32.xlu0 %v1378, 96
          %v1413 = vpop.permute.xlu0 %1412
          %v1415 = vsel %vm972, %v1413, %v1389
          %v1417 = vsel %vm832, %v1410, 0
          %1419 = vmatprep.subr.mxu0 0.0
          %1420 = vmatpush1.msra.mxu0 0.0
          %1421 = vmatprep.subr.mxu0 0.0
          %1422 = vmatpush1.msra.mxu0 0.0
          %1423 = vmatprep.subr.mxu0 0.0
          %1424 = vmatpush1.msra.mxu0 0.0
          %1425 = vmatprep.subr.mxu0 0.0
          %1426 = vmatpush1.msra.mxu0 0.0
          %1427 = vmatprep.subr.mxu0 0.0
          %1428 = vmatpush1.msra.mxu0 0.0
          %1429 = vmatprep.subr.mxu0 0.0
          %1430 = vmatpush1.msra.mxu0 0.0
          %1431 = vmatprep.subr.mxu0 0.0
          %1432 = vmatpush1.msra.mxu0 0.0
          %1433 = vmatprep.subr.mxu0 0.0
          %1434 = vmatpush1.msra.mxu0 0.0
          %1435 = vmatprep.subr.mxu0 %v829
          %1436 = vmatpush1.msra.mxu0 %v828
          %1437 = vmatprep.subr.mxu0 %v827
          %1438 = vmatpush1.msra.mxu0 %v826
          %1439 = vmatprep.subr.mxu0 %v825
          %1440 = vmatpush1.msra.mxu0 %v824
          %1441 = vmatprep.subr.mxu0 %v823
          %1442 = vmatpush1.msra.mxu0 %v822
          %1443 = vmatprep.subr.mxu0 %v821
          %1444 = vmatpush1.msra.mxu0 %v820
          %1445 = vmatprep.subr.mxu0 %v819
          %1446 = vmatpush1.msra.mxu0 %v818
          %1447 = vmatprep.subr.mxu0 %v817
          %1448 = vmatpush1.msra.mxu0 %v816
          %1449 = vmatprep.subr.mxu0 %v815
          %1450 = vmatpush1.msra.mxu0 %v814
          %1451 = vmatprep.subr.mxu0 0.0
          %1452 = vmatpush2.msra.mxu0 0.0
          %1453 = vmatprep.subr.mxu0 0.0
          %1454 = vmatpush2.msra.mxu0 0.0
          %1455 = vmatprep.subr.mxu0 0.0
          %1456 = vmatpush2.msra.mxu0 0.0
          %1457 = vmatprep.subr.mxu0 0.0
          %1458 = vmatpush2.msra.mxu0 0.0
          %1459 = vmatprep.subr.mxu0 0.0
          %1460 = vmatpush2.msra.mxu0 0.0
          %1461 = vmatprep.subr.mxu0 0.0
          %1462 = vmatpush2.msra.mxu0 0.0
          %1463 = vmatprep.subr.mxu0 0.0
          %1464 = vmatpush2.msra.mxu0 0.0
          %1465 = vmatprep.subr.mxu0 0.0
          %1466 = vmatpush2.msra.mxu0 0.0
          %1467 = vmatprep.subr.mxu0 0.0
          %1468 = vmatpush2.msra.mxu0 0.0
          %1469 = vmatprep.subr.mxu0 0.0
          %1470 = vmatpush2.msra.mxu0 0.0
          %1471 = vmatprep.subr.mxu0 0.0
          %1472 = vmatpush2.msra.mxu0 0.0
          %1473 = vmatprep.subr.mxu0 0.0
          %1474 = vmatpush2.msra.mxu0 0.0
          %1475 = vmatprep.subr.mxu0 0.0
          %1476 = vmatpush2.msra.mxu0 0.0
          %1477 = vmatprep.subr.mxu0 0.0
          %1478 = vmatpush2.msra.mxu0 0.0
          %1479 = vmatprep.subr.mxu0 0.0
          %1480 = vmatpush2.msra.mxu0 0.0
          %1481 = vmatprep.subr.mxu0 0.0
          %1482 = vmatpush2.msra.mxu0 0.0
          %1483 = vmatprep.mubr.f32.mxu0 0.0
          %1484 = vmatmul.mubr.f32.gmra.mxu0 %v1417
          %v1485 = vpop.f32.mrf.mxu0
          %v1486 = vadd.f32 0.0, %v1485
          %v1487 = vpop.f32.mrf.mxu0
          %v1488 = vadd.f32 0.0, %v1487
          %1489 = vdwg.mxu0
          %v1490 = vadd.f32 %v1486, %v810
          %v1492 = vrot.slane %v806, 6
          %v1494 = vadd.f32 %v1488, %v1492
          %v1495 = vxor.u32 %v1490, 2147483648
          %v1496 = vmul.f32 %v1495, 1.442695
          %v1497 = vpow.pop %v1496
          %v1498 = vadd.f32 %v1497, 1.0
          %v1499 = vrcp.pop %v1498
          %v1500 = vmul.f32 1.0, %v1499
          %v1501 = vxor.u32 %v1494, 2147483648
          %v1502 = vmul.f32 %v1501, 1.442695
          %v1503 = vpow.pop %v1502
          %v1504 = vadd.f32 %v1503, 1.0
          %v1505 = vrcp.pop %v1504
          %v1506 = vmul.f32 1.0, %v1505
          %v1507 = vtanh.pop %v1490
          %v1508 = vtanh.pop %v1494
          %1510 = vrot.lane.b32.xlu0 %v1415, 32
          %v1511 = vpop.permute.xlu0 %1510
          %v1513 = vmul.f32 %v1500, %v1511
          %1515 = vrot.lane.b32.xlu0 %v1507, 32
          %v1516 = vpop.permute.xlu0 %1515
          %v1518 = vmul.f32 %v1500, %v1516
          %1520 = vrot.lane.b32.xlu0 %v1518, 32
          %v1521 = vpop.permute.xlu0 %1520
          %v1523 = vadd.f32 %v1513, %v1521
          %v1524 = vmul.f32 %v1506, %v1415
          %1526 = vrot.lane.b32.xlu0 %v1508, 32
          %v1527 = vpop.permute.xlu0 %1526
          %v1529 = vmul.f32 %v1506, %v1527
          %1531 = vrot.lane.b32.xlu0 %v1529, 32
          %v1532 = vpop.permute.xlu0 %1531
          %v1534 = vadd.f32 %v1524, %v1532
          %v1535 = vtanh.pop %v1523
          %1537 = vrot.lane.b32.xlu0 %v1535, 32
          %v1538 = vpop.permute.xlu0 %1537
          %v1540 = vmul.f32 %v1500, %v1538
          %v1541 = vtanh.pop %v1534
          %1543 = vrot.lane.b32.xlu0 %v1541, 32
          %v1544 = vpop.permute.xlu0 %1543
          %v1546 = vmul.f32 %v1506, %v1544
          %1548 = vrot.lane.b32.xlu0 %v1540, 64
          %v1549 = vpop.permute.xlu0 %1548
          %1552 = vrot.lane.b32.xlu0 %v1546, 96
          %v1553 = vpop.permute.xlu0 %1552
          %v1555 = vsel %vm972, %v1549, %v1553
          %1557 = vrot.lane.b32.xlu0 %v1523, 96
          %v1558 = vpop.permute.xlu0 %1557
          %v1560 = vsel %vm972, %v1558, %v1534
          %v1562 = vsel %vm832, %v1555, 0
          %1564 = vmatprep.subr.mxu0 0.0
          %1565 = vmatpush1.msra.mxu0 0.0
          %1566 = vmatprep.subr.mxu0 0.0
          %1567 = vmatpush1.msra.mxu0 0.0
          %1568 = vmatprep.subr.mxu0 0.0
          %1569 = vmatpush1.msra.mxu0 0.0
          %1570 = vmatprep.subr.mxu0 0.0
          %1571 = vmatpush1.msra.mxu0 0.0
          %1572 = vmatprep.subr.mxu0 0.0
          %1573 = vmatpush1.msra.mxu0 0.0
          %1574 = vmatprep.subr.mxu0 0.0
          %1575 = vmatpush1.msra.mxu0 0.0
          %1576 = vmatprep.subr.mxu0 0.0
          %1577 = vmatpush1.msra.mxu0 0.0
          %1578 = vmatprep.subr.mxu0 0.0
          %1579 = vmatpush1.msra.mxu0 0.0
          %1580 = vmatprep.subr.mxu0 %v829
          %1581 = vmatpush1.msra.mxu0 %v828
          %1582 = vmatprep.subr.mxu0 %v827
          %1583 = vmatpush1.msra.mxu0 %v826
          %1584 = vmatprep.subr.mxu0 %v825
          %1585 = vmatpush1.msra.mxu0 %v824
          %1586 = vmatprep.subr.mxu0 %v823
          %1587 = vmatpush1.msra.mxu0 %v822
          %1588 = vmatprep.subr.mxu0 %v821
          %1589 = vmatpush1.msra.mxu0 %v820
          %1590 = vmatprep.subr.mxu0 %v819
          %1591 = vmatpush1.msra.mxu0 %v818
          %1592 = vmatprep.subr.mxu0 %v817
          %1593 = vmatpush1.msra.mxu0 %v816
          %1594 = vmatprep.subr.mxu0 %v815
          %1595 = vmatpush1.msra.mxu0 %v814
          %1596 = vmatprep.subr.mxu0 0.0
          %1597 = vmatpush2.msra.mxu0 0.0
          %1598 = vmatprep.subr.mxu0 0.0
          %1599 = vmatpush2.msra.mxu0 0.0
          %1600 = vmatprep.subr.mxu0 0.0
          %1601 = vmatpush2.msra.mxu0 0.0
          %1602 = vmatprep.subr.mxu0 0.0
          %1603 = vmatpush2.msra.mxu0 0.0
          %1604 = vmatprep.subr.mxu0 0.0
          %1605 = vmatpush2.msra.mxu0 0.0
          %1606 = vmatprep.subr.mxu0 0.0
          %1607 = vmatpush2.msra.mxu0 0.0
          %1608 = vmatprep.subr.mxu0 0.0
          %1609 = vmatpush2.msra.mxu0 0.0
          %1610 = vmatprep.subr.mxu0 0.0
          %1611 = vmatpush2.msra.mxu0 0.0
          %1612 = vmatprep.subr.mxu0 0.0
          %1613 = vmatpush2.msra.mxu0 0.0
          %1614 = vmatprep.subr.mxu0 0.0
          %1615 = vmatpush2.msra.mxu0 0.0
          %1616 = vmatprep.subr.mxu0 0.0
          %1617 = vmatpush2.msra.mxu0 0.0
          %1618 = vmatprep.subr.mxu0 0.0
          %1619 = vmatpush2.msra.mxu0 0.0
          %1620 = vmatprep.subr.mxu0 0.0
          %1621 = vmatpush2.msra.mxu0 0.0
          %1622 = vmatprep.subr.mxu0 0.0
          %1623 = vmatpush2.msra.mxu0 0.0
          %1624 = vmatprep.subr.mxu0 0.0
          %1625 = vmatpush2.msra.mxu0 0.0
          %1626 = vmatprep.subr.mxu0 0.0
          %1627 = vmatpush2.msra.mxu0 0.0
          %1628 = vmatprep.mubr.f32.mxu0 0.0
          %1629 = vmatmul.mubr.f32.gmra.mxu0 %v1562
          %v1630 = vpop.f32.mrf.mxu0
          %v1631 = vadd.f32 0.0, %v1630
          %v1632 = vpop.f32.mrf.mxu0
          %v1633 = vadd.f32 0.0, %v1632
          %1634 = vdwg.mxu0
          %v1636 = vrot.slane %v810, 2
          %v1638 = vadd.f32 %v1631, %v1636
          %v1639 = vrot.slane %v806, 4
          %v1641 = vadd.f32 %v1633, %v1639
          %v1642 = vxor.u32 %v1638, 2147483648
          %v1643 = vmul.f32 %v1642, 1.442695
          %v1644 = vpow.pop %v1643
          %v1645 = vadd.f32 %v1644, 1.0
          %v1646 = vrcp.pop %v1645
          %v1647 = vmul.f32 1.0, %v1646
          %v1648 = vxor.u32 %v1641, 2147483648
          %v1649 = vmul.f32 %v1648, 1.442695
          %v1650 = vpow.pop %v1649
          %v1651 = vadd.f32 %v1650, 1.0
          %v1652 = vrcp.pop %v1651
          %v1653 = vmul.f32 1.0, %v1652
          %v1654 = vtanh.pop %v1638
          %v1655 = vtanh.pop %v1641
          %1657 = vrot.lane.b32.xlu0 %v1560, 32
          %v1658 = vpop.permute.xlu0 %1657
          %v1660 = vmul.f32 %v1647, %v1658
          %1662 = vrot.lane.b32.xlu0 %v1654, 32
          %v1663 = vpop.permute.xlu0 %1662
          %v1665 = vmul.f32 %v1647, %v1663
          %1667 = vrot.lane.b32.xlu0 %v1665, 32
          %v1668 = vpop.permute.xlu0 %1667
          %v1670 = vadd.f32 %v1660, %v1668
          %v1671 = vmul.f32 %v1653, %v1560
          %1673 = vrot.lane.b32.xlu0 %v1655, 32
          %v1674 = vpop.permute.xlu0 %1673
          %v1676 = vmul.f32 %v1653, %v1674
          %1678 = vrot.lane.b32.xlu0 %v1676, 32
          %v1679 = vpop.permute.xlu0 %1678
          %v1681 = vadd.f32 %v1671, %v1679
          %v1682 = vtanh.pop %v1670
          %1684 = vrot.lane.b32.xlu0 %v1682, 32
          %v1685 = vpop.permute.xlu0 %1684
          %v1687 = vmul.f32 %v1647, %v1685
          %v1688 = vtanh.pop %v1681
          %1690 = vrot.lane.b32.xlu0 %v1688, 32
          %v1691 = vpop.permute.xlu0 %1690
          %v1693 = vmul.f32 %v1653, %v1691
          %1695 = vrot.lane.b32.xlu0 %v1687, 64
          %v1696 = vpop.permute.xlu0 %1695
          %1699 = vrot.lane.b32.xlu0 %v1693, 96
          %v1700 = vpop.permute.xlu0 %1699
          %v1702 = vsel %vm972, %v1696, %v1700
          %1704 = vrot.lane.b32.xlu0 %v1670, 96
          %v1705 = vpop.permute.xlu0 %1704
          %v1707 = vsel %vm972, %v1705, %v1681
          %v1709 = vsel %vm832, %v1702, 0
          %1711 = vmatprep.subr.mxu0 0.0
          %1712 = vmatpush1.msra.mxu0 0.0
          %1713 = vmatprep.subr.mxu0 0.0
          %1714 = vmatpush1.msra.mxu0 0.0
          %1715 = vmatprep.subr.mxu0 0.0
          %1716 = vmatpush1.msra.mxu0 0.0
          %1717 = vmatprep.subr.mxu0 0.0
          %1718 = vmatpush1.msra.mxu0 0.0
          %1719 = vmatprep.subr.mxu0 0.0
          %1720 = vmatpush1.msra.mxu0 0.0
          %1721 = vmatprep.subr.mxu0 0.0
          %1722 = vmatpush1.msra.mxu0 0.0
          %1723 = vmatprep.subr.mxu0 0.0
          %1724 = vmatpush1.msra.mxu0 0.0
          %1725 = vmatprep.subr.mxu0 0.0
          %1726 = vmatpush1.msra.mxu0 0.0
          %1727 = vmatprep.subr.mxu0 %v829
          %1728 = vmatpush1.msra.mxu0 %v828
          %1729 = vmatprep.subr.mxu0 %v827
          %1730 = vmatpush1.msra.mxu0 %v826
          %1731 = vmatprep.subr.mxu0 %v825
          %1732 = vmatpush1.msra.mxu0 %v824
          %1733 = vmatprep.subr.mxu0 %v823
          %1734 = vmatpush1.msra.mxu0 %v822
          %1735 = vmatprep.subr.mxu0 %v821
          %1736 = vmatpush1.msra.mxu0 %v820
          %1737 = vmatprep.subr.mxu0 %v819
          %1738 = vmatpush1.msra.mxu0 %v818
          %1739 = vmatprep.subr.mxu0 %v817
          %1740 = vmatpush1.msra.mxu0 %v816
          %1741 = vmatprep.subr.mxu0 %v815
          %1742 = vmatpush1.msra.mxu0 %v814
          %1743 = vmatprep.subr.mxu0 0.0
          %1744 = vmatpush2.msra.mxu0 0.0
          %1745 = vmatprep.subr.mxu0 0.0
          %1746 = vmatpush2.msra.mxu0 0.0
          %1747 = vmatprep.subr.mxu0 0.0
          %1748 = vmatpush2.msra.mxu0 0.0
          %1749 = vmatprep.subr.mxu0 0.0
          %1750 = vmatpush2.msra.mxu0 0.0
          %1751 = vmatprep.subr.mxu0 0.0
          %1752 = vmatpush2.msra.mxu0 0.0
          %1753 = vmatprep.subr.mxu0 0.0
          %1754 = vmatpush2.msra.mxu0 0.0
          %1755 = vmatprep.subr.mxu0 0.0
          %1756 = vmatpush2.msra.mxu0 0.0
          %1757 = vmatprep.subr.mxu0 0.0
          %1758 = vmatpush2.msra.mxu0 0.0
          %1759 = vmatprep.subr.mxu0 0.0
          %1760 = vmatpush2.msra.mxu0 0.0
          %1761 = vmatprep.subr.mxu0 0.0
          %1762 = vmatpush2.msra.mxu0 0.0
          %1763 = vmatprep.subr.mxu0 0.0
          %1764 = vmatpush2.msra.mxu0 0.0
          %1765 = vmatprep.subr.mxu0 0.0
          %1766 = vmatpush2.msra.mxu0 0.0
          %1767 = vmatprep.subr.mxu0 0.0
          %1768 = vmatpush2.msra.mxu0 0.0
          %1769 = vmatprep.subr.mxu0 0.0
          %1770 = vmatpush2.msra.mxu0 0.0
          %1771 = vmatprep.subr.mxu0 0.0
          %1772 = vmatpush2.msra.mxu0 0.0
          %1773 = vmatprep.subr.mxu0 0.0
          %1774 = vmatpush2.msra.mxu0 0.0
          %1775 = vmatprep.mubr.f32.mxu0 0.0
          %1776 = vmatmul.mubr.f32.gmra.mxu0 %v1709
          %v1777 = vpop.f32.mrf.mxu0
          %v1778 = vadd.f32 0.0, %v1777
          %v1779 = vpop.f32.mrf.mxu0
          %v1780 = vadd.f32 0.0, %v1779
          %1781 = vdwg.mxu0
          %v1782 = vrot.slane %v810, 4
          %v1784 = vadd.f32 %v1778, %v1782
          %v1785 = vrot.slane %v806, 2
          %v1787 = vadd.f32 %v1780, %v1785
          %v1788 = vxor.u32 %v1784, 2147483648
          %v1789 = vmul.f32 %v1788, 1.442695
          %v1790 = vpow.pop %v1789
          %v1791 = vadd.f32 %v1790, 1.0
          %v1792 = vrcp.pop %v1791
          %v1793 = vmul.f32 1.0, %v1792
          %v1794 = vxor.u32 %v1787, 2147483648
          %v1795 = vmul.f32 %v1794, 1.442695
          %v1796 = vpow.pop %v1795
          %v1797 = vadd.f32 %v1796, 1.0
          %v1798 = vrcp.pop %v1797
          %v1799 = vmul.f32 1.0, %v1798
          %v1800 = vtanh.pop %v1784
          %v1801 = vtanh.pop %v1787
          %1803 = vrot.lane.b32.xlu0 %v1707, 32
          %v1804 = vpop.permute.xlu0 %1803
          %v1806 = vmul.f32 %v1793, %v1804
          %1808 = vrot.lane.b32.xlu0 %v1800, 32
          %v1809 = vpop.permute.xlu0 %1808
          %v1811 = vmul.f32 %v1793, %v1809
          %1813 = vrot.lane.b32.xlu0 %v1811, 32
          %v1814 = vpop.permute.xlu0 %1813
          %v1816 = vadd.f32 %v1806, %v1814
          %v1817 = vmul.f32 %v1799, %v1707
          %1819 = vrot.lane.b32.xlu0 %v1801, 32
          %v1820 = vpop.permute.xlu0 %1819
          %v1822 = vmul.f32 %v1799, %v1820
          %1824 = vrot.lane.b32.xlu0 %v1822, 32
          %v1825 = vpop.permute.xlu0 %1824
          %v1827 = vadd.f32 %v1817, %v1825
          %v1828 = vtanh.pop %v1816
          %1830 = vrot.lane.b32.xlu0 %v1828, 32
          %v1831 = vpop.permute.xlu0 %1830
          %v1833 = vmul.f32 %v1793, %v1831
          %v1834 = vtanh.pop %v1827
          %1836 = vrot.lane.b32.xlu0 %v1834, 32
          %v1837 = vpop.permute.xlu0 %1836
          %v1839 = vmul.f32 %v1799, %v1837
          %1841 = vrot.lane.b32.xlu0 %v1833, 64
          %v1842 = vpop.permute.xlu0 %1841
          %1845 = vrot.lane.b32.xlu0 %v1839, 96
          %v1846 = vpop.permute.xlu0 %1845
          %v1848 = vsel %vm972, %v1842, %v1846
          %1850 = vrot.lane.b32.xlu0 %v1816, 96
          %v1851 = vpop.permute.xlu0 %1850
          %v1853 = vsel %vm972, %v1851, %v1827
          %v1855 = vsel %vm832, %v1848, 0
          %1857 = vmatprep.subr.mxu0 0.0
          %1858 = vmatpush1.msra.mxu0 0.0
          %1859 = vmatprep.subr.mxu0 0.0
          %1860 = vmatpush1.msra.mxu0 0.0
          %1861 = vmatprep.subr.mxu0 0.0
          %1862 = vmatpush1.msra.mxu0 0.0
          %1863 = vmatprep.subr.mxu0 0.0
          %1864 = vmatpush1.msra.mxu0 0.0
          %1865 = vmatprep.subr.mxu0 0.0
          %1866 = vmatpush1.msra.mxu0 0.0
          %1867 = vmatprep.subr.mxu0 0.0
          %1868 = vmatpush1.msra.mxu0 0.0
          %1869 = vmatprep.subr.mxu0 0.0
          %1870 = vmatpush1.msra.mxu0 0.0
          %1871 = vmatprep.subr.mxu0 0.0
          %1872 = vmatpush1.msra.mxu0 0.0
          %1873 = vmatprep.subr.mxu0 %v829
          %1874 = vmatpush1.msra.mxu0 %v828
          %1875 = vmatprep.subr.mxu0 %v827
          %1876 = vmatpush1.msra.mxu0 %v826
          %1877 = vmatprep.subr.mxu0 %v825
          %1878 = vmatpush1.msra.mxu0 %v824
          %1879 = vmatprep.subr.mxu0 %v823
          %1880 = vmatpush1.msra.mxu0 %v822
          %1881 = vmatprep.subr.mxu0 %v821
          %1882 = vmatpush1.msra.mxu0 %v820
          %1883 = vmatprep.subr.mxu0 %v819
          %1884 = vmatpush1.msra.mxu0 %v818
          %1885 = vmatprep.subr.mxu0 %v817
          %1886 = vmatpush1.msra.mxu0 %v816
          %1887 = vmatprep.subr.mxu0 %v815
          %1888 = vmatpush1.msra.mxu0 %v814
          %1889 = vmatprep.subr.mxu0 0.0
          %1890 = vmatpush2.msra.mxu0 0.0
          %1891 = vmatprep.subr.mxu0 0.0
          %1892 = vmatpush2.msra.mxu0 0.0
          %1893 = vmatprep.subr.mxu0 0.0
          %1894 = vmatpush2.msra.mxu0 0.0
          %1895 = vmatprep.subr.mxu0 0.0
          %1896 = vmatpush2.msra.mxu0 0.0
          %1897 = vmatprep.subr.mxu0 0.0
          %1898 = vmatpush2.msra.mxu0 0.0
          %1899 = vmatprep.subr.mxu0 0.0
          %1900 = vmatpush2.msra.mxu0 0.0
          %1901 = vmatprep.subr.mxu0 0.0
          %1902 = vmatpush2.msra.mxu0 0.0
          %1903 = vmatprep.subr.mxu0 0.0
          %1904 = vmatpush2.msra.mxu0 0.0
          %1905 = vmatprep.subr.mxu0 0.0
          %1906 = vmatpush2.msra.mxu0 0.0
          %1907 = vmatprep.subr.mxu0 0.0
          %1908 = vmatpush2.msra.mxu0 0.0
          %1909 = vmatprep.subr.mxu0 0.0
          %1910 = vmatpush2.msra.mxu0 0.0
          %1911 = vmatprep.subr.mxu0 0.0
          %1912 = vmatpush2.msra.mxu0 0.0
          %1913 = vmatprep.subr.mxu0 0.0
          %1914 = vmatpush2.msra.mxu0 0.0
          %1915 = vmatprep.subr.mxu0 0.0
          %1916 = vmatpush2.msra.mxu0 0.0
          %1917 = vmatprep.subr.mxu0 0.0
          %1918 = vmatpush2.msra.mxu0 0.0
          %1919 = vmatprep.subr.mxu0 0.0
          %1920 = vmatpush2.msra.mxu0 0.0
          %1921 = vmatprep.mubr.f32.mxu0 0.0
          %1922 = vmatmul.mubr.f32.gmra.mxu0 %v1855
          %v1923 = vpop.f32.mrf.mxu0
          %v1924 = vadd.f32 0.0, %v1923
          %v1925 = vpop.f32.mrf.mxu0
          %v1926 = vadd.f32 0.0, %v1925
          %1927 = vdwg.mxu0
          %v1928 = vrot.slane %v810, 6
          %v1930 = vadd.f32 %v1924, %v1928
          %v1931 = vadd.f32 %v1926, %v806
          %v1932 = vxor.u32 %v1930, 2147483648
          %v1933 = vmul.f32 %v1932, 1.442695
          %v1934 = vpow.pop %v1933
          %v1935 = vadd.f32 %v1934, 1.0
          %v1936 = vrcp.pop %v1935
          %v1937 = vmul.f32 1.0, %v1936
          %v1938 = vxor.u32 %v1931, 2147483648
          %v1939 = vmul.f32 %v1938, 1.442695
          %v1940 = vpow.pop %v1939
          %v1941 = vadd.f32 %v1940, 1.0
          %v1942 = vrcp.pop %v1941
          %v1943 = vmul.f32 1.0, %v1942
          %v1944 = vtanh.pop %v1930
          %v1945 = vtanh.pop %v1931
          %1947 = vrot.lane.b32.xlu0 %v1853, 32
          %v1948 = vpop.permute.xlu0 %1947
          %v1950 = vmul.f32 %v1937, %v1948
          %1952 = vrot.lane.b32.xlu0 %v1944, 32
          %v1953 = vpop.permute.xlu0 %1952
          %v1955 = vmul.f32 %v1937, %v1953
          %1957 = vrot.lane.b32.xlu0 %v1955, 32
          %v1958 = vpop.permute.xlu0 %1957
          %v1960 = vadd.f32 %v1950, %v1958
          %v1961 = vmul.f32 %v1943, %v1853
          %1963 = vrot.lane.b32.xlu0 %v1945, 32
          %v1964 = vpop.permute.xlu0 %1963
          %v1966 = vmul.f32 %v1943, %v1964
          %1968 = vrot.lane.b32.xlu0 %v1966, 32
          %v1969 = vpop.permute.xlu0 %1968
          %v1971 = vadd.f32 %v1961, %v1969
          %v1972 = vtanh.pop %v1960
          %1974 = vrot.lane.b32.xlu0 %v1972, 32
          %v1975 = vpop.permute.xlu0 %1974
          %v1977 = vmul.f32 %v1937, %v1975
          %v1978 = vtanh.pop %v1971
          %1980 = vrot.lane.b32.xlu0 %v1978, 32
          %v1981 = vpop.permute.xlu0 %1980
          %v1983 = vmul.f32 %v1943, %v1981
          %1985 = vrot.lane.b32.xlu0 %v1983, 96
          %v1986 = vpop.permute.xlu0 %1985
          %v1988 = vsel %vm972, %v966, %v1986
          %v1989 = vsel %vm972, %v1114, %v1846
          %v1990 = vsel %vm972, %v1260, %v1700
          %v1991 = vsel %vm972, %v1404, %v1553
          %v1992 = vsel %vm972, %v1549, %v1408
          %v1993 = vsel %vm972, %v1696, %v1264
          %v1994 = vsel %vm972, %v1842, %v1118
          %1996 = vrot.lane.b32.xlu0 %v1977, 64
          %v1997 = vpop.permute.xlu0 %1996
          %v1999 = vsel %vm972, %v1997, %v970
          %v2001 = vrot.slane %v1989, 6
          %v2004 = vrot.slane %v1990, 4
          %v2007 = vrot.slane %v1991, 2
          %v2010 = vrot.slane %v1993, 6
          %v2013 = vrot.slane %v1994, 4
          %v2016 = vrot.slane %v1999, 2
          %vm2018 = vcmask 1041408
          %v2019 = vsel %vm2018, %v1988, %v2001
          %vm2020 = vcmask 1043456
          %v2021 = vsel %vm2020, %v2019, %v2004
          %vm2022 = vcmask 1045504
          %v2023 = vsel %vm2022, %v2021, %v2007
          %v2024 = vsel %vm2018, %v1992, %v2010
          %v2025 = vsel %vm2020, %v2024, %v2013
          %v2026 = vsel %vm2022, %v2025, %v2016
          %v2027 = vld [vmem:[#allocation12] sm:$0xff]
          %v2028 = vld [vmem:[#allocation12 + $0x8] sm:$0xff]
          %v2029 = vld [vmem:[#allocation12 + $0x10] sm:$0xff]
          %v2030 = vld [vmem:[#allocation12 + $0x18] sm:$0xff]
          %v2031 = vld [vmem:[#allocation12 + $0x20] sm:$0xff]
          %v2032 = vld [vmem:[#allocation12 + $0x28] sm:$0xff]
          %v2033 = vld [vmem:[#allocation12 + $0x30] sm:$0xff]
          %v2034 = vld [vmem:[#allocation12 + $0x38] sm:$0xff]
          %v2035 = vld [vmem:[#allocation12 + $0x40] sm:$0xff]
          %v2036 = vld [vmem:[#allocation12 + $0x48] sm:$0xff]
          %v2037 = vld [vmem:[#allocation12 + $0x50] sm:$0xff]
          %v2038 = vld [vmem:[#allocation12 + $0x58] sm:$0xff]
          %v2039 = vld [vmem:[#allocation12 + $0x60] sm:$0xff]
          %v2040 = vld [vmem:[#allocation12 + $0x68] sm:$0xff]
          %v2041 = vld [vmem:[#allocation12 + $0x70] sm:$0xff]
          %v2042 = vld [vmem:[#allocation12 + $0x78] sm:$0xff]
          %v2043 = vld [vmem:[#allocation12 + $0x80] sm:$0xff]
          %v2044 = vld [vmem:[#allocation12 + $0x88] sm:$0xff]
          %v2045 = vld [vmem:[#allocation12 + $0x90] sm:$0xff]
          %v2046 = vld [vmem:[#allocation12 + $0x98] sm:$0xff]
          %v2047 = vld [vmem:[#allocation12 + $0xa0] sm:$0xff]
          %v2048 = vld [vmem:[#allocation12 + $0xa8] sm:$0xff]
          %v2049 = vld [vmem:[#allocation12 + $0xb0] sm:$0xff]
          %v2050 = vld [vmem:[#allocation12 + $0xb8] sm:$0xff]
          %v2051 = vld [vmem:[#allocation14] sm:$0x7]
          %v2053 = vlaneseq
          %v2054 = vshrl.u32 %v2053, 7
          %v2055 = vsub.s32 0, %v2054
          %v2056 = vrot.slane %v2051, %v2055
          %v2057 = vlaneseq
          %v2058 = vshrl.u32 %v2057, 7
          %v2059 = vsub.s32 1, %v2058
          %v2060 = vrot.slane %v2051, %v2059
          %v2061 = vlaneseq
          %v2062 = vshrl.u32 %v2061, 7
          %v2063 = vsub.s32 2, %v2062
          %v2064 = vrot.slane %v2051, %v2063
          %v2069 = vsel %vm832, %v2023, 0
          %v2072 = vsel %vm832, %v2026, 0
          %2074 = vmatprep.subr.mxu0 0.0
          %2075 = vmatpush1.msra.mxu0 0.0
          %2076 = vmatprep.subr.mxu0 0.0
          %2077 = vmatpush1.msra.mxu0 0.0
          %2078 = vmatprep.subr.mxu0 0.0
          %2079 = vmatpush1.msra.mxu0 0.0
          %2080 = vmatprep.subr.mxu0 0.0
          %2081 = vmatpush1.msra.mxu0 0.0
          %2082 = vmatprep.subr.mxu0 0.0
          %2083 = vmatpush1.msra.mxu0 0.0
          %2084 = vmatprep.subr.mxu0 0.0
          %2085 = vmatpush1.msra.mxu0 0.0
          %2086 = vmatprep.subr.mxu0 0.0
          %2087 = vmatpush1.msra.mxu0 0.0
          %2088 = vmatprep.subr.mxu0 0.0
          %2089 = vmatpush1.msra.mxu0 0.0
          %2090 = vmatprep.subr.mxu0 %v2049
          %2091 = vmatpush1.msra.mxu0 %v2048
          %2092 = vmatprep.subr.mxu0 %v2046
          %2093 = vmatpush1.msra.mxu0 %v2045
          %2094 = vmatprep.subr.mxu0 %v2043
          %2095 = vmatpush1.msra.mxu0 %v2042
          %2096 = vmatprep.subr.mxu0 %v2040
          %2097 = vmatpush1.msra.mxu0 %v2039
          %2098 = vmatprep.subr.mxu0 %v2037
          %2099 = vmatpush1.msra.mxu0 %v2036
          %2100 = vmatprep.subr.mxu0 %v2034
          %2101 = vmatpush1.msra.mxu0 %v2033
          %2102 = vmatprep.subr.mxu0 %v2031
          %2103 = vmatpush1.msra.mxu0 %v2030
          %2104 = vmatprep.subr.mxu0 %v2028
          %2105 = vmatpush1.msra.mxu0 %v2027
          %2106 = vmatprep.subr.mxu0 0.0
          %2107 = vmatpush2.msra.mxu0 0.0
          %2108 = vmatprep.subr.mxu0 0.0
          %2109 = vmatpush2.msra.mxu0 0.0
          %2110 = vmatprep.subr.mxu0 0.0
          %2111 = vmatpush2.msra.mxu0 0.0
          %2112 = vmatprep.subr.mxu0 0.0
          %2113 = vmatpush2.msra.mxu0 0.0
          %2114 = vmatprep.subr.mxu0 0.0
          %2115 = vmatpush2.msra.mxu0 0.0
          %2116 = vmatprep.subr.mxu0 0.0
          %2117 = vmatpush2.msra.mxu0 0.0
          %2118 = vmatprep.subr.mxu0 0.0
          %2119 = vmatpush2.msra.mxu0 0.0
          %2120 = vmatprep.subr.mxu0 0.0
          %2121 = vmatpush2.msra.mxu0 0.0
          %2122 = vmatprep.subr.mxu0 0.0
          %2123 = vmatpush2.msra.mxu0 0.0
          %2124 = vmatprep.subr.mxu0 0.0
          %2125 = vmatpush2.msra.mxu0 0.0
          %2126 = vmatprep.subr.mxu0 0.0
          %2127 = vmatpush2.msra.mxu0 0.0
          %2128 = vmatprep.subr.mxu0 0.0
          %2129 = vmatpush2.msra.mxu0 0.0
          %2130 = vmatprep.subr.mxu0 0.0
          %2131 = vmatpush2.msra.mxu0 0.0
          %2132 = vmatprep.subr.mxu0 0.0
          %2133 = vmatpush2.msra.mxu0 0.0
          %2134 = vmatprep.subr.mxu0 0.0
          %2135 = vmatpush2.msra.mxu0 0.0
          %2136 = vmatprep.subr.mxu0 0.0
          %2137 = vmatpush2.msra.mxu0 0.0
          %2138 = vmatprep.mubr.f32.mxu0 0.0
          %2139 = vmatmul.mubr.f32.gmra.mxu0 %v2069
          %v2140 = vpop.f32.mrf.mxu0
          %v2141 = vadd.f32 %v2056, %v2140
          %v2142 = vpop.f32.mrf.mxu0
          %v2143 = vadd.f32 %v2060, %v2142
          %2144 = vmatprep.mubr.f32.mxu0 0.0
          %2145 = vmatmul.mubr.f32.gmra.mxu0 %v2072
          %v2146 = vpop.f32.mrf.mxu0
          %v2147 = vadd.f32 %v2056, %v2146
          %v2148 = vpop.f32.mrf.mxu0
          %v2149 = vadd.f32 %v2060, %v2148
          %2150 = vdwg.mxu0
          %2151 = vmatprep.subr.mxu0 0.0
          %2152 = vmatpush1.msra.mxu0 0.0
          %2153 = vmatprep.subr.mxu0 0.0
          %2154 = vmatpush1.msra.mxu0 0.0
          %2155 = vmatprep.subr.mxu0 0.0
          %2156 = vmatpush1.msra.mxu0 0.0
          %2157 = vmatprep.subr.mxu0 0.0
          %2158 = vmatpush1.msra.mxu0 0.0
          %2159 = vmatprep.subr.mxu0 0.0
          %2160 = vmatpush1.msra.mxu0 0.0
          %2161 = vmatprep.subr.mxu0 0.0
          %2162 = vmatpush1.msra.mxu0 0.0
          %2163 = vmatprep.subr.mxu0 0.0
          %2164 = vmatpush1.msra.mxu0 0.0
          %2165 = vmatprep.subr.mxu0 0.0
          %2166 = vmatpush1.msra.mxu0 0.0
          %2167 = vmatprep.subr.mxu0 0.0
          %2168 = vmatpush1.msra.mxu0 %v2050
          %2169 = vmatprep.subr.mxu0 0.0
          %2170 = vmatpush1.msra.mxu0 %v2047
          %2171 = vmatprep.subr.mxu0 0.0
          %2172 = vmatpush1.msra.mxu0 %v2044
          %2173 = vmatprep.subr.mxu0 0.0
          %2174 = vmatpush1.msra.mxu0 %v2041
          %2175 = vmatprep.subr.mxu0 0.0
          %2176 = vmatpush1.msra.mxu0 %v2038
          %2177 = vmatprep.subr.mxu0 0.0
          %2178 = vmatpush1.msra.mxu0 %v2035
          %2179 = vmatprep.subr.mxu0 0.0
          %2180 = vmatpush1.msra.mxu0 %v2032
          %2181 = vmatprep.subr.mxu0 0.0
          %2182 = vmatpush1.msra.mxu0 %v2029
          %2183 = vmatprep.subr.mxu0 0.0
          %2184 = vmatpush2.msra.mxu0 0.0
          %2185 = vmatprep.subr.mxu0 0.0
          %2186 = vmatpush2.msra.mxu0 0.0
          %2187 = vmatprep.subr.mxu0 0.0
          %2188 = vmatpush2.msra.mxu0 0.0
          %2189 = vmatprep.subr.mxu0 0.0
          %2190 = vmatpush2.msra.mxu0 0.0
          %2191 = vmatprep.subr.mxu0 0.0
          %2192 = vmatpush2.msra.mxu0 0.0
          %2193 = vmatprep.subr.mxu0 0.0
          %2194 = vmatpush2.msra.mxu0 0.0
          %2195 = vmatprep.subr.mxu0 0.0
          %2196 = vmatpush2.msra.mxu0 0.0
          %2197 = vmatprep.subr.mxu0 0.0
          %2198 = vmatpush2.msra.mxu0 0.0
          %2199 = vmatprep.subr.mxu0 0.0
          %2200 = vmatpush2.msra.mxu0 0.0
          %2201 = vmatprep.subr.mxu0 0.0
          %2202 = vmatpush2.msra.mxu0 0.0
          %2203 = vmatprep.subr.mxu0 0.0
          %2204 = vmatpush2.msra.mxu0 0.0
          %2205 = vmatprep.subr.mxu0 0.0
          %2206 = vmatpush2.msra.mxu0 0.0
          %2207 = vmatprep.subr.mxu0 0.0
          %2208 = vmatpush2.msra.mxu0 0.0
          %2209 = vmatprep.subr.mxu0 0.0
          %2210 = vmatpush2.msra.mxu0 0.0
          %2211 = vmatprep.subr.mxu0 0.0
          %2212 = vmatpush2.msra.mxu0 0.0
          %2213 = vmatprep.subr.mxu0 0.0
          %2214 = vmatpush2.msra.mxu0 0.0
          %2215 = vmatprep.mubr.f32.mxu0 0.0
          %2216 = vmatmul.mubr.f32.gmra.mxu0 %v2069
          %v2217 = vpop.f32.mrf.mxu0
          %v2218 = vadd.f32 %v2064, %v2217
          %v2219 = vpop.f32.mrf.mxu0
          %2220 = vmatprep.mubr.f32.mxu0 0.0
          %2221 = vmatmul.mubr.f32.gmra.mxu0 %v2072
          %v2222 = vpop.f32.mrf.mxu0
          %v2223 = vadd.f32 %v2064, %v2222
          %v2224 = vpop.f32.mrf.mxu0
          %2225 = vdwg.mxu0
          %v2226 = vmax.f32 %v2141, 0.0
          %v2227 = vmax.f32 %v2143, 0.0
          %v2228 = vmax.f32 %v2218, 0.0
          %v2229 = vmax.f32 %v2147, 0.0
          %v2230 = vmax.f32 %v2149, 0.0
          %v2231 = vmax.f32 %v2223, 0.0
          %v2232 = vpack.c.bf16 %v2229, %v2226
          %v2233 = vpack.c.bf16 %v2230, %v2227
          %v2234 = vpack.c.bf16 %v2231, %v2228
          %v2238 = vunpack.c.l.b16 %v2232
          %v2239 = vunpack.c.l.b16 %v2233
          %v2240 = vunpack.c.l.b16 %v2234
          %v2241 = vunpack.c.h.b16 %v2232
          %v2242 = vunpack.c.h.b16 %v2233
          %v2243 = vunpack.c.h.b16 %v2234
          %v2244 = vpack.c.b16 %v2239, %v2238
          %v2245 = vpack.c.b16 %v2240, %v2240
          %v2246 = vpack.c.b16 %v2242, %v2241
          %v2247 = vpack.c.b16 %v2243, %v2243
          %2252 = vst [vmem:[#allocation2] sm:$0xff] %v2244
          %vm2253 = vcmask 388096
          %2254 = vst.msk [vmem:[#allocation2 + $0x8] sm:$0xf] %vm2253, %v2245
          %2255 = vst [vmem:[#allocation2 + $0xc] sm:$0xff] %v2246
          %2256 = vst.msk [vmem:[#allocation2 + $0x14] sm:$0xf] %vm2253, %v2247
          %v2257 = vld [vmem:[%s1] sm:$0x3]
          %vm2258 = vcmask 130048
          %v2260 = vsel %vm2258, %v2257, 0
          %2262 = vmatprep.subr.mxu0 0.0
          %2263 = vmatpush1.msra.mxu0 0.0
          %2264 = vmatprep.subr.mxu0 0.0
          %2265 = vmatpush1.msra.mxu0 0.0
          %2266 = vmatprep.subr.mxu0 0.0
          %2267 = vmatpush1.msra.mxu0 0.0
          %2268 = vmatprep.subr.mxu0 0.0
          %2269 = vmatpush1.msra.mxu0 0.0
          %2270 = vmatprep.subr.mxu0 0.0
          %2271 = vmatpush1.msra.mxu0 0.0
          %2272 = vmatprep.subr.mxu0 0.0
          %2273 = vmatpush1.msra.mxu0 0.0
          %2274 = vmatprep.subr.mxu0 0.0
          %2275 = vmatpush1.msra.mxu0 0.0
          %2276 = vmatprep.subr.mxu0 0.0
          %2277 = vmatpush1.msra.mxu0 0.0
          %2278 = vmatprep.subr.mxu0 0.0
          %2279 = vmatpush1.msra.mxu0 0.0
          %2280 = vmatprep.subr.mxu0 0.0
          %2281 = vmatpush1.msra.mxu0 0.0
          %2282 = vmatprep.subr.mxu0 0.0
          %2283 = vmatpush1.msra.mxu0 0.0
          %2284 = vmatprep.subr.mxu0 0.0
          %2285 = vmatpush1.msra.mxu0 0.0
          %2286 = vmatprep.subr.mxu0 0.0
          %2287 = vmatpush1.msra.mxu0 0.0
          %2288 = vmatprep.subr.mxu0 0.0
          %2289 = vmatpush1.msra.mxu0 0.0
          %2290 = vmatprep.subr.mxu0 0.0
          %2291 = vmatpush1.msra.mxu0 %v2026
          %2292 = vmatprep.subr.mxu0 0.0
          %2293 = vmatpush1.msra.mxu0 %v2023
          %2294 = vmatprep.subr.mxu0 0.0
          %2295 = vmatpush2.msra.mxu0 0.0
          %2296 = vmatprep.subr.mxu0 0.0
          %2297 = vmatpush2.msra.mxu0 0.0
          %2298 = vmatprep.subr.mxu0 0.0
          %2299 = vmatpush2.msra.mxu0 0.0
          %2300 = vmatprep.subr.mxu0 0.0
          %2301 = vmatpush2.msra.mxu0 0.0
          %2302 = vmatprep.subr.mxu0 0.0
          %2303 = vmatpush2.msra.mxu0 0.0
          %2304 = vmatprep.subr.mxu0 0.0
          %2305 = vmatpush2.msra.mxu0 0.0
          %2306 = vmatprep.subr.mxu0 0.0
          %2307 = vmatpush2.msra.mxu0 0.0
          %2308 = vmatprep.subr.mxu0 0.0
          %2309 = vmatpush2.msra.mxu0 0.0
          %2310 = vmatprep.subr.mxu0 0.0
          %2311 = vmatpush2.msra.mxu0 0.0
          %2312 = vmatprep.subr.mxu0 0.0
          %2313 = vmatpush2.msra.mxu0 0.0
          %2314 = vmatprep.subr.mxu0 0.0
          %2315 = vmatpush2.msra.mxu0 0.0
          %2316 = vmatprep.subr.mxu0 0.0
          %2317 = vmatpush2.msra.mxu0 0.0
          %2318 = vmatprep.subr.mxu0 0.0
          %2319 = vmatpush2.msra.mxu0 0.0
          %2320 = vmatprep.subr.mxu0 0.0
          %2321 = vmatpush2.msra.mxu0 0.0
          %2322 = vmatprep.subr.mxu0 0.0
          %2323 = vmatpush2.msra.mxu0 0.0
          %2324 = vmatprep.subr.mxu0 0.0
          %2325 = vmatpush2.msra.mxu0 0.0
          %2326 = vmatprep.mubr.f32.mxu0 0.0
          %2327 = vmatmul.mubr.f32.gmra.mxu0 %v2260
          %v2328 = vpop.f32.mrf.mxu0
          %v2329 = vadd.f32 0.0, %v2328
          %v2330 = vpop.f32.mrf.mxu0
          %2331 = vdwg.mxu0
          %v2332 = vld [vmem:[#allocation15] sm:$0xff]
          %v2333 = vld [vmem:[#allocation15 + $0x8] sm:$0xff]
          %v2334 = vld [vmem:[#allocation15 + $0x10] sm:$0xff]
          %v2335 = vld [vmem:[#allocation15 + $0x18] sm:$0xff]
          %v2336 = vld [vmem:[#allocation15 + $0x20] sm:$0xff]
          %v2337 = vld [vmem:[#allocation15 + $0x28] sm:$0xff]
          %v2338 = vld [vmem:[#allocation15 + $0x30] sm:$0xff]
          %v2339 = vld [vmem:[#allocation15 + $0x38] sm:$0xff]
          %v2340 = vld [vmem:[#allocation15 + $0x40] sm:$0xff]
          %v2341 = vld [vmem:[#allocation15 + $0x48] sm:$0xff]
          %v2342 = vld [vmem:[#allocation15 + $0x50] sm:$0xff]
          %v2343 = vld [vmem:[#allocation15 + $0x58] sm:$0xff]
          %v2344 = vld [vmem:[#allocation15 + $0x60] sm:$0xff]
          %v2345 = vld [vmem:[#allocation15 + $0x68] sm:$0xff]
          %v2346 = vld [vmem:[#allocation15 + $0x70] sm:$0xff]
          %v2347 = vld [vmem:[#allocation15 + $0x78] sm:$0xff]
          %v2348 = vld [vmem:[#allocation15 + $0x80] sm:$0xff]
          %v2349 = vld [vmem:[#allocation15 + $0x88] sm:$0xff]
          %v2350 = vld [vmem:[#allocation15 + $0x90] sm:$0xff]
          %v2351 = vld [vmem:[#allocation15 + $0x98] sm:$0xff]
          %v2352 = vld [vmem:[#allocation15 + $0xa0] sm:$0xff]
          %v2353 = vld [vmem:[#allocation15 + $0xa8] sm:$0xff]
          %v2354 = vld [vmem:[#allocation15 + $0xb0] sm:$0xff]
          %v2355 = vld [vmem:[#allocation15 + $0xb8] sm:$0xff]
          %v2356 = vld [vmem:[#allocation17] sm:$0x7]
          %v2358 = vlaneseq
          %v2359 = vshrl.u32 %v2358, 7
          %v2360 = vsub.s32 0, %v2359
          %v2361 = vrot.slane %v2356, %v2360
          %v2362 = vlaneseq
          %v2363 = vshrl.u32 %v2362, 7
          %v2364 = vsub.s32 1, %v2363
          %v2365 = vrot.slane %v2356, %v2364
          %v2366 = vlaneseq
          %v2367 = vshrl.u32 %v2366, 7
          %v2368 = vsub.s32 2, %v2367
          %v2369 = vrot.slane %v2356, %v2368
          %v2374 = vsel %vm832, %v2329, 0
          %2376 = vmatprep.subr.mxu0 0.0
          %2377 = vmatpush1.msra.mxu0 0.0
          %2378 = vmatprep.subr.mxu0 0.0
          %2379 = vmatpush1.msra.mxu0 0.0
          %2380 = vmatprep.subr.mxu0 0.0
          %2381 = vmatpush1.msra.mxu0 0.0
          %2382 = vmatprep.subr.mxu0 0.0
          %2383 = vmatpush1.msra.mxu0 0.0
          %2384 = vmatprep.subr.mxu0 0.0
          %2385 = vmatpush1.msra.mxu0 0.0
          %2386 = vmatprep.subr.mxu0 0.0
          %2387 = vmatpush1.msra.mxu0 0.0
          %2388 = vmatprep.subr.mxu0 0.0
          %2389 = vmatpush1.msra.mxu0 0.0
          %2390 = vmatprep.subr.mxu0 0.0
          %2391 = vmatpush1.msra.mxu0 0.0
          %2392 = vmatprep.subr.mxu0 %v2354
          %2393 = vmatpush1.msra.mxu0 %v2353
          %2394 = vmatprep.subr.mxu0 %v2351
          %2395 = vmatpush1.msra.mxu0 %v2350
          %2396 = vmatprep.subr.mxu0 %v2348
          %2397 = vmatpush1.msra.mxu0 %v2347
          %2398 = vmatprep.subr.mxu0 %v2345
          %2399 = vmatpush1.msra.mxu0 %v2344
          %2400 = vmatprep.subr.mxu0 %v2342
          %2401 = vmatpush1.msra.mxu0 %v2341
          %2402 = vmatprep.subr.mxu0 %v2339
          %2403 = vmatpush1.msra.mxu0 %v2338
          %2404 = vmatprep.subr.mxu0 %v2336
          %2405 = vmatpush1.msra.mxu0 %v2335
          %2406 = vmatprep.subr.mxu0 %v2333
          %2407 = vmatpush1.msra.mxu0 %v2332
          %2408 = vmatprep.subr.mxu0 0.0
          %2409 = vmatpush2.msra.mxu0 0.0
          %2410 = vmatprep.subr.mxu0 0.0
          %2411 = vmatpush2.msra.mxu0 0.0
          %2412 = vmatprep.subr.mxu0 0.0
          %2413 = vmatpush2.msra.mxu0 0.0
          %2414 = vmatprep.subr.mxu0 0.0
          %2415 = vmatpush2.msra.mxu0 0.0
          %2416 = vmatprep.subr.mxu0 0.0
          %2417 = vmatpush2.msra.mxu0 0.0
          %2418 = vmatprep.subr.mxu0 0.0
          %2419 = vmatpush2.msra.mxu0 0.0
          %2420 = vmatprep.subr.mxu0 0.0
          %2421 = vmatpush2.msra.mxu0 0.0
          %2422 = vmatprep.subr.mxu0 0.0
          %2423 = vmatpush2.msra.mxu0 0.0
          %2424 = vmatprep.subr.mxu0 0.0
          %2425 = vmatpush2.msra.mxu0 0.0
          %2426 = vmatprep.subr.mxu0 0.0
          %2427 = vmatpush2.msra.mxu0 0.0
          %2428 = vmatprep.subr.mxu0 0.0
          %2429 = vmatpush2.msra.mxu0 0.0
          %2430 = vmatprep.subr.mxu0 0.0
          %2431 = vmatpush2.msra.mxu0 0.0
          %2432 = vmatprep.subr.mxu0 0.0
          %2433 = vmatpush2.msra.mxu0 0.0
          %2434 = vmatprep.subr.mxu0 0.0
          %2435 = vmatpush2.msra.mxu0 0.0
          %2436 = vmatprep.subr.mxu0 0.0
          %2437 = vmatpush2.msra.mxu0 0.0
          %2438 = vmatprep.subr.mxu0 0.0
          %2439 = vmatpush2.msra.mxu0 0.0
          %2440 = vmatprep.mubr.f32.mxu0 0.0
          %2441 = vmatmul.mubr.f32.gmra.mxu0 %v2374
          %v2442 = vpop.f32.mrf.mxu0
          %v2443 = vadd.f32 %v2361, %v2442
          %v2444 = vpop.f32.mrf.mxu0
          %v2445 = vadd.f32 %v2365, %v2444
          %2446 = vdwg.mxu0
          %2447 = vmatprep.subr.mxu0 0.0
          %2448 = vmatpush1.msra.mxu0 0.0
          %2449 = vmatprep.subr.mxu0 0.0
          %2450 = vmatpush1.msra.mxu0 0.0
          %2451 = vmatprep.subr.mxu0 0.0
          %2452 = vmatpush1.msra.mxu0 0.0
          %2453 = vmatprep.subr.mxu0 0.0
          %2454 = vmatpush1.msra.mxu0 0.0
          %2455 = vmatprep.subr.mxu0 0.0
          %2456 = vmatpush1.msra.mxu0 0.0
          %2457 = vmatprep.subr.mxu0 0.0
          %2458 = vmatpush1.msra.mxu0 0.0
          %2459 = vmatprep.subr.mxu0 0.0
          %2460 = vmatpush1.msra.mxu0 0.0
          %2461 = vmatprep.subr.mxu0 0.0
          %2462 = vmatpush1.msra.mxu0 0.0
          %2463 = vmatprep.subr.mxu0 0.0
          %2464 = vmatpush1.msra.mxu0 %v2355
          %2465 = vmatprep.subr.mxu0 0.0
          %2466 = vmatpush1.msra.mxu0 %v2352
          %2467 = vmatprep.subr.mxu0 0.0
          %2468 = vmatpush1.msra.mxu0 %v2349
          %2469 = vmatprep.subr.mxu0 0.0
          %2470 = vmatpush1.msra.mxu0 %v2346
          %2471 = vmatprep.subr.mxu0 0.0
          %2472 = vmatpush1.msra.mxu0 %v2343
          %2473 = vmatprep.subr.mxu0 0.0
          %2474 = vmatpush1.msra.mxu0 %v2340
          %2475 = vmatprep.subr.mxu0 0.0
          %2476 = vmatpush1.msra.mxu0 %v2337
          %2477 = vmatprep.subr.mxu0 0.0
          %2478 = vmatpush1.msra.mxu0 %v2334
          %2479 = vmatprep.subr.mxu0 0.0
          %2480 = vmatpush2.msra.mxu0 0.0
          %2481 = vmatprep.subr.mxu0 0.0
          %2482 = vmatpush2.msra.mxu0 0.0
          %2483 = vmatprep.subr.mxu0 0.0
          %2484 = vmatpush2.msra.mxu0 0.0
          %2485 = vmatprep.subr.mxu0 0.0
          %2486 = vmatpush2.msra.mxu0 0.0
          %2487 = vmatprep.subr.mxu0 0.0
          %2488 = vmatpush2.msra.mxu0 0.0
          %2489 = vmatprep.subr.mxu0 0.0
          %2490 = vmatpush2.msra.mxu0 0.0
          %2491 = vmatprep.subr.mxu0 0.0
          %2492 = vmatpush2.msra.mxu0 0.0
          %2493 = vmatprep.subr.mxu0 0.0
          %2494 = vmatpush2.msra.mxu0 0.0
          %2495 = vmatprep.subr.mxu0 0.0
          %2496 = vmatpush2.msra.mxu0 0.0
          %2497 = vmatprep.subr.mxu0 0.0
          %2498 = vmatpush2.msra.mxu0 0.0
          %2499 = vmatprep.subr.mxu0 0.0
          %2500 = vmatpush2.msra.mxu0 0.0
          %2501 = vmatprep.subr.mxu0 0.0
          %2502 = vmatpush2.msra.mxu0 0.0
          %2503 = vmatprep.subr.mxu0 0.0
          %2504 = vmatpush2.msra.mxu0 0.0
          %2505 = vmatprep.subr.mxu0 0.0
          %2506 = vmatpush2.msra.mxu0 0.0
          %2507 = vmatprep.subr.mxu0 0.0
          %2508 = vmatpush2.msra.mxu0 0.0
          %2509 = vmatprep.subr.mxu0 0.0
          %2510 = vmatpush2.msra.mxu0 0.0
          %2511 = vmatprep.mubr.f32.mxu0 0.0
          %2512 = vmatmul.mubr.f32.gmra.mxu0 %v2374
          %v2513 = vpop.f32.mrf.mxu0
          %v2514 = vadd.f32 %v2369, %v2513
          %v2515 = vpop.f32.mrf.mxu0
          %2516 = vdwg.mxu0
          %v2517 = vmax.f32 %v2443, 0.0
          %v2518 = vmax.f32 %v2445, 0.0
          %v2519 = vmax.f32 %v2514, 0.0
          %v2523 = vrot.slane %v2517, 6
          %v2524 = vrot.slane %v2518, 6
          %v2525 = vrot.slane %v2519, 6
          %v2529 = vrot.slane %v2517, 4
          %v2530 = vrot.slane %v2518, 4
          %v2531 = vrot.slane %v2519, 4
          %v2535 = vrot.slane %v2517, 2
          %v2536 = vrot.slane %v2518, 2
          %v2537 = vrot.slane %v2519, 2
          %v2541 = vsel %vm2018, %v2517, %v2523
          %v2542 = vsel %vm2018, %v2518, %v2524
          %v2543 = vsel %vm2018, %v2519, %v2525
          %v2544 = vsel %vm2020, %v2541, %v2529
          %v2545 = vsel %vm2020, %v2542, %v2530
          %v2546 = vsel %vm2020, %v2543, %v2531
          %v2547 = vsel %vm2022, %v2544, %v2535
          %v2548 = vsel %vm2022, %v2545, %v2536
          %v2549 = vsel %vm2022, %v2546, %v2537
          %2550 = vst [vmem:[#allocation3] sm:$0xff] %v2547
          %2551 = vst [vmem:[#allocation3 + $0x8] sm:$0xff] %v2548
          %2552 = vst [vmem:[#allocation3 + $0x10] sm:$0xff] %v2549
          %2553 = vst [vmem:[#allocation3 + $0x18] sm:$0xff] %v2547
          %2554 = vst [vmem:[#allocation3 + $0x20] sm:$0xff] %v2548
          %2555 = vst [vmem:[#allocation3 + $0x28] sm:$0xff] %v2549
          %2556 = vst [vmem:[%s12] sm:$0xff] 0.0
          %2557 = vst [vmem:[%s12 + $0x8] sm:$0xff] 0.0
        $region112: #{sr_labeler_forward.1} parent=67 // pred_fallthru
          _
        %v2558 = vld [vmem:[#allocation2] sm:$0xff]
        %v2559 = vld [vmem:[#allocation2 + $0x8] sm:$0xf]
        %v2560 = vld [vmem:[#allocation2 + $0xc] sm:$0xff]
        %v2561 = vld [vmem:[#allocation2 + $0x14] sm:$0xf]
        %v2562 = vld [vmem:[%s504] sm:$0xff]
        %v2563 = vld [vmem:[%s504 + $0x8] sm:$0xf]
        %v2564 = vld [vmem:[%s504 + $0xc] sm:$0xff]
        %v2565 = vld [vmem:[%s504 + $0x14] sm:$0xf]
        %v2566 = vld [vmem:[%s504 + $0x18] sm:$0xff]
        %v2567 = vld [vmem:[%s504 + $0x20] sm:$0xf]
        %v2568 = vld [vmem:[%s504 + $0x24] sm:$0xff]
        %v2569 = vld [vmem:[%s504 + $0x2c] sm:$0xf]
        %v2570 = vld [vmem:[%s504 + $0x30] sm:$0xff]
        %v2571 = vld [vmem:[%s504 + $0x38] sm:$0xf]
        %v2572 = vld [vmem:[%s504 + $0x3c] sm:$0xff]
        %v2573 = vld [vmem:[%s504 + $0x44] sm:$0xf]
        %v2574 = vld [vmem:[%s504 + $0x48] sm:$0xff]
        %v2575 = vld [vmem:[%s504 + $0x50] sm:$0xf]
        %v2576 = vld [vmem:[%s504 + $0x54] sm:$0xff]
        %v2577 = vld [vmem:[%s504 + $0x5c] sm:$0xf]
        %v2578 = vld [vmem:[%s504 + $0x60] sm:$0xff]
        %v2579 = vld [vmem:[%s504 + $0x68] sm:$0xf]
        %v2580 = vld [vmem:[%s504 + $0x6c] sm:$0xff]
        %v2581 = vld [vmem:[%s504 + $0x74] sm:$0xf]
        %v2582 = vld [vmem:[%s504 + $0x78] sm:$0xff]
        %v2583 = vld [vmem:[%s504 + $0x80] sm:$0xf]
        %v2584 = vld [vmem:[%s504 + $0x84] sm:$0xff]
        %v2585 = vld [vmem:[%s504 + $0x8c] sm:$0xf]
        %v2586 = vld [vmem:[%s504 + $0x90] sm:$0xff]
        %v2587 = vld [vmem:[%s504 + $0x98] sm:$0xf]
        %v2588 = vld [vmem:[%s504 + $0x9c] sm:$0xff]
        %v2589 = vld [vmem:[%s504 + $0xa4] sm:$0xf]
        %v2590 = vld [vmem:[%s504 + $0xa8] sm:$0xff]
        %v2591 = vld [vmem:[%s504 + $0xb0] sm:$0xf]
        %v2592 = vld [vmem:[%s504 + $0xb4] sm:$0xff]
        %v2593 = vld [vmem:[%s504 + $0xbc] sm:$0xf]
        %v2594 = vld [vmem:[%s504 + $0xc0] sm:$0xff]
        %v2595 = vld [vmem:[%s504 + $0xc8] sm:$0xf]
        %v2596 = vld [vmem:[%s504 + $0xcc] sm:$0xff]
        %v2597 = vld [vmem:[%s504 + $0xd4] sm:$0xf]
        %v2598 = vld [vmem:[%s504 + $0xd8] sm:$0xff]
        %v2599 = vld [vmem:[%s504 + $0xe0] sm:$0xf]
        %v2600 = vld [vmem:[%s504 + $0xe4] sm:$0xff]
        %v2601 = vld [vmem:[%s504 + $0xec] sm:$0xf]
        %v2602 = vld [vmem:[%s504 + $0xf0] sm:$0xff]
        %v2603 = vld [vmem:[%s504 + $0xf8] sm:$0xf]
        %v2604 = vld [vmem:[%s504 + $0xfc] sm:$0xff]
        %v2605 = vld [vmem:[%s504 + $0x104] sm:$0xf]
        %v2606 = vld [vmem:[%s504 + $0x108] sm:$0xff]
        %v2607 = vld [vmem:[%s504 + $0x110] sm:$0xf]
        %v2608 = vld [vmem:[%s504 + $0x114] sm:$0xff]
        %v2609 = vld [vmem:[%s504 + $0x11c] sm:$0xf]
        %v2610 = vld [vmem:[%s504 + $0x120] sm:$0xff]
        %v2611 = vld [vmem:[%s504 + $0x128] sm:$0xf]
        %v2612 = vld [vmem:[%s504 + $0x12c] sm:$0xff]
        %v2613 = vld [vmem:[%s504 + $0x134] sm:$0xf]
        %v2614 = vld [vmem:[%s504 + $0x138] sm:$0xff]
        %v2615 = vld [vmem:[%s504 + $0x140] sm:$0xf]
        %v2616 = vld [vmem:[%s504 + $0x144] sm:$0xff]
        %v2617 = vld [vmem:[%s504 + $0x14c] sm:$0xf]
        %v2618 = vld [vmem:[%s504 + $0x150] sm:$0xff]
        %v2619 = vld [vmem:[%s504 + $0x158] sm:$0xf]
        %v2620 = vld [vmem:[%s504 + $0x15c] sm:$0xff]
        %v2621 = vld [vmem:[%s504 + $0x164] sm:$0xf]
        %v2622 = vld [vmem:[%s504 + $0x168] sm:$0xff]
        %v2623 = vld [vmem:[%s504 + $0x170] sm:$0xf]
        %v2624 = vld [vmem:[%s504 + $0x174] sm:$0xff]
        %v2625 = vld [vmem:[%s504 + $0x17c] sm:$0xf]
        %v2626 = vld [vmem:[%s504 + $0x180] sm:$0xff]
        %v2627 = vld [vmem:[%s504 + $0x188] sm:$0xf]
        %v2628 = vld [vmem:[%s504 + $0x18c] sm:$0xff]
        %v2629 = vld [vmem:[%s504 + $0x194] sm:$0xf]
        %v2630 = vld [vmem:[%s504 + $0x198] sm:$0xff]
        %v2631 = vld [vmem:[%s504 + $0x1a0] sm:$0xf]
        %v2632 = vld [vmem:[%s504 + $0x1a4] sm:$0xff]
        %v2633 = vld [vmem:[%s504 + $0x1ac] sm:$0xf]
        %v2634 = vld [vmem:[%s504 + $0x1b0] sm:$0xff]
        %v2635 = vld [vmem:[%s504 + $0x1b8] sm:$0xf]
        %v2636 = vld [vmem:[%s504 + $0x1bc] sm:$0xff]
        %v2637 = vld [vmem:[%s504 + $0x1c4] sm:$0xf]
        %v2642 = vunpack.c.l.b16 %v2558
        %v2643 = vunpack.c.h.b16 %v2558
        %v2644 = vunpack.c.l.b16 %v2559
        %v2645 = vunpack.c.l.b16 %v2560
        %v2646 = vunpack.c.h.b16 %v2560
        %v2647 = vunpack.c.l.b16 %v2561
        %v2648 = vpack.c.b16 %v2645, %v2642
        %v2649 = vpack.c.b16 %v2646, %v2643
        %v2650 = vpack.c.b16 %v2647, %v2644
        %v2729 = vunpack.c.l.b16 %v2562
        %v2730 = vunpack.c.h.b16 %v2562
        %v2731 = vunpack.c.l.b16 %v2563
        %v2732 = vunpack.c.l.b16 %v2564
        %v2733 = vunpack.c.h.b16 %v2564
        %v2734 = vunpack.c.l.b16 %v2565
        %v2735 = vunpack.c.l.b16 %v2566
        %v2736 = vunpack.c.h.b16 %v2566
        %v2737 = vunpack.c.l.b16 %v2567
        %v2738 = vunpack.c.l.b16 %v2568
        %v2739 = vunpack.c.h.b16 %v2568
        %v2740 = vunpack.c.l.b16 %v2569
        %v2741 = vunpack.c.l.b16 %v2570
        %v2742 = vunpack.c.h.b16 %v2570
        %v2743 = vunpack.c.l.b16 %v2571
        %v2744 = vunpack.c.l.b16 %v2572
        %v2745 = vunpack.c.h.b16 %v2572
        %v2746 = vunpack.c.l.b16 %v2573
        %v2747 = vunpack.c.l.b16 %v2574
        %v2748 = vunpack.c.h.b16 %v2574
        %v2749 = vunpack.c.l.b16 %v2575
        %v2750 = vunpack.c.l.b16 %v2576
        %v2751 = vunpack.c.h.b16 %v2576
        %v2752 = vunpack.c.l.b16 %v2577
        %v2753 = vunpack.c.l.b16 %v2578
        %v2754 = vunpack.c.h.b16 %v2578
        %v2755 = vunpack.c.l.b16 %v2579
        %v2756 = vunpack.c.l.b16 %v2580
        %v2757 = vunpack.c.h.b16 %v2580
        %v2758 = vunpack.c.l.b16 %v2581
        %v2759 = vunpack.c.l.b16 %v2582
        %v2760 = vunpack.c.h.b16 %v2582
        %v2761 = vunpack.c.l.b16 %v2583
        %v2762 = vunpack.c.l.b16 %v2584
        %v2763 = vunpack.c.h.b16 %v2584
        %v2764 = vunpack.c.l.b16 %v2585
        %v2765 = vunpack.c.l.b16 %v2586
        %v2766 = vunpack.c.h.b16 %v2586
        %v2767 = vunpack.c.l.b16 %v2587
        %v2768 = vunpack.c.l.b16 %v2588
        %v2769 = vunpack.c.h.b16 %v2588
        %v2770 = vunpack.c.l.b16 %v2589
        %v2771 = vunpack.c.l.b16 %v2590
        %v2772 = vunpack.c.h.b16 %v2590
        %v2773 = vunpack.c.l.b16 %v2591
        %v2774 = vunpack.c.l.b16 %v2592
        %v2775 = vunpack.c.h.b16 %v2592
        %v2776 = vunpack.c.l.b16 %v2593
        %v2777 = vunpack.c.l.b16 %v2594
        %v2778 = vunpack.c.h.b16 %v2594
        %v2779 = vunpack.c.l.b16 %v2595
        %v2780 = vunpack.c.l.b16 %v2596
        %v2781 = vunpack.c.h.b16 %v2596
        %v2782 = vunpack.c.l.b16 %v2597
        %v2783 = vunpack.c.l.b16 %v2598
        %v2784 = vunpack.c.h.b16 %v2598
        %v2785 = vunpack.c.l.b16 %v2599
        %v2786 = vunpack.c.l.b16 %v2600
        %v2787 = vunpack.c.h.b16 %v2600
        %v2788 = vunpack.c.l.b16 %v2601
        %v2789 = vunpack.c.l.b16 %v2602
        %v2790 = vunpack.c.h.b16 %v2602
        %v2791 = vunpack.c.l.b16 %v2603
        %v2792 = vunpack.c.l.b16 %v2604
        %v2793 = vunpack.c.h.b16 %v2604
        %v2794 = vunpack.c.l.b16 %v2605
        %v2795 = vunpack.c.l.b16 %v2606
        %v2796 = vunpack.c.h.b16 %v2606
        %v2797 = vunpack.c.l.b16 %v2607
        %v2798 = vunpack.c.l.b16 %v2608
        %v2799 = vunpack.c.h.b16 %v2608
        %v2800 = vunpack.c.l.b16 %v2609
        %v2801 = vunpack.c.l.b16 %v2610
        %v2802 = vunpack.c.h.b16 %v2610
        %v2803 = vunpack.c.l.b16 %v2611
        %v2804 = vunpack.c.l.b16 %v2612
        %v2805 = vunpack.c.h.b16 %v2612
        %v2806 = vunpack.c.l.b16 %v2613
        %v2807 = vunpack.c.l.b16 %v2614
        %v2808 = vunpack.c.h.b16 %v2614
        %v2809 = vunpack.c.l.b16 %v2615
        %v2810 = vunpack.c.l.b16 %v2616
        %v2811 = vunpack.c.h.b16 %v2616
        %v2812 = vunpack.c.l.b16 %v2617
        %v2813 = vunpack.c.l.b16 %v2618
        %v2814 = vunpack.c.h.b16 %v2618
        %v2815 = vunpack.c.l.b16 %v2619
        %v2816 = vunpack.c.l.b16 %v2620
        %v2817 = vunpack.c.h.b16 %v2620
        %v2818 = vunpack.c.l.b16 %v2621
        %v2819 = vunpack.c.l.b16 %v2622
        %v2820 = vunpack.c.h.b16 %v2622
        %v2821 = vunpack.c.l.b16 %v2623
        %v2822 = vunpack.c.l.b16 %v2624
        %v2823 = vunpack.c.h.b16 %v2624
        %v2824 = vunpack.c.l.b16 %v2625
        %v2825 = vunpack.c.l.b16 %v2626
        %v2826 = vunpack.c.h.b16 %v2626
        %v2827 = vunpack.c.l.b16 %v2627
        %v2828 = vunpack.c.l.b16 %v2628
        %v2829 = vunpack.c.h.b16 %v2628
        %v2830 = vunpack.c.l.b16 %v2629
        %v2831 = vunpack.c.l.b16 %v2630
        %v2832 = vunpack.c.h.b16 %v2630
        %v2833 = vunpack.c.l.b16 %v2631
        %v2834 = vunpack.c.l.b16 %v2632
        %v2835 = vunpack.c.h.b16 %v2632
        %v2836 = vunpack.c.l.b16 %v2633
        %v2837 = vunpack.c.l.b16 %v2634
        %v2838 = vunpack.c.h.b16 %v2634
        %v2839 = vunpack.c.l.b16 %v2635
        %v2840 = vunpack.c.l.b16 %v2636
        %v2841 = vunpack.c.h.b16 %v2636
        %v2842 = vunpack.c.l.b16 %v2637
        %v2843 = vpack.c.b16 %v2732, %v2729
        %v2844 = vpack.c.b16 %v2733, %v2730
        %v2845 = vpack.c.b16 %v2734, %v2731
        %v2846 = vpack.c.b16 %v2738, %v2735
        %v2847 = vpack.c.b16 %v2739, %v2736
        %v2848 = vpack.c.b16 %v2740, %v2737
        %v2849 = vpack.c.b16 %v2744, %v2741
        %v2850 = vpack.c.b16 %v2745, %v2742
        %v2851 = vpack.c.b16 %v2746, %v2743
        %v2852 = vpack.c.b16 %v2750, %v2747
        %v2853 = vpack.c.b16 %v2751, %v2748
        %v2854 = vpack.c.b16 %v2752, %v2749
        %v2855 = vpack.c.b16 %v2756, %v2753
        %v2856 = vpack.c.b16 %v2757, %v2754
        %v2857 = vpack.c.b16 %v2758, %v2755
        %v2858 = vpack.c.b16 %v2762, %v2759
        %v2859 = vpack.c.b16 %v2763, %v2760
        %v2860 = vpack.c.b16 %v2764, %v2761
        %v2861 = vpack.c.b16 %v2768, %v2765
        %v2862 = vpack.c.b16 %v2769, %v2766
        %v2863 = vpack.c.b16 %v2770, %v2767
        %v2864 = vpack.c.b16 %v2774, %v2771
        %v2865 = vpack.c.b16 %v2775, %v2772
        %v2866 = vpack.c.b16 %v2776, %v2773
        %v2867 = vpack.c.b16 %v2780, %v2777
        %v2868 = vpack.c.b16 %v2781, %v2778
        %v2869 = vpack.c.b16 %v2782, %v2779
        %v2870 = vpack.c.b16 %v2786, %v2783
        %v2871 = vpack.c.b16 %v2787, %v2784
        %v2872 = vpack.c.b16 %v2788, %v2785
        %v2873 = vpack.c.b16 %v2792, %v2789
        %v2874 = vpack.c.b16 %v2793, %v2790
        %v2875 = vpack.c.b16 %v2794, %v2791
        %v2876 = vpack.c.b16 %v2798, %v2795
        %v2877 = vpack.c.b16 %v2799, %v2796
        %v2878 = vpack.c.b16 %v2800, %v2797
        %v2879 = vpack.c.b16 %v2804, %v2801
        %v2880 = vpack.c.b16 %v2805, %v2802
        %v2881 = vpack.c.b16 %v2806, %v2803
        %v2882 = vpack.c.b16 %v2810, %v2807
        %v2883 = vpack.c.b16 %v2811, %v2808
        %v2884 = vpack.c.b16 %v2812, %v2809
        %v2885 = vpack.c.b16 %v2816, %v2813
        %v2886 = vpack.c.b16 %v2817, %v2814
        %v2887 = vpack.c.b16 %v2818, %v2815
        %v2888 = vpack.c.b16 %v2822, %v2819
        %v2889 = vpack.c.b16 %v2823, %v2820
        %v2890 = vpack.c.b16 %v2824, %v2821
        %v2891 = vpack.c.b16 %v2828, %v2825
        %v2892 = vpack.c.b16 %v2829, %v2826
        %v2893 = vpack.c.b16 %v2830, %v2827
        %v2894 = vpack.c.b16 %v2834, %v2831
        %v2895 = vpack.c.b16 %v2835, %v2832
        %v2896 = vpack.c.b16 %v2836, %v2833
        %v2897 = vpack.c.b16 %v2840, %v2837
        %v2898 = vpack.c.b16 %v2841, %v2838
        %v2899 = vpack.c.b16 %v2842, %v2839
        %vm2957 = vcmask 392192
        %v2959 = vsel %vm2957, %v2650, 0
        %2961 = vmatprep.subr.bf16.mxu0 %v2865
        %2962 = vmatpush1.bf16.msra.mxu0 %v2864
        %2963 = vmatprep.subr.bf16.mxu0 %v2862
        %2964 = vmatpush1.bf16.msra.mxu0 %v2861
        %2965 = vmatprep.subr.bf16.mxu0 %v2859
        %2966 = vmatpush1.bf16.msra.mxu0 %v2858
        %2967 = vmatprep.subr.bf16.mxu0 %v2856
        %2968 = vmatpush1.bf16.msra.mxu0 %v2855
        %2969 = vmatprep.subr.bf16.mxu0 %v2853
        %2970 = vmatpush1.bf16.msra.mxu0 %v2852
        %2971 = vmatprep.subr.bf16.mxu0 %v2850
        %2972 = vmatpush1.bf16.msra.mxu0 %v2849
        %2973 = vmatprep.subr.bf16.mxu0 %v2847
        %2974 = vmatpush1.bf16.msra.mxu0 %v2846
        %2975 = vmatprep.subr.bf16.mxu0 %v2844
        %2976 = vmatpush1.bf16.msra.mxu0 %v2843
        %2977 = vmatprep.subr.bf16.mxu0 %v2889
        %2978 = vmatpush2.bf16.msra.mxu0 %v2888
        %2979 = vmatprep.subr.bf16.mxu0 %v2886
        %2980 = vmatpush2.bf16.msra.mxu0 %v2885
        %2981 = vmatprep.subr.bf16.mxu0 %v2883
        %2982 = vmatpush2.bf16.msra.mxu0 %v2882
        %2983 = vmatprep.subr.bf16.mxu0 %v2880
        %2984 = vmatpush2.bf16.msra.mxu0 %v2879
        %2985 = vmatprep.subr.bf16.mxu0 %v2877
        %2986 = vmatpush2.bf16.msra.mxu0 %v2876
        %2987 = vmatprep.subr.bf16.mxu0 %v2874
        %2988 = vmatpush2.bf16.msra.mxu0 %v2873
        %2989 = vmatprep.subr.bf16.mxu0 %v2871
        %2990 = vmatpush2.bf16.msra.mxu0 %v2870
        %2991 = vmatprep.subr.bf16.mxu0 %v2868
        %2992 = vmatpush2.bf16.msra.mxu0 %v2867
        %2993 = vmatprep.mubr.bf16.mxu0 %v2649
        %2994 = vmatmul.mubr.bf16.gmra.mxu0 %v2648
        %v2995 = vpop.f32.mrf.mxu0
        %v2996 = vadd.f32 0.0, %v2995
        %v2997 = vpop.f32.mrf.mxu0
        %v2998 = vadd.f32 0.0, %v2997
        %v2999 = vpop.f32.mrf.mxu0
        %v3000 = vadd.f32 0.0, %v2999
        %v3001 = vpop.f32.mrf.mxu0
        %v3002 = vadd.f32 0.0, %v3001
        %3003 = vdwg.mxu0
        %3004 = vmatprep.subr.bf16.mxu0 0
        %3005 = vmatpush1.bf16.msra.mxu0 0
        %3006 = vmatprep.subr.bf16.mxu0 0
        %3007 = vmatpush1.bf16.msra.mxu0 0
        %3008 = vmatprep.subr.bf16.mxu0 0
        %3009 = vmatpush1.bf16.msra.mxu0 0
        %3010 = vmatprep.subr.bf16.mxu0 0
        %3011 = vmatpush1.bf16.msra.mxu0 0
        %3012 = vmatprep.subr.bf16.mxu0 0
        %3013 = vmatpush1.bf16.msra.mxu0 0
        %3014 = vmatprep.subr.bf16.mxu0 %v2898
        %3015 = vmatpush1.bf16.msra.mxu0 %v2897
        %3016 = vmatprep.subr.bf16.mxu0 %v2895
        %3017 = vmatpush1.bf16.msra.mxu0 %v2894
        %3018 = vmatprep.subr.bf16.mxu0 %v2892
        %3019 = vmatpush1.bf16.msra.mxu0 %v2891
        %3020 = vmatprep.subr.bf16.mxu0 0
        %3021 = vmatpush2.bf16.msra.mxu0 0
        %3022 = vmatprep.subr.bf16.mxu0 0
        %3023 = vmatpush2.bf16.msra.mxu0 0
        %3024 = vmatprep.subr.bf16.mxu0 0
        %3025 = vmatpush2.bf16.msra.mxu0 0
        %3026 = vmatprep.subr.bf16.mxu0 0
        %3027 = vmatpush2.bf16.msra.mxu0 0
        %3028 = vmatprep.subr.bf16.mxu0 0
        %3029 = vmatpush2.bf16.msra.mxu0 0
        %3030 = vmatprep.subr.bf16.mxu0 0
        %3031 = vmatpush2.bf16.msra.mxu0 0
        %3032 = vmatprep.subr.bf16.mxu0 0
        %3033 = vmatpush2.bf16.msra.mxu0 0
        %3034 = vmatprep.subr.bf16.mxu0 0
        %3035 = vmatpush2.bf16.msra.mxu0 0
        %3036 = vmatprep.mubr.bf16.mxu0 0
        %3037 = vmatmul.mubr.bf16.gmra.mxu0 %v2959
        %v3038 = vpop.f32.mrf.mxu0
        %v3039 = vadd.f32 %v2996, %v3038
        %v3040 = vpop.f32.mrf.mxu0
        %v3041 = vadd.f32 %v2998, %v3040
        %v3042 = vpop.f32.mrf.mxu0
        %v3043 = vadd.f32 %v3000, %v3042
        %v3044 = vpop.f32.mrf.mxu0
        %v3045 = vadd.f32 %v3002, %v3044
        %3046 = vdwg.mxu0
        %3047 = vmatprep.subr.bf16.mxu0 0
        %3048 = vmatpush1.bf16.msra.mxu0 %v2866
        %3049 = vmatprep.subr.bf16.mxu0 0
        %3050 = vmatpush1.bf16.msra.mxu0 %v2863
        %3051 = vmatprep.subr.bf16.mxu0 0
        %3052 = vmatpush1.bf16.msra.mxu0 %v2860
        %3053 = vmatprep.subr.bf16.mxu0 0
        %3054 = vmatpush1.bf16.msra.mxu0 %v2857
        %3055 = vmatprep.subr.bf16.mxu0 0
        %3056 = vmatpush1.bf16.msra.mxu0 %v2854
        %3057 = vmatprep.subr.bf16.mxu0 0
        %3058 = vmatpush1.bf16.msra.mxu0 %v2851
        %3059 = vmatprep.subr.bf16.mxu0 0
        %3060 = vmatpush1.bf16.msra.mxu0 %v2848
        %3061 = vmatprep.subr.bf16.mxu0 0
        %3062 = vmatpush1.bf16.msra.mxu0 %v2845
        %3063 = vmatprep.subr.bf16.mxu0 0
        %3064 = vmatpush2.bf16.msra.mxu0 %v2890
        %3065 = vmatprep.subr.bf16.mxu0 0
        %3066 = vmatpush2.bf16.msra.mxu0 %v2887
        %3067 = vmatprep.subr.bf16.mxu0 0
        %3068 = vmatpush2.bf16.msra.mxu0 %v2884
        %3069 = vmatprep.subr.bf16.mxu0 0
        %3070 = vmatpush2.bf16.msra.mxu0 %v2881
        %3071 = vmatprep.subr.bf16.mxu0 0
        %3072 = vmatpush2.bf16.msra.mxu0 %v2878
        %3073 = vmatprep.subr.bf16.mxu0 0
        %3074 = vmatpush2.bf16.msra.mxu0 %v2875
        %3075 = vmatprep.subr.bf16.mxu0 0
        %3076 = vmatpush2.bf16.msra.mxu0 %v2872
        %3077 = vmatprep.subr.bf16.mxu0 0
        %3078 = vmatpush2.bf16.msra.mxu0 %v2869
        %3079 = vmatprep.mubr.bf16.mxu0 %v2649
        %3080 = vmatmul.mubr.bf16.gmra.mxu0 %v2648
        %v3081 = vpop.f32.mrf.mxu0
        %v3082 = vadd.f32 0.0, %v3081
        %v3083 = vpop.f32.mrf.mxu0
        %v3084 = vpop.f32.mrf.mxu0
        %v3085 = vadd.f32 0.0, %v3084
        %v3086 = vpop.f32.mrf.mxu0
        %3087 = vdwg.mxu0
        %3088 = vmatprep.subr.bf16.mxu0 0
        %3089 = vmatpush1.bf16.msra.mxu0 0
        %3090 = vmatprep.subr.bf16.mxu0 0
        %3091 = vmatpush1.bf16.msra.mxu0 0
        %3092 = vmatprep.subr.bf16.mxu0 0
        %3093 = vmatpush1.bf16.msra.mxu0 0
        %3094 = vmatprep.subr.bf16.mxu0 0
        %3095 = vmatpush1.bf16.msra.mxu0 0
        %3096 = vmatprep.subr.bf16.mxu0 0
        %3097 = vmatpush1.bf16.msra.mxu0 0
        %3098 = vmatprep.subr.bf16.mxu0 0
        %3099 = vmatpush1.bf16.msra.mxu0 %v2899
        %3100 = vmatprep.subr.bf16.mxu0 0
        %3101 = vmatpush1.bf16.msra.mxu0 %v2896
        %3102 = vmatprep.subr.bf16.mxu0 0
        %3103 = vmatpush1.bf16.msra.mxu0 %v2893
        %3104 = vmatprep.subr.bf16.mxu0 0
        %3105 = vmatpush2.bf16.msra.mxu0 0
        %3106 = vmatprep.subr.bf16.mxu0 0
        %3107 = vmatpush2.bf16.msra.mxu0 0
        %3108 = vmatprep.subr.bf16.mxu0 0
        %3109 = vmatpush2.bf16.msra.mxu0 0
        %3110 = vmatprep.subr.bf16.mxu0 0
        %3111 = vmatpush2.bf16.msra.mxu0 0
        %3112 = vmatprep.subr.bf16.mxu0 0
        %3113 = vmatpush2.bf16.msra.mxu0 0
        %3114 = vmatprep.subr.bf16.mxu0 0
        %3115 = vmatpush2.bf16.msra.mxu0 0
        %3116 = vmatprep.subr.bf16.mxu0 0
        %3117 = vmatpush2.bf16.msra.mxu0 0
        %3118 = vmatprep.subr.bf16.mxu0 0
        %3119 = vmatpush2.bf16.msra.mxu0 0
        %3120 = vmatprep.mubr.bf16.mxu0 0
        %3121 = vmatmul.mubr.bf16.gmra.mxu0 %v2959
        %v3122 = vpop.f32.mrf.mxu0
        %v3123 = vadd.f32 %v3082, %v3122
        %v3124 = vpop.f32.mrf.mxu0
        %v3125 = vpop.f32.mrf.mxu0
        %v3126 = vadd.f32 %v3085, %v3125
        %v3127 = vpop.f32.mrf.mxu0
        %3128 = vdwg.mxu0
        %v3129 = vld [vmem:[#allocation3] sm:$0xff]
        %v3130 = vld [vmem:[#allocation3 + $0x8] sm:$0xff]
        %v3131 = vld [vmem:[#allocation3 + $0x10] sm:$0xff]
        %v3132 = vld [vmem:[#allocation3 + $0x18] sm:$0xff]
        %v3133 = vld [vmem:[#allocation3 + $0x20] sm:$0xff]
        %v3134 = vld [vmem:[#allocation3 + $0x28] sm:$0xff]
        %v3135 = vmul.f32 %v3039, %v3129
        %v3136 = vmul.f32 %v3041, %v3130
        %v3137 = vmul.f32 %v3123, %v3131
        %v3138 = vmul.f32 %v3043, %v3132
        %v3139 = vmul.f32 %v3045, %v3133
        %v3140 = vmul.f32 %v3126, %v3134
        %v3141 = vadd.f32 %v3135, %v3136
        %v3142 = vadd.f32 %v3141, %v3137
        %3143 = vadd.xlane.f32.xlu0 %v3142
        %v3144 = vpop.xlane.xlu0 %3143
        %v3145 = vadd.f32 %v3138, %v3139
        %v3146 = vadd.f32 %v3145, %v3140
        %3147 = vadd.xlane.f32.xlu0 %v3146
        %v3148 = vpop.xlane.xlu0 %3147
        %v3149 = vlaneseq
        %v3150 = vand.u32 %v3149, 127
        %v3151 = vstv %s31
        %vm3152 = vcmp.eq.s32.totalorder %v3150, %v3151
        %v3153 = vsel %vm3152, 1, 0
        %v3154 = vcvt.s32.f32 %v3153
        %v3155 = vld [vmem:[%s12] sm:$0xff]
        %v3156 = vld [vmem:[%s12 + $0x8] sm:$0xff]
        %v3157 = vmul.f32 %v3144, %v3154
        %v3158 = vmul.f32 %v3148, %v3154
        %v3159 = vadd.f32 %v3155, %v3157
        %v3160 = vadd.f32 %v3156, %v3158
        %3161 = vst [vmem:[%s12] sm:$0xff] %v3159
        %3162 = vst [vmem:[%s12 + $0x8] sm:$0xff] %v3160
        // Predicated region
        $region113: #{sr_labeler_forward.1} parent=67 // pred_check
          %p3163 = pneg %p301
        $region114: #{sr_labeler_forward.1} parent=67 // pred_check_branch
          %3165 = sbr.rel (%p3163) target = $region116
        $region115: #{sr_labeler_forward.1} parent=67 // pred_region
          _
        $region116: #{sr_labeler_forward.1} parent=67 // pred_fallthru
          _
        // Predicated region
        $region117: #{sr_labeler_forward.1} parent=67 // pred_check
          %p3166 = pneg %p301
        $region118: #{sr_labeler_forward.1} parent=67 // pred_check_branch
          %3168 = sbr.rel (%p3166) target = $region120
        $region119: #{sr_labeler_forward.1} parent=67 // pred_region
          _
        $region120: #{sr_labeler_forward.1} parent=67 // pred_fallthru
          _
      $region68: #{sr_labeler_forward.1} parent=5 // pred_fallthru
        _
      %p3169 = scmp.le.s32.totalorder 2, %s26
      // Predicated region
      $region121: #{sr_labeler_forward.1} parent=5 // pred_check
        %p3170 = pneg %p3169
      $region122: #{sr_labeler_forward.1} parent=5 // pred_check_branch
        %3172 = sbr.rel (%p3170) target = $region124
      $region123: #{sr_labeler_forward.1} parent=5 // pred_region
        %s3173 = ssub.s32 %s26, 2
      $region124: #{sr_labeler_forward.1} parent=5 // pred_fallthru
        _
    $region6: #{sr_labeler_forward.1} parent=1 // loop_footer
      %s30 = sadd.s32 1, %s26
    $region7: #{sr_labeler_forward.1} parent=1 // loop_footer_branch
      %25 = sbr.rel target = $region3
    $region8: #{sr_labeler_forward.1} parent=1 // loop_exit
      _
    %3174 = vsyncpa [#allocation5], 1
    %s3175 = scalar_lea.sflag [#allocation5], 1
    %3176 = vsyncpa %s3175, 1
    %3177 = vsyncpa [#allocation7], 1
    %3178 = vsyncpa [#allocation10], 1
    %3179 = vsyncpa [#allocation13], 1
    %3180 = vsyncpa [#allocation16], 1
    %3181 = vsyncpa [#allocation19], 1
    %s3182 = scalar_lea.sflag [#allocation19], 1
    %3183 = vsyncpa %s3182, 1

</llo_original>
